<compile_context>
chip_gen: v5e
topology: v5e:2x2
jax: 0.10.0
libtpu: 0.0.40
codegen_flags: <defaults>
</compile_context>

<pallas_src>
import functools

import jax
import jax.numpy as jnp
from jax import lax
from jax.experimental import pallas as pl
from jax.experimental.pallas import tpu as pltpu

BN_EPS = 1e-5                 # torch.nn.BatchNorm2d default
COMPUTE_DTYPE = jnp.bfloat16  # MXU-native input dtype; accumulation stays f32


def _round_up(x, m):
    return -(-x // m) * m


# ----------------------------------------------------------------------------
# Fused conv1(1x1)+bn1+relu  +  conv2(3x3, dilation, stride=1)+bn2+relu kernel
# (one image per grid step; conv1 output stays in VMEM, padded halo in scratch)
# ----------------------------------------------------------------------------
def _conv12_kernel(x_ref, w1_ref, b1_ref, w2_ref, b2_ref, o_ref, pad_ref, *,
                   H, W, Cin, Cp, d):
    # conv1: per-pixel matmul (bf16 in, f32 acc) + bias + relu
    x = x_ref[...].reshape(H * W, Cin)
    y1 = jnp.dot(x, w1_ref[...], preferred_element_type=jnp.float32)
    y1 = jnp.maximum(y1 + b1_ref[...], 0.0)

    # zero-padded halo buffer in VMEM (padding = dilation, matches PyTorch)
    pad_ref[...] = jnp.zeros_like(pad_ref)
    pad_ref[pl.ds(d, H), pl.ds(d, W), :] = y1.reshape(H, W, Cp).astype(pad_ref.dtype)

    # conv2: 9 shifted taps, each an MXU matmul, accumulated in f32
    acc = jnp.zeros((H * W, Cp), jnp.float32)
    for k in range(9):
        ky, kx = k // 3, k % 3
        tap = pad_ref[pl.ds(ky * d, H), pl.ds(kx * d, W), :]
        acc = acc + jnp.dot(tap.reshape(H * W, Cp), w2_ref[k],
                            preferred_element_type=jnp.float32)
    y2 = jnp.maximum(acc + b2_ref[...], 0.0)
    o_ref[...] = y2.reshape(1, H, W, Cp).astype(o_ref.dtype)


def _fused_conv1_conv2(x_nhwc, w1, b1, w2, b2, dilation):
    """x: (B,H,W,Cin) bf16. Returns (B,H,W,Cp) bf16. stride must be 1."""
    B, H, W, Cin = x_nhwc.shape
    Cp = w1.shape[-1]
    d = dilation
    # TODO(synk): for large H*W, tile output rows with a manual halo DMA
    # (memory_space=pl.ANY) instead of one-image-per-step blocks.
    return pl.pallas_call(
        functools.partial(_conv12_kernel, H=H, W=W, Cin=Cin, Cp=Cp, d=d),
        out_shape=jax.ShapeDtypeStruct((B, H, W, Cp), COMPUTE_DTYPE),
        grid_spec=pltpu.PrefetchScalarGridSpec(
            num_scalar_prefetch=0,
            grid=(B,),
            in_specs=[
                pl.BlockSpec((1, H, W, Cin), lambda b: (b, 0, 0, 0)),
                pl.BlockSpec((Cin, Cp), lambda b: (0, 0)),
                pl.BlockSpec((1, Cp), lambda b: (0, 0)),
                pl.BlockSpec((9, Cp, Cp), lambda b: (0, 0, 0)),
                pl.BlockSpec((1, Cp), lambda b: (0, 0)),
            ],
            out_specs=pl.BlockSpec((1, H, W, Cp), lambda b: (b, 0, 0, 0)),
            scratch_shapes=[pltpu.VMEM((H + 2 * d, W + 2 * d, Cp), COMPUTE_DTYPE)],
        ),
        compiler_params=pltpu.CompilerParams(dimension_semantics=("parallel",)),
    )(x_nhwc, w1.reshape(Cin, Cp), b1.reshape(1, Cp).astype(jnp.float32),
      w2.reshape(9, Cp, Cp), b2.reshape(1, Cp).astype(jnp.float32))


# ----------------------------------------------------------------------------
# Fused 1x1-conv matmul kernels (+ bias [+ residual | + in-kernel downsample]
# [+ relu]) — used for conv3 (and the stride>1 fallback path)
# ----------------------------------------------------------------------------
def _mm_kernel(x_ref, w_ref, b_ref, o_ref, *, relu):
    y = jnp.dot(x_ref[...], w_ref[...], preferred_element_type=jnp.float32)
    y = y + b_ref[...]
    if relu:
        y = jnp.maximum(y, 0.0)
    o_ref[...] = y.astype(o_ref.dtype)


def _mm_res_kernel(x_ref, w_ref, b_ref, r_ref, o_ref, *, relu):
    y = jnp.dot(x_ref[...], w_ref[...], preferred_element_type=jnp.float32)
    y = y + b_ref[...] + r_ref[...].astype(jnp.float32)
    if relu:
        y = jnp.maximum(y, 0.0)
    o_ref[...] = y.astype(o_ref.dtype)


def _mm_ds_kernel(x_ref, w_ref, b_ref, xd_ref, wd_ref, bd_ref, o_ref, *, relu):
    # residual branch (downsample 1x1 conv + folded BN) computed in-kernel
    r = jnp.dot(xd_ref[...], wd_ref[...], preferred_element_type=jnp.float32)
    r = r + bd_ref[...]
    y = jnp.dot(x_ref[...], w_ref[...], preferred_element_type=jnp.float32)
    y = y + b_ref[...] + r
    if relu:
        y = jnp.maximum(y, 0.0)
    o_ref[...] = y.astype(o_ref.dtype)


def _fused_matmul(x2d, w, b, *, relu, residual=None, downsample=None,
                  block_m=512, out_dtype=None):
    """(M,K) @ (K,N) + bias [+ residual | + downsample matmul] [+relu]."""
    M, K = x2d.shape
    N = w.shape[-1]
    out_dtype = out_dtype or x2d.dtype
    b2d = b.reshape(1, N).astype(jnp.float32)

    # Row tile: at least 8 grid blocks (pipelining + v7x TC sharding), >= 8 rows,
    # capped at block_m.  Ragged last block: Pallas pads reads / masks writes.
    bm = int(min(block_m, max(8, _round_up(pl.cdiv(M, 8), 8))))
    grid = (pl.cdiv(M, bm),)

    in_specs = [
        pl.BlockSpec((bm, K), lambda i: (i, 0)),   # activations (row tile)
        pl.BlockSpec((K, N), lambda i: (0, 0)),    # weights (resident)
        pl.BlockSpec((1, N), lambda i: (0, 0)),    # bias (resident)
    ]
    args = [x2d, w, b2d]
    if downsample is not None:
        xd2d, wd, bd = downsample
        Kd = xd2d.shape[1]
        kernel = functools.partial(_mm_ds_kernel, relu=relu)
        in_specs += [pl.BlockSpec((bm, Kd), lambda i: (i, 0)),
                     pl.BlockSpec((Kd, N), lambda i: (0, 0)),
                     pl.BlockSpec((1, N), lambda i: (0, 0))]
        args += [xd2d, wd, bd.reshape(1, N).astype(jnp.float32)]
    elif residual is not None:
        kernel = functools.partial(_mm_res_kernel, relu=relu)
        in_specs.append(pl.BlockSpec((bm, N), lambda i: (i, 0)))
        args.append(residual)
    else:
        kernel = functools.partial(_mm_kernel, relu=relu)

    return pl.pallas_call(
        kernel,
        out_shape=jax.ShapeDtypeStruct((M, N), out_dtype),
        grid_spec=pltpu.PrefetchScalarGridSpec(
            num_scalar_prefetch=0,
            grid=grid,
            in_specs=in_specs,
            out_specs=pl.BlockSpec((bm, N), lambda i: (i, 0)),
        ),
        compiler_params=pltpu.CompilerParams(dimension_semantics=("parallel",)),
    )(*args)


# ----------------------------------------------------------------------------
# stride > 1 fallback for conv2 (not exercised by the test)
# ----------------------------------------------------------------------------
def _im2col_3x3(x_nhwc, stride, dilation):
    # TODO(synk): replace with a direct strided 3x3 Pallas kernel (strided halo
    # DMA); im2col is kept only as the stride>1 fallback.
    B, H, W, C = x_nhwc.shape
    d, s = dilation, stride
    H_out = (H - 1) // s + 1
    W_out = (W - 1) // s + 1
    xp = jnp.pad(x_nhwc, ((0, 0), (d, d), (d, d), (0, 0)))
    cols = []
    for ky in range(3):
        for kx in range(3):
            y0, x0 = ky * d, kx * d
            cols.append(xp[:, y0:y0 + (H_out - 1) * s + 1:s,
                           x0:x0 + (W_out - 1) * s + 1:s, :])
    cols = jnp.stack(cols, axis=3)
    return cols.reshape(B * H_out * W_out, 9 * C), H_out, W_out


# ----------------------------------------------------------------------------
# Parameter prep: fold eval-mode BatchNorm into conv weights (+ bias)
# ----------------------------------------------------------------------------
def fold_conv_bn(w_hwio, gamma, beta, mean, var, eps=BN_EPS):
    scale = gamma / jnp.sqrt(var + eps)
    bias = beta - mean * scale
    w_folded = (w_hwio.astype(jnp.float32) * scale).astype(COMPUTE_DTYPE)
    return w_folded, bias.astype(jnp.float32)


# ----------------------------------------------------------------------------
# Bottleneck forward
# ----------------------------------------------------------------------------
def bottleneck_forward(x_nchw, params, *, stride=1, dilation=1):
    """Matches PyTorch Bottleneck.forward (eval-mode BatchNorm, folded)."""
    B, Cin, H, W = x_nchw.shape
    x = jnp.transpose(x_nchw, (0, 2, 3, 1)).astype(COMPUTE_DTYPE)  # NHWC bf16
    w1, w2, w3 = params["w1"], params["w2"], params["w3"]
    planes = w1.shape[-1]
    cout = w3.shape[-1]

    if stride == 1:
        out = _fused_conv1_conv2(x, w1, params["b1"], w2, params["b2"], dilation)
        H2, W2 = H, W
        out2d = out.reshape(B * H2 * W2, planes)
    else:
        # stride>1 fallback: conv1 as fused matmul, conv2 via im2col + matmul
        out1 = _fused_matmul(x.reshape(B * H * W, Cin),
                             w1.reshape(Cin, planes), params["b1"], relu=True)
        cols, H2, W2 = _im2col_3x3(out1.reshape(B, H, W, planes), stride, dilation)
        out2d = _fused_matmul(cols, w2.reshape(9 * planes, planes),
                              params["b2"], relu=True)

    # conv3 (1x1) + bn3 + residual add + relu — single fused kernel
    if params.get("wd") is not None:
        # TODO(synk): `downsample` is an arbitrary optional submodule in PyTorch;
        # only 1x1-conv + BN downsample is supported (fused into the conv3 kernel).
        xd = x if stride == 1 else x[:, ::stride, ::stride, :]
        out = _fused_matmul(
            out2d, w3.reshape(planes, cout), params["b3"], relu=True,
            downsample=(xd.reshape(B * H2 * W2, Cin),
                        params["wd"].reshape(Cin, cout), params["bd"]),
            out_dtype=jnp.float32)
    else:
        assert stride == 1 and Cin == cout, \
            "identity residual requires stride==1 and inplanes == planes*4"
        out = _fused_matmul(
            out2d, w3.reshape(planes, cout), params["b3"], relu=True,
            residual=x.reshape(B * H * W, cout), out_dtype=jnp.float32)

    out = out.reshape(B, H2, W2, cout)
    return jnp.transpose(out, (0, 3, 1, 2))  # back to NCHW


# ----------------------------------------------------------------------------
# Pure-JAX reference (same folded/bf16-rounded params, f32 math)
# ----------------------------------------------------------------------------
def _bottleneck_ref(x_nchw, params, *, stride=1, dilation=1):
    x = jnp.transpose(x_nchw, (0, 2, 3, 1)).astype(COMPUTE_DTYPE).astype(jnp.float32)

    def conv(v, w, s=1, d=1, p=0):
        return lax.conv_general_dilated(
            v, w.astype(jnp.float32), window_strides=(s, s),
            padding=[(p, p), (p, p)], rhs_dilation=(d, d),
            dimension_numbers=("NHWC", "HWIO", "NHWC"),
            precision=lax.Precision.HIGHEST)

    out = jnp.maximum(conv(x, params["w1"]) + params["b1"], 0.0)
    out = jnp.maximum(conv(out, params["w2"], s=stride, d=dilation, p=dilation)
                      + params["b2"], 0.0)
    out = conv(out, params["w3"]) + params["b3"]
    if params.get("wd") is not None:
        res = conv(x, params["wd"], s=stride) + params["bd"]
    else:
        res = x
    out = jnp.maximum(out + res, 0.0)
    return jnp.transpose(out, (0, 3, 1, 2))


if __name__ == "__main__":
    key = jax.random.PRNGKey(0)
    B, inplanes, H, W = 2, 32, 16, 16
    planes = 8                       # expansion 4 -> out channels 32 == inplanes
    stride, dilation = 1, 1
    cout = planes * 4

    keys = jax.random.split(key, 8)
    x = jax.random.normal(keys[0], (B, inplanes, H, W), dtype=jnp.float32)

    def bn_stats(k, c):
        k1, k2, k3, k4 = jax.random.split(k, 4)
        gamma = 1.0 + 0.1 * jax.random.normal(k1, (c,), jnp.float32)
        beta = 0.1 * jax.random.normal(k2, (c,), jnp.float32)
        mean = 0.1 * jax.random.normal(k3, (c,), jnp.float32)
        var = 1.0 + 0.1 * jax.random.uniform(k4, (c,), jnp.float32)
        return gamma, beta, mean, var

    # Conv weights in HWIO (kH, kW, Cin, Cout).
    w1_raw = 0.1 * jax.random.normal(keys[1], (1, 1, inplanes, planes), jnp.float32)
    w2_raw = 0.1 * jax.random.normal(keys[2], (3, 3, planes, planes), jnp.float32)
    w3_raw = 0.1 * jax.random.normal(keys[3], (1, 1, planes, cout), jnp.float32)

    w1, b1 = fold_conv_bn(w1_raw, *bn_stats(keys[4], planes))
    w2, b2 = fold_conv_bn(w2_raw, *bn_stats(keys[5], planes))
    w3, b3 = fold_conv_bn(w3_raw, *bn_stats(keys[6], cout))

    params = dict(w1=w1, b1=b1, w2=w2, b2=b2, w3=w3, b3=b3,
                  wd=None, bd=None)  # downsample=None -> identity residual

    out = bottleneck_forward(x, params, stride=stride, dilation=dilation)
    out = jax.block_until_ready(out)

    ref = _bottleneck_ref(x, params, stride=stride, dilation=dilation)
    assert out.shape == (B, cout, H, W), out.shape
    err = float(jnp.max(jnp.abs(out.astype(jnp.float32) - ref)))
    tol = float(5e-2 * (1.0 + jnp.max(jnp.abs(ref))))
    assert err < tol, f"mismatch vs reference: {err} >= {tol}"

    print("KERNEL_OK")
</pallas_src>

<mosaic_0001>
module attributes {stable_mosaic.version = 11 : i64} {
  func.func @_conv12_kernel(%arg0: i32, %arg1: memref<1x16x16x32xbf16, #tpu.memory_space<vmem>>, %arg2: memref<32x8xbf16, #tpu.memory_space<vmem>>, %arg3: memref<1x8xf32, #tpu.memory_space<vmem>>, %arg4: memref<9x8x8xbf16, #tpu.memory_space<vmem>>, %arg5: memref<1x8xf32, #tpu.memory_space<vmem>>, %arg6: memref<1x16x16x8xbf16, #tpu.memory_space<vmem>>, %arg7: memref<18x18x8xbf16, #tpu.memory_space<vmem>>) attributes {dimension_semantics = [#tpu.dimension_semantics<parallel>], iteration_bounds = array<i64: 2>, scalar_prefetch = 0 : i64, scratch_operands = 1 : i64, tpu.core_type = #tpu.core_type<tc>, window_params = [{transform_indices = @transform_0, window_bounds = array<i64: 1, 16, 16, 32>}, {pipeline_mode = #tpu.pipeline_mode<synchronous>, transform_indices = @transform_1, window_bounds = array<i64: 32, 8>}, {pipeline_mode = #tpu.pipeline_mode<synchronous>, transform_indices = @transform_2, window_bounds = array<i64: 1, 8>}, {pipeline_mode = #tpu.pipeline_mode<synchronous>, transform_indices = @transform_3, window_bounds = array<i64: 9, 8, 8>}, {pipeline_mode = #tpu.pipeline_mode<synchronous>, transform_indices = @transform_4, window_bounds = array<i64: 1, 8>}, {transform_indices = @transform_5, window_bounds = array<i64: 1, 16, 16, 8>}]} {
    %c0 = arith.constant 0 : index
    %c0_0 = arith.constant 0 : index
    %c0_1 = arith.constant 0 : index
    %c0_2 = arith.constant 0 : index
    %0 = vector.load %arg1[%c0, %c0_0, %c0_1, %c0_2] : memref<1x16x16x32xbf16, #tpu.memory_space<vmem>>, vector<1x16x16x32xbf16>
    %1 = vector.shape_cast %0 : vector<1x16x16x32xbf16> to vector<256x32xbf16>
    %c0_3 = arith.constant 0 : index
    %c0_4 = arith.constant 0 : index
    %2 = vector.load %arg2[%c0_3, %c0_4] : memref<32x8xbf16, #tpu.memory_space<vmem>>, vector<32x8xbf16>
    %cst = arith.constant dense<0.000000e+00> : vector<256x8xf32>
    %3 = tpu.matmul %1, %2, %cst {dimension_numbers = #tpu.dot_dimension_numbers<[1], [0], [0], [1], [0, 0, 1, 1], [], []>} : vector<256x32xbf16>, vector<32x8xbf16>, vector<256x8xf32> -> vector<256x8xf32>
    %c0_5 = arith.constant 0 : index
    %c0_6 = arith.constant 0 : index
    %4 = vector.load %arg3[%c0_5, %c0_6] : memref<1x8xf32, #tpu.memory_space<vmem>>, vector<1x8xf32>
    %5 = vector.broadcast %4 : vector<1x8xf32> to vector<256x8xf32>
    %6 = arith.addf %3, %5 : vector<256x8xf32>
    %cst_7 = arith.constant 0.000000e+00 : f32
    %7 = vector.broadcast %cst_7 : f32 to vector<256x8xf32>
    %8 = arith.maximumf %6, %7 : vector<256x8xf32>
    %cst_8 = arith.constant 0.000000e+00 : bf16
    %9 = vector.broadcast %cst_8 : bf16 to vector<18x18x8xbf16>
    %c0_9 = arith.constant 0 : index
    %c0_10 = arith.constant 0 : index
    %c0_11 = arith.constant 0 : index
    %10 = vector.load %arg7[%c0_9, %c0_10, %c0_11] : memref<18x18x8xbf16, #tpu.memory_space<vmem>>, vector<18x18x8xbf16>
    tpu.vector_store %arg7[%c0_9, %c0_10, %c0_11], %9 {strides = array<i32>} : memref<18x18x8xbf16, #tpu.memory_space<vmem>>, vector<18x18x8xbf16>,
    %11 = vector.shape_cast %8 : vector<256x8xf32> to vector<16x16x8xf32>
    %12 = arith.truncf %11 : vector<16x16x8xf32> to vector<16x16x8xbf16>
    %c1 = arith.constant 1 : index
    %c1_12 = arith.constant 1 : index
    %c0_13 = arith.constant 0 : index
    %13 = vector.load %arg7[%c1, %c1_12, %c0_13] : memref<18x18x8xbf16, #tpu.memory_space<vmem>>, vector<16x16x8xbf16>
    tpu.vector_store %arg7[%c1, %c1_12, %c0_13], %12 {strides = array<i32>} : memref<18x18x8xbf16, #tpu.memory_space<vmem>>, vector<16x16x8xbf16>,
    %cst_14 = arith.constant 0.000000e+00 : f32
    %14 = vector.broadcast %cst_14 : f32 to vector<256x8xf32>
    %c0_15 = arith.constant 0 : index
    %c0_16 = arith.constant 0 : index
    %c0_17 = arith.constant 0 : index
    %15 = vector.load %arg7[%c0_15, %c0_16, %c0_17] : memref<18x18x8xbf16, #tpu.memory_space<vmem>>, vector<16x16x8xbf16>
    %16 = vector.shape_cast %15 : vector<16x16x8xbf16> to vector<256x8xbf16>
    %c0_18 = arith.constant 0 : index
    %c0_19 = arith.constant 0 : index
    %c0_20 = arith.constant 0 : index
    %17 = vector.load %arg4[%c0_18, %c0_19, %c0_20] : memref<9x8x8xbf16, #tpu.memory_space<vmem>>, vector<1x8x8xbf16>
    %18 = vector.shape_cast %17 : vector<1x8x8xbf16> to vector<8x8xbf16>
    %cst_21 = arith.constant dense<0.000000e+00> : vector<256x8xf32>
    %19 = tpu.matmul %16, %18, %cst_21 {dimension_numbers = #tpu.dot_dimension_numbers<[1], [0], [0], [1], [0, 0, 1, 1], [], []>} : vector<256x8xbf16>, vector<8x8xbf16>, vector<256x8xf32> -> vector<256x8xf32>
    %20 = arith.addf %14, %19 : vector<256x8xf32>
    %c0_22 = arith.constant 0 : index
    %c1_23 = arith.constant 1 : index
    %c0_24 = arith.constant 0 : index
    %21 = vector.load %arg7[%c0_22, %c1_23, %c0_24] : memref<18x18x8xbf16, #tpu.memory_space<vmem>>, vector<16x16x8xbf16>
    %22 = vector.shape_cast %21 : vector<16x16x8xbf16> to vector<256x8xbf16>
    %c1_25 = arith.constant 1 : index
    %c0_26 = arith.constant 0 : index
    %c0_27 = arith.constant 0 : index
    %23 = vector.load %arg4[%c1_25, %c0_26, %c0_27] : memref<9x8x8xbf16, #tpu.memory_space<vmem>>, vector<1x8x8xbf16>
    %24 = vector.shape_cast %23 : vector<1x8x8xbf16> to vector<8x8xbf16>
    %cst_28 = arith.constant dense<0.000000e+00> : vector<256x8xf32>
    %25 = tpu.matmul %22, %24, %cst_28 {dimension_numbers = #tpu.dot_dimension_numbers<[1], [0], [0], [1], [0, 0, 1, 1], [], []>} : vector<256x8xbf16>, vector<8x8xbf16>, vector<256x8xf32> -> vector<256x8xf32>
    %26 = arith.addf %20, %25 : vector<256x8xf32>
    %c0_29 = arith.constant 0 : index
    %c2 = arith.constant 2 : index
    %c0_30 = arith.constant 0 : index
    %27 = vector.load %arg7[%c0_29, %c2, %c0_30] : memref<18x18x8xbf16, #tpu.memory_space<vmem>>, vector<16x16x8xbf16>
    %28 = vector.shape_cast %27 : vector<16x16x8xbf16> to vector<256x8xbf16>
    %c2_31 = arith.constant 2 : index
    %c0_32 = arith.constant 0 : index
    %c0_33 = arith.constant 0 : index
    %29 = vector.load %arg4[%c2_31, %c0_32, %c0_33] : memref<9x8x8xbf16, #tpu.memory_space<vmem>>, vector<1x8x8xbf16>
    %30 = vector.shape_cast %29 : vector<1x8x8xbf16> to vector<8x8xbf16>
    %cst_34 = arith.constant dense<0.000000e+00> : vector<256x8xf32>
    %31 = tpu.matmul %28, %30, %cst_34 {dimension_numbers = #tpu.dot_dimension_numbers<[1], [0], [0], [1], [0, 0, 1, 1], [], []>} : vector<256x8xbf16>, vector<8x8xbf16>, vector<256x8xf32> -> vector<256x8xf32>
    %32 = arith.addf %26, %31 : vector<256x8xf32>
    %c1_35 = arith.constant 1 : index
    %c0_36 = arith.constant 0 : index
    %c0_37 = arith.constant 0 : index
    %33 = vector.load %arg7[%c1_35, %c0_36, %c0_37] : memref<18x18x8xbf16, #tpu.memory_space<vmem>>, vector<16x16x8xbf16>
    %34 = vector.shape_cast %33 : vector<16x16x8xbf16> to vector<256x8xbf16>
    %c3 = arith.constant 3 : index
    %c0_38 = arith.constant 0 : index
    %c0_39 = arith.constant 0 : index
    %35 = vector.load %arg4[%c3, %c0_38, %c0_39] : memref<9x8x8xbf16, #tpu.memory_space<vmem>>, vector<1x8x8xbf16>
    %36 = vector.shape_cast %35 : vector<1x8x8xbf16> to vector<8x8xbf16>
    %cst_40 = arith.constant dense<0.000000e+00> : vector<256x8xf32>
    %37 = tpu.matmul %34, %36, %cst_40 {dimension_numbers = #tpu.dot_dimension_numbers<[1], [0], [0], [1], [0, 0, 1, 1], [], []>} : vector<256x8xbf16>, vector<8x8xbf16>, vector<256x8xf32> -> vector<256x8xf32>
    %38 = arith.addf %32, %37 : vector<256x8xf32>
    %c1_41 = arith.constant 1 : index
    %c1_42 = arith.constant 1 : index
    %c0_43 = arith.constant 0 : index
    %39 = vector.load %arg7[%c1_41, %c1_42, %c0_43] : memref<18x18x8xbf16, #tpu.memory_space<vmem>>, vector<16x16x8xbf16>
    %40 = vector.shape_cast %39 : vector<16x16x8xbf16> to vector<256x8xbf16>
    %c4 = arith.constant 4 : index
    %c0_44 = arith.constant 0 : index
    %c0_45 = arith.constant 0 : index
    %41 = vector.load %arg4[%c4, %c0_44, %c0_45] : memref<9x8x8xbf16, #tpu.memory_space<vmem>>, vector<1x8x8xbf16>
    %42 = vector.shape_cast %41 : vector<1x8x8xbf16> to vector<8x8xbf16>
    %cst_46 = arith.constant dense<0.000000e+00> : vector<256x8xf32>
    %43 = tpu.matmul %40, %42, %cst_46 {dimension_numbers = #tpu.dot_dimension_numbers<[1], [0], [0], [1], [0, 0, 1, 1], [], []>} : vector<256x8xbf16>, vector<8x8xbf16>, vector<256x8xf32> -> vector<256x8xf32>
    %44 = arith.addf %38, %43 : vector<256x8xf32>
    %c1_47 = arith.constant 1 : index
    %c2_48 = arith.constant 2 : index
    %c0_49 = arith.constant 0 : index
    %45 = vector.load %arg7[%c1_47, %c2_48, %c0_49] : memref<18x18x8xbf16, #tpu.memory_space<vmem>>, vector<16x16x8xbf16>
    %46 = vector.shape_cast %45 : vector<16x16x8xbf16> to vector<256x8xbf16>
    %c5 = arith.constant 5 : index
    %c0_50 = arith.constant 0 : index
    %c0_51 = arith.constant 0 : index
    %47 = vector.load %arg4[%c5, %c0_50, %c0_51] : memref<9x8x8xbf16, #tpu.memory_space<vmem>>, vector<1x8x8xbf16>
    %48 = vector.shape_cast %47 : vector<1x8x8xbf16> to vector<8x8xbf16>
    %cst_52 = arith.constant dense<0.000000e+00> : vector<256x8xf32>
    %49 = tpu.matmul %46, %48, %cst_52 {dimension_numbers = #tpu.dot_dimension_numbers<[1], [0], [0], [1], [0, 0, 1, 1], [], []>} : vector<256x8xbf16>, vector<8x8xbf16>, vector<256x8xf32> -> vector<256x8xf32>
    %50 = arith.addf %44, %49 : vector<256x8xf32>
    %c2_53 = arith.constant 2 : index
    %c0_54 = arith.constant 0 : index
    %c0_55 = arith.constant 0 : index
    %51 = vector.load %arg7[%c2_53, %c0_54, %c0_55] : memref<18x18x8xbf16, #tpu.memory_space<vmem>>, vector<16x16x8xbf16>
    %52 = vector.shape_cast %51 : vector<16x16x8xbf16> to vector<256x8xbf16>
    %c6 = arith.constant 6 : index
    %c0_56 = arith.constant 0 : index
    %c0_57 = arith.constant 0 : index
    %53 = vector.load %arg4[%c6, %c0_56, %c0_57] : memref<9x8x8xbf16, #tpu.memory_space<vmem>>, vector<1x8x8xbf16>
    %54 = vector.shape_cast %53 : vector<1x8x8xbf16> to vector<8x8xbf16>
    %cst_58 = arith.constant dense<0.000000e+00> : vector<256x8xf32>
    %55 = tpu.matmul %52, %54, %cst_58 {dimension_numbers = #tpu.dot_dimension_numbers<[1], [0], [0], [1], [0, 0, 1, 1], [], []>} : vector<256x8xbf16>, vector<8x8xbf16>, vector<256x8xf32> -> vector<256x8xf32>
    %56 = arith.addf %50, %55 : vector<256x8xf32>
    %c2_59 = arith.constant 2 : index
    %c1_60 = arith.constant 1 : index
    %c0_61 = arith.constant 0 : index
    %57 = vector.load %arg7[%c2_59, %c1_60, %c0_61] : memref<18x18x8xbf16, #tpu.memory_space<vmem>>, vector<16x16x8xbf16>
    %58 = vector.shape_cast %57 : vector<16x16x8xbf16> to vector<256x8xbf16>
    %c7 = arith.constant 7 : index
    %c0_62 = arith.constant 0 : index
    %c0_63 = arith.constant 0 : index
    %59 = vector.load %arg4[%c7, %c0_62, %c0_63] : memref<9x8x8xbf16, #tpu.memory_space<vmem>>, vector<1x8x8xbf16>
    %60 = vector.shape_cast %59 : vector<1x8x8xbf16> to vector<8x8xbf16>
    %cst_64 = arith.constant dense<0.000000e+00> : vector<256x8xf32>
    %61 = tpu.matmul %58, %60, %cst_64 {dimension_numbers = #tpu.dot_dimension_numbers<[1], [0], [0], [1], [0, 0, 1, 1], [], []>} : vector<256x8xbf16>, vector<8x8xbf16>, vector<256x8xf32> -> vector<256x8xf32>
    %62 = arith.addf %56, %61 : vector<256x8xf32>
    %c2_65 = arith.constant 2 : index
    %c2_66 = arith.constant 2 : index
    %c0_67 = arith.constant 0 : index
    %63 = vector.load %arg7[%c2_65, %c2_66, %c0_67] : memref<18x18x8xbf16, #tpu.memory_space<vmem>>, vector<16x16x8xbf16>
    %64 = vector.shape_cast %63 : vector<16x16x8xbf16> to vector<256x8xbf16>
    %c8 = arith.constant 8 : index
    %c0_68 = arith.constant 0 : index
    %c0_69 = arith.constant 0 : index
    %65 = vector.load %arg4[%c8, %c0_68, %c0_69] : memref<9x8x8xbf16, #tpu.memory_space<vmem>>, vector<1x8x8xbf16>
    %66 = vector.shape_cast %65 : vector<1x8x8xbf16> to vector<8x8xbf16>
    %cst_70 = arith.constant dense<0.000000e+00> : vector<256x8xf32>
    %67 = tpu.matmul %64, %66, %cst_70 {dimension_numbers = #tpu.dot_dimension_numbers<[1], [0], [0], [1], [0, 0, 1, 1], [], []>} : vector<256x8xbf16>, vector<8x8xbf16>, vector<256x8xf32> -> vector<256x8xf32>
    %68 = arith.addf %62, %67 : vector<256x8xf32>
    %c0_71 = arith.constant 0 : index
    %c0_72 = arith.constant 0 : index
    %69 = vector.load %arg5[%c0_71, %c0_72] : memref<1x8xf32, #tpu.memory_space<vmem>>, vector<1x8xf32>
    %70 = vector.broadcast %69 : vector<1x8xf32> to vector<256x8xf32>
    %71 = arith.addf %68, %70 : vector<256x8xf32>
    %cst_73 = arith.constant 0.000000e+00 : f32
    %72 = vector.broadcast %cst_73 : f32 to vector<256x8xf32>
    %73 = arith.maximumf %71, %72 : vector<256x8xf32>
    %74 = vector.shape_cast %73 : vector<256x8xf32> to vector<1x16x16x8xf32>
    %75 = arith.truncf %74 : vector<1x16x16x8xf32> to vector<1x16x16x8xbf16>
    %c0_74 = arith.constant 0 : index
    %c0_75 = arith.constant 0 : index
    %c0_76 = arith.constant 0 : index
    %c0_77 = arith.constant 0 : index
    %76 = vector.load %arg6[%c0_74, %c0_75, %c0_76, %c0_77] : memref<1x16x16x8xbf16, #tpu.memory_space<vmem>>, vector<1x16x16x8xbf16>
    tpu.vector_store %arg6[%c0_74, %c0_75, %c0_76, %c0_77], %75 {strides = array<i32>} : memref<1x16x16x8xbf16, #tpu.memory_space<vmem>>, vector<1x16x16x8xbf16>,
    return
  }
  func.func @transform_0(%arg0: i32) -> (i32, i32, i32, i32) {
    %c0_i32 = arith.constant 0 : i32
    %c0_i32_0 = arith.constant 0 : i32
    %c0_i32_1 = arith.constant 0 : i32
    %c0_i32_2 = arith.constant 0 : i32
    return %arg0, %c0_i32, %c0_i32_0, %c0_i32_1 : i32, i32, i32, i32
  }
  func.func @transform_1(%arg0: i32) -> (i32, i32) {
    %c0_i32 = arith.constant 0 : i32
    %c0_i32_0 = arith.constant 0 : i32
    %c0_i32_1 = arith.constant 0 : i32
    return %c0_i32, %c0_i32_0 : i32, i32
  }
  func.func @transform_2(%arg0: i32) -> (i32, i32) {
    %c0_i32 = arith.constant 0 : i32
    %c0_i32_0 = arith.constant 0 : i32
    %c0_i32_1 = arith.constant 0 : i32
    return %c0_i32, %c0_i32_0 : i32, i32
  }
  func.func @transform_3(%arg0: i32) -> (i32, i32, i32) {
    %c0_i32 = arith.constant 0 : i32
    %c0_i32_0 = arith.constant 0 : i32
    %c0_i32_1 = arith.constant 0 : i32
    %c0_i32_2 = arith.constant 0 : i32
    return %c0_i32, %c0_i32_0, %c0_i32_1 : i32, i32, i32
  }
  func.func @transform_4(%arg0: i32) -> (i32, i32) {
    %c0_i32 = arith.constant 0 : i32
    %c0_i32_0 = arith.constant 0 : i32
    %c0_i32_1 = arith.constant 0 : i32
    return %c0_i32, %c0_i32_0 : i32, i32
  }
  func.func @transform_5(%arg0: i32) -> (i32, i32, i32, i32) {
    %c0_i32 = arith.constant 0 : i32
    %c0_i32_0 = arith.constant 0 : i32
    %c0_i32_1 = arith.constant 0 : i32
    %c0_i32_2 = arith.constant 0 : i32
    return %arg0, %c0_i32, %c0_i32_0, %c0_i32_1 : i32, i32, i32, i32
  }
}

</mosaic_0001>

<llo_original>
// kernel: tpu_custom_call.1
$region0: #{tpu_custom_call.1}
  #allocation0 [shape = 'u32[]', space=smem, size = 0x4, offset = 0x4, fixed_abs, tag = 'smem constant byte address 0x4 - core index']
  #allocation1 [shape = 'u32[72,128]{1,0:T(1,128)}', space=vmem, size = 0x9000, scoped, tag = 'internal scratch']
  #allocation2 [shape = 'bf16[18,18,8]{2,1,0:T(8,128)(2,1)}', space=vmem, size = 0x1b000, scoped, tag = 'scratch operand']
  %s0 = inlined_call_operand.hbm [shape: bf16[2,16,16,32], index: 0, kind: input, shape index: {}]
  %s1 = inlined_call_operand.vmem [shape: bf16[32,8], index: 1, kind: input, shape index: {}]
  %s2 = inlined_call_operand.vmem [shape: f32[1,8], index: 2, kind: input, shape index: {}]
  %s3 = inlined_call_operand.vmem [shape: bf16[9,8,8], index: 3, kind: input, shape index: {}]
  %s4 = inlined_call_operand.vmem [shape: f32[1,8], index: 4, kind: input, shape index: {}]
  %s5 = inlined_call_operand.vmem [shape: bf16[2,16,16,8], index: 5, kind: output, shape index: {}]
  %s6 = sld [smem:[#allocation0]]
  $region57: #{tpu_custom_call.1} parent=0
    _
  %s8 = ssub.s32 1, %s6
  %s9 = scalar_select 0, %s8, %s6
  $region1: #{tpu_custom_call.1} parent=0
    #allocation3 [shape = 'u8[131072]{0}', space=vmem, size = 0x20000, scoped, tag = 'input window, operand 0']
    #allocation4 [shape = 's32[2]{0}', space=sflag, size = 0x8, scoped, tag = 'scoped memory for tpu_custom_call.1']
    %10 = vsyncpa [#allocation4], 0
    %s11 = scalar_lea.sflag [#allocation4], 1
    %12 = vsyncpa %s11, 0
    loop: start=0, step=1, limit=4
    $region2: #{tpu_custom_call.1} parent=1 // loop_pre_header
      _
    $region3: #{tpu_custom_call.1} parent=1 // loop_header
      %s14 = sphi 0, %s18
      %p15 = scmp.ge.s32.totalorder %s14, 4
      %s24 = sphi 0, %s26
      %s27 = sphi 0, %s24
      %s28 = sphi 0, %s27
      %s44 = sphi 0, %s28
      %s48 = sphi 0, %s48
      %s50 = sphi 0, %s48
      %s51 = sphi 0, %s50
      %s65 = sphi 0, %s51
      %s69 = sphi 0, %s69
      %s71 = sphi 0, %s69
      %s72 = sphi 0, %s71
      %s86 = sphi 0, %s72
      %s90 = sphi 0, %s90
      %s92 = sphi 0, %s90
      %s93 = sphi 0, %s92
      %s107 = sphi 0, %s93
      %s111 = sphi 0, %s111
      %s113 = sphi 0, %s111
      %s114 = sphi 0, %s113
      %s128 = sphi 0, %s114
      %s134 = sphi 0, %s136
      %s137 = sphi 0, %s134
      %s138 = sphi 0, %s137
      %s154 = sphi 0, %s138
    $region4: #{tpu_custom_call.1} parent=1 // loop_header_branch
      %17 = sbr.rel (%p15) target = $region8
    $region5: #{tpu_custom_call.1} parent=1 // loop_body
      %s19 = ssub.s32 %s14, 1
      %s20 = ssub.s32 %s14, 2
      %s21 = sadd.s32 %s14, 1
      %s22 = ssub.s32 %s14, %s21
      %p23 = scmp.eq.s32.totalorder %s22, 0
      %s25 = sadd.s32 %s24, 1
      %s26 = scalar_select %p23, %s24, %s25
      %p29 = pneg %p23
      %p30 = scmp.eq.s32.totalorder %s14, 1
      %p31 = por %p29, %p30
      %p32 = scmp.ne.s32.totalorder %s24, %s27
      %p33 = scmp.eq.s32.totalorder %s14, 0
      %p34 = por %p32, %p33
      %p35 = scmp.ne.s32.totalorder %s24, %s27
      %p36 = scmp.eq.s32.totalorder %s19, 1
      %p37 = por %p35, %p36
      %p38 = scmp.ne.s32.totalorder %s27, %s28
      %p39 = scmp.eq.s32.totalorder %s19, 0
      %p40 = por %p38, %p39
      %p41 = scmp.ne.s32.totalorder %s27, %s28
      %p42 = scmp.eq.s32.totalorder %s20, 1
      %p43 = por %p41, %p42
      %p45 = scmp.ne.s32.totalorder %s28, %s44
      %p46 = scmp.eq.s32.totalorder %s20, 0
      %p47 = por %p45, %p46
      %s49 = sadd.s32 %s48, 1
      %p52 = scmp.eq.s32.totalorder %s14, 1
      %p53 = scmp.ne.s32.totalorder %s48, %s50
      %p54 = scmp.eq.s32.totalorder %s14, 0
      %p55 = por %p53, %p54
      %p56 = scmp.ne.s32.totalorder %s48, %s50
      %p57 = scmp.eq.s32.totalorder %s19, 1
      %p58 = por %p56, %p57
      %p59 = scmp.ne.s32.totalorder %s50, %s51
      %p60 = scmp.eq.s32.totalorder %s19, 0
      %p61 = por %p59, %p60
      %p62 = scmp.ne.s32.totalorder %s50, %s51
      %p63 = scmp.eq.s32.totalorder %s20, 1
      %p64 = por %p62, %p63
      %p66 = scmp.ne.s32.totalorder %s51, %s65
      %p67 = scmp.eq.s32.totalorder %s20, 0
      %p68 = por %p66, %p67
      %s70 = sadd.s32 %s69, 1
      %p73 = scmp.eq.s32.totalorder %s14, 1
      %p74 = scmp.ne.s32.totalorder %s69, %s71
      %p75 = scmp.eq.s32.totalorder %s14, 0
      %p76 = por %p74, %p75
      %p77 = scmp.ne.s32.totalorder %s69, %s71
      %p78 = scmp.eq.s32.totalorder %s19, 1
      %p79 = por %p77, %p78
      %p80 = scmp.ne.s32.totalorder %s71, %s72
      %p81 = scmp.eq.s32.totalorder %s19, 0
      %p82 = por %p80, %p81
      %p83 = scmp.ne.s32.totalorder %s71, %s72
      %p84 = scmp.eq.s32.totalorder %s20, 1
      %p85 = por %p83, %p84
      %p87 = scmp.ne.s32.totalorder %s72, %s86
      %p88 = scmp.eq.s32.totalorder %s20, 0
      %p89 = por %p87, %p88
      %s91 = sadd.s32 %s90, 1
      %p94 = scmp.eq.s32.totalorder %s14, 1
      %p95 = scmp.ne.s32.totalorder %s90, %s92
      %p96 = scmp.eq.s32.totalorder %s14, 0
      %p97 = por %p95, %p96
      %p98 = scmp.ne.s32.totalorder %s90, %s92
      %p99 = scmp.eq.s32.totalorder %s19, 1
      %p100 = por %p98, %p99
      %p101 = scmp.ne.s32.totalorder %s92, %s93
      %p102 = scmp.eq.s32.totalorder %s19, 0
      %p103 = por %p101, %p102
      %p104 = scmp.ne.s32.totalorder %s92, %s93
      %p105 = scmp.eq.s32.totalorder %s20, 1
      %p106 = por %p104, %p105
      %p108 = scmp.ne.s32.totalorder %s93, %s107
      %p109 = scmp.eq.s32.totalorder %s20, 0
      %p110 = por %p108, %p109
      %s112 = sadd.s32 %s111, 1
      %p115 = scmp.eq.s32.totalorder %s14, 1
      %p116 = scmp.ne.s32.totalorder %s111, %s113
      %p117 = scmp.eq.s32.totalorder %s14, 0
      %p118 = por %p116, %p117
      %p119 = scmp.ne.s32.totalorder %s111, %s113
      %p120 = scmp.eq.s32.totalorder %s19, 1
      %p121 = por %p119, %p120
      %p122 = scmp.ne.s32.totalorder %s113, %s114
      %p123 = scmp.eq.s32.totalorder %s19, 0
      %p124 = por %p122, %p123
      %p125 = scmp.ne.s32.totalorder %s113, %s114
      %p126 = scmp.eq.s32.totalorder %s20, 1
      %p127 = por %p125, %p126
      %p129 = scmp.ne.s32.totalorder %s114, %s128
      %p130 = scmp.eq.s32.totalorder %s20, 0
      %p131 = por %p129, %p130
      %s132 = ssub.s32 %s14, %s21
      %p133 = scmp.eq.s32.totalorder %s132, 0
      %s135 = sadd.s32 %s134, 1
      %s136 = scalar_select %p133, %s134, %s135
      %p139 = pneg %p133
      %p140 = scmp.eq.s32.totalorder %s14, 1
      %p141 = por %p139, %p140
      %p142 = scmp.ne.s32.totalorder %s134, %s137
      %p143 = scmp.eq.s32.totalorder %s14, 0
      %p144 = por %p142, %p143
      %p145 = scmp.ne.s32.totalorder %s134, %s137
      %p146 = scmp.eq.s32.totalorder %s19, 1
      %p147 = por %p145, %p146
      %p148 = scmp.ne.s32.totalorder %s137, %s138
      %p149 = scmp.eq.s32.totalorder %s19, 0
      %p150 = por %p148, %p149
      %p151 = scmp.ne.s32.totalorder %s137, %s138
      %p152 = scmp.eq.s32.totalorder %s20, 1
      %p153 = por %p151, %p152
      %p155 = scmp.ne.s32.totalorder %s138, %s154
      %p156 = scmp.eq.s32.totalorder %s20, 0
      %p157 = por %p155, %p156
      %p158 = scmp.le.s32.totalorder 1, %s14
      %p159 = scmp.lt.s32.totalorder %s14, 3
      %p160 = pnand %p158, %p159
      %p161 = pneg %p160
      // Predicated region
      $region9: #{tpu_custom_call.1} parent=5 // pred_check
        _
      $region10: #{tpu_custom_call.1} parent=5 // pred_check_branch
        %163 = sbr.rel (%p160) target = $region12
      $region11: #{tpu_custom_call.1} parent=5 // pred_region
        %s164 = ssub.s32 %s14, 1
        // Predicated region
        $region13: #{tpu_custom_call.1} parent=11 // pred_check
          %p165 = pneg %p61
        $region14: #{tpu_custom_call.1} parent=11 // pred_check_branch
          %167 = sbr.rel (%p165) target = $region16
        $region15: #{tpu_custom_call.1} parent=11 // pred_region
          _
        $region16: #{tpu_custom_call.1} parent=11 // pred_fallthru
          _
        // Predicated region
        $region17: #{tpu_custom_call.1} parent=11 // pred_check
          %p168 = pneg %p82
        $region18: #{tpu_custom_call.1} parent=11 // pred_check_branch
          %170 = sbr.rel (%p168) target = $region20
        $region19: #{tpu_custom_call.1} parent=11 // pred_region
          _
        $region20: #{tpu_custom_call.1} parent=11 // pred_fallthru
          _
        // Predicated region
        $region21: #{tpu_custom_call.1} parent=11 // pred_check
          %p171 = pneg %p103
        $region22: #{tpu_custom_call.1} parent=11 // pred_check_branch
          %173 = sbr.rel (%p171) target = $region24
        $region23: #{tpu_custom_call.1} parent=11 // pred_region
          _
        $region24: #{tpu_custom_call.1} parent=11 // pred_fallthru
          _
        // Predicated region
        $region25: #{tpu_custom_call.1} parent=11 // pred_check
          %p174 = pneg %p124
        $region26: #{tpu_custom_call.1} parent=11 // pred_check_branch
          %176 = sbr.rel (%p174) target = $region28
        $region27: #{tpu_custom_call.1} parent=11 // pred_region
          _
        $region28: #{tpu_custom_call.1} parent=11 // pred_fallthru
          _
      $region12: #{tpu_custom_call.1} parent=5 // pred_fallthru
        _
      %p177 = scmp.lt.s32.totalorder %s14, 2
      // Predicated region
      $region29: #{tpu_custom_call.1} parent=5 // pred_check
        %p178 = pneg %p177
      $region30: #{tpu_custom_call.1} parent=5 // pred_check_branch
        %180 = sbr.rel (%p178) target = $region32
      $region31: #{tpu_custom_call.1} parent=5 // pred_region
        // Predicated region
        $region33: #{tpu_custom_call.1} parent=31 // pred_check
          %p181 = pneg %p34
        $region34: #{tpu_custom_call.1} parent=31 // pred_check_branch
          %183 = sbr.rel (%p181) target = $region36
        $region35: #{tpu_custom_call.1} parent=31 // pred_region
          %s184 = sand.u32 %s24, 1
          %s185 = scalar_lea.sflag [#allocation4], %s184
          %s186 = sand.u32 %s24, 1
          %s187 = smul.addr %s186, 128
          %s188 = scalar_lea.vmem [#allocation3], %s187
          %190 = vsyncadd %s185, 0
          %s191 = smul.addr %s14, 32
          %s192 = smul.addr %s191, 4
          %s193 = scalar_lea.hbm %s0, %s192
          %s194 = sshll.u32 %s193, 4
          %s195 = int_to_ptr.hbm [resolvable:$true] %s194
          %s196 = sshll.u32 %s188, 4
          %s197 = int_to_ptr.vmem [resolvable:$true] %s196
          %202 = dma.hbm_to_vmem [thread:$0]  %s195, 2048, %s197, %s185, 64, 64, 4
        $region36: #{tpu_custom_call.1} parent=31 // pred_fallthru
          _
      $region32: #{tpu_custom_call.1} parent=5 // pred_fallthru
        _
      %p203 = scmp.le.s32.totalorder 1, %s14
      %p204 = scmp.lt.s32.totalorder %s14, 3
      %p205 = pnand %p203, %p204
      %p206 = pneg %p205
      // Predicated region
      $region37: #{tpu_custom_call.1} parent=5 // pred_check
        _
      $region38: #{tpu_custom_call.1} parent=5 // pred_check_branch
        %208 = sbr.rel (%p205) target = $region40
      $region39: #{tpu_custom_call.1} parent=5 // pred_region
        %s209 = ssub.s32 %s14, 1
        %s210 = sand.u32 %s27, 1
        %s211 = scalar_lea.sflag [#allocation4], %s210
        %s212 = sand.u32 %s27, 1
        %s213 = smul.addr %s212, 128
        %s214 = scalar_lea.vmem [#allocation3], %s213
        // Predicated region
        $region41: #{tpu_custom_call.1} parent=39 // pred_check
          %p215 = pneg %p40
        $region42: #{tpu_custom_call.1} parent=39 // pred_check_branch
          %217 = sbr.rel (%p215) target = $region44
        $region43: #{tpu_custom_call.1} parent=39 // pred_region
          %219 = dma.done %s211, 2048
        $region44: #{tpu_custom_call.1} parent=39 // pred_fallthru
          _
        %s220 = sand.u32 %s27, 1
        %s221 = scalar_lea.sflag [#allocation4], %s220
        %s222 = sand.u32 %s27, 1
        %s223 = smul.addr %s222, 128
        %s224 = scalar_lea.vmem [#allocation3], %s223
        %p225 = pneg %p40
        %p226 = pneg %p37
        %p227 = pneg %p61
        %p228 = pneg %p58
        %p229 = pneg %p82
        %p230 = pneg %p79
        %p231 = pneg %p103
        %p232 = pneg %p100
        %p233 = pneg %p124
        %p234 = pneg %p121
        %p235 = pneg %p150
        %p236 = pneg %p147
        %p237 = scmp.lt.s32.totalorder %s19, 1
        %s238 = scalar_select %p237, %s19, 1
        %s239 = smul.addr %s238, 32
        %s240 = smul.addr %s239, 4
        %s241 = scalar_lea.vmem %s5, %s240
        %p242 = scmp.lt.s32.totalorder %s19, 1
        %s243 = scalar_select %p242, %s19, 1
        %s244 = smul.addr %s243, 32
        %s245 = smul.addr %s244, 4
        %s246 = scalar_lea.vmem %s5, %s245
        %v248 = vld [vmem:[%s214] sm:$0xf]
        %v249 = vld [vmem:[%s214 + $0x4] sm:$0xf]
        %v250 = vld [vmem:[%s214 + $0x8] sm:$0xf]
        %v251 = vld [vmem:[%s214 + $0xc] sm:$0xf]
        %v252 = vld [vmem:[%s214 + $0x10] sm:$0xf]
        %v253 = vld [vmem:[%s214 + $0x14] sm:$0xf]
        %v254 = vld [vmem:[%s214 + $0x18] sm:$0xf]
        %v255 = vld [vmem:[%s214 + $0x1c] sm:$0xf]
        %v256 = vld [vmem:[%s214 + $0x20] sm:$0xf]
        %v257 = vld [vmem:[%s214 + $0x24] sm:$0xf]
        %v258 = vld [vmem:[%s214 + $0x28] sm:$0xf]
        %v259 = vld [vmem:[%s214 + $0x2c] sm:$0xf]
        %v260 = vld [vmem:[%s214 + $0x30] sm:$0xf]
        %v261 = vld [vmem:[%s214 + $0x34] sm:$0xf]
        %v262 = vld [vmem:[%s214 + $0x38] sm:$0xf]
        %v263 = vld [vmem:[%s214 + $0x3c] sm:$0xf]
        %v264 = vld [vmem:[%s214 + $0x40] sm:$0xf]
        %v265 = vld [vmem:[%s214 + $0x44] sm:$0xf]
        %v266 = vld [vmem:[%s214 + $0x48] sm:$0xf]
        %v267 = vld [vmem:[%s214 + $0x4c] sm:$0xf]
        %v268 = vld [vmem:[%s214 + $0x50] sm:$0xf]
        %v269 = vld [vmem:[%s214 + $0x54] sm:$0xf]
        %v270 = vld [vmem:[%s214 + $0x58] sm:$0xf]
        %v271 = vld [vmem:[%s214 + $0x5c] sm:$0xf]
        %v272 = vld [vmem:[%s214 + $0x60] sm:$0xf]
        %v273 = vld [vmem:[%s214 + $0x64] sm:$0xf]
        %v274 = vld [vmem:[%s214 + $0x68] sm:$0xf]
        %v275 = vld [vmem:[%s214 + $0x6c] sm:$0xf]
        %v276 = vld [vmem:[%s214 + $0x70] sm:$0xf]
        %v277 = vld [vmem:[%s214 + $0x74] sm:$0xf]
        %v278 = vld [vmem:[%s214 + $0x78] sm:$0xf]
        %v279 = vld [vmem:[%s214 + $0x7c] sm:$0xf]
        %v280 = vld [vmem:[%s1] sm:$0xf]
        %v281 = vld [vmem:[%s1 + $0x4] sm:$0xf]
        %v282 = vld [vmem:[%s1 + $0x8] sm:$0xf]
        %v283 = vld [vmem:[%s1 + $0xc] sm:$0xf]
        %v284 = vld [vmem:[%s2] sm:$0x1]
        %v286 = vperm.slane %v284, 0
        %v320 = vunpack.c.l.b16 %v248
        %v321 = vunpack.c.l.b16 %v249
        %v322 = vunpack.c.l.b16 %v250
        %v323 = vunpack.c.l.b16 %v251
        %v324 = vunpack.c.l.b16 %v252
        %v325 = vunpack.c.l.b16 %v253
        %v326 = vunpack.c.l.b16 %v254
        %v327 = vunpack.c.l.b16 %v255
        %v328 = vunpack.c.l.b16 %v256
        %v329 = vunpack.c.l.b16 %v257
        %v330 = vunpack.c.l.b16 %v258
        %v331 = vunpack.c.l.b16 %v259
        %v332 = vunpack.c.l.b16 %v260
        %v333 = vunpack.c.l.b16 %v261
        %v334 = vunpack.c.l.b16 %v262
        %v335 = vunpack.c.l.b16 %v263
        %v336 = vunpack.c.l.b16 %v264
        %v337 = vunpack.c.l.b16 %v265
        %v338 = vunpack.c.l.b16 %v266
        %v339 = vunpack.c.l.b16 %v267
        %v340 = vunpack.c.l.b16 %v268
        %v341 = vunpack.c.l.b16 %v269
        %v342 = vunpack.c.l.b16 %v270
        %v343 = vunpack.c.l.b16 %v271
        %v344 = vunpack.c.l.b16 %v272
        %v345 = vunpack.c.l.b16 %v273
        %v346 = vunpack.c.l.b16 %v274
        %v347 = vunpack.c.l.b16 %v275
        %v348 = vunpack.c.l.b16 %v276
        %v349 = vunpack.c.l.b16 %v277
        %v350 = vunpack.c.l.b16 %v278
        %v351 = vunpack.c.l.b16 %v279
        %v352 = vpack.c.b16 %v321, %v320
        %v353 = vpack.c.b16 %v323, %v322
        %v354 = vpack.c.b16 %v325, %v324
        %v355 = vpack.c.b16 %v327, %v326
        %v356 = vpack.c.b16 %v329, %v328
        %v357 = vpack.c.b16 %v331, %v330
        %v358 = vpack.c.b16 %v333, %v332
        %v359 = vpack.c.b16 %v335, %v334
        %v360 = vpack.c.b16 %v337, %v336
        %v361 = vpack.c.b16 %v339, %v338
        %v362 = vpack.c.b16 %v341, %v340
        %v363 = vpack.c.b16 %v343, %v342
        %v364 = vpack.c.b16 %v345, %v344
        %v365 = vpack.c.b16 %v347, %v346
        %v366 = vpack.c.b16 %v349, %v348
        %v367 = vpack.c.b16 %v351, %v350
        %v372 = vunpack.c.l.b16 %v280
        %v373 = vunpack.c.l.b16 %v281
        %v374 = vunpack.c.l.b16 %v282
        %v375 = vunpack.c.l.b16 %v283
        %v376 = vpack.c.b16 %v373, %v372
        %v377 = vpack.c.b16 %v375, %v374
        %vm380 = vcmask 261120
        %v382 = vsel %vm380, %v352, 0
        %v385 = vsel %vm380, %v353, 0
        %v388 = vsel %vm380, %v354, 0
        %v391 = vsel %vm380, %v355, 0
        %v394 = vsel %vm380, %v356, 0
        %v397 = vsel %vm380, %v357, 0
        %v400 = vsel %vm380, %v358, 0
        %v403 = vsel %vm380, %v359, 0
        %v406 = vsel %vm380, %v360, 0
        %v409 = vsel %vm380, %v361, 0
        %v412 = vsel %vm380, %v362, 0
        %v415 = vsel %vm380, %v363, 0
        %v418 = vsel %vm380, %v364, 0
        %v421 = vsel %vm380, %v365, 0
        %v424 = vsel %vm380, %v366, 0
        %v427 = vsel %vm380, %v367, 0
        %429 = vmatpush.bf16.msra.mxu0 0
        %430 = vmatpush.bf16.msra.mxu0 0
        %431 = vmatpush.bf16.msra.mxu0 0
        %432 = vmatpush.bf16.msra.mxu0 0
        %433 = vmatpush.bf16.msra.mxu0 0
        %434 = vmatpush.bf16.msra.mxu0 0
        %435 = vmatpush.bf16.msra.mxu0 %v377
        %436 = vmatpush.bf16.msra.mxu0 %v376
        %437 = vmatmul.bf16.gmra.mxu0 %v382
        %v438 = vpop.f32.mrf.mxu0
        %v439 = vadd.f32 %v286, %v438
        %v440 = vpop.f32.mrf.mxu0
        %v441 = vadd.f32 %v286, %v440
        %442 = vmatmul.bf16.gmra.mxu0 %v385
        %v443 = vpop.f32.mrf.mxu0
        %v444 = vadd.f32 %v286, %v443
        %v445 = vpop.f32.mrf.mxu0
        %v446 = vadd.f32 %v286, %v445
        %447 = vmatmul.bf16.gmra.mxu0 %v388
        %v448 = vpop.f32.mrf.mxu0
        %v449 = vadd.f32 %v286, %v448
        %v450 = vpop.f32.mrf.mxu0
        %v451 = vadd.f32 %v286, %v450
        %452 = vmatmul.bf16.gmra.mxu0 %v391
        %v453 = vpop.f32.mrf.mxu0
        %v454 = vadd.f32 %v286, %v453
        %v455 = vpop.f32.mrf.mxu0
        %v456 = vadd.f32 %v286, %v455
        %457 = vmatmul.bf16.gmra.mxu0 %v394
        %v458 = vpop.f32.mrf.mxu0
        %v459 = vadd.f32 %v286, %v458
        %v460 = vpop.f32.mrf.mxu0
        %v461 = vadd.f32 %v286, %v460
        %462 = vmatmul.bf16.gmra.mxu0 %v397
        %v463 = vpop.f32.mrf.mxu0
        %v464 = vadd.f32 %v286, %v463
        %v465 = vpop.f32.mrf.mxu0
        %v466 = vadd.f32 %v286, %v465
        %467 = vmatmul.bf16.gmra.mxu0 %v400
        %v468 = vpop.f32.mrf.mxu0
        %v469 = vadd.f32 %v286, %v468
        %v470 = vpop.f32.mrf.mxu0
        %v471 = vadd.f32 %v286, %v470
        %472 = vmatmul.bf16.gmra.mxu0 %v403
        %v473 = vpop.f32.mrf.mxu0
        %v474 = vadd.f32 %v286, %v473
        %v475 = vpop.f32.mrf.mxu0
        %v476 = vadd.f32 %v286, %v475
        %477 = vmatmul.bf16.gmra.mxu0 %v406
        %v478 = vpop.f32.mrf.mxu0
        %v479 = vadd.f32 %v286, %v478
        %v480 = vpop.f32.mrf.mxu0
        %v481 = vadd.f32 %v286, %v480
        %482 = vmatmul.bf16.gmra.mxu0 %v409
        %v483 = vpop.f32.mrf.mxu0
        %v484 = vadd.f32 %v286, %v483
        %v485 = vpop.f32.mrf.mxu0
        %v486 = vadd.f32 %v286, %v485
        %487 = vmatmul.bf16.gmra.mxu0 %v412
        %v488 = vpop.f32.mrf.mxu0
        %v489 = vadd.f32 %v286, %v488
        %v490 = vpop.f32.mrf.mxu0
        %v491 = vadd.f32 %v286, %v490
        %492 = vmatmul.bf16.gmra.mxu0 %v415
        %v493 = vpop.f32.mrf.mxu0
        %v494 = vadd.f32 %v286, %v493
        %v495 = vpop.f32.mrf.mxu0
        %v496 = vadd.f32 %v286, %v495
        %497 = vmatmul.bf16.gmra.mxu0 %v418
        %v498 = vpop.f32.mrf.mxu0
        %v499 = vadd.f32 %v286, %v498
        %v500 = vpop.f32.mrf.mxu0
        %v501 = vadd.f32 %v286, %v500
        %502 = vmatmul.bf16.gmra.mxu0 %v421
        %v503 = vpop.f32.mrf.mxu0
        %v504 = vadd.f32 %v286, %v503
        %v505 = vpop.f32.mrf.mxu0
        %v506 = vadd.f32 %v286, %v505
        %507 = vmatmul.bf16.gmra.mxu0 %v424
        %v508 = vpop.f32.mrf.mxu0
        %v509 = vadd.f32 %v286, %v508
        %v510 = vpop.f32.mrf.mxu0
        %v511 = vadd.f32 %v286, %v510
        %512 = vmatmul.bf16.gmra.mxu0 %v427
        %v513 = vpop.f32.mrf.mxu0
        %v514 = vadd.f32 %v286, %v513
        %v515 = vpop.f32.mrf.mxu0
        %v516 = vadd.f32 %v286, %v515
        %517 = vdwg.mxu0
        %v518 = vmax.f32 %v439, 0.0
        %v519 = vmax.f32 %v441, 0.0
        %v520 = vmax.f32 %v444, 0.0
        %v521 = vmax.f32 %v446, 0.0
        %v522 = vmax.f32 %v449, 0.0
        %v523 = vmax.f32 %v451, 0.0
        %v524 = vmax.f32 %v454, 0.0
        %v525 = vmax.f32 %v456, 0.0
        %v526 = vmax.f32 %v459, 0.0
        %v527 = vmax.f32 %v461, 0.0
        %v528 = vmax.f32 %v464, 0.0
        %v529 = vmax.f32 %v466, 0.0
        %v530 = vmax.f32 %v469, 0.0
        %v531 = vmax.f32 %v471, 0.0
        %v532 = vmax.f32 %v474, 0.0
        %v533 = vmax.f32 %v476, 0.0
        %v534 = vmax.f32 %v479, 0.0
        %v535 = vmax.f32 %v481, 0.0
        %v536 = vmax.f32 %v484, 0.0
        %v537 = vmax.f32 %v486, 0.0
        %v538 = vmax.f32 %v489, 0.0
        %v539 = vmax.f32 %v491, 0.0
        %v540 = vmax.f32 %v494, 0.0
        %v541 = vmax.f32 %v496, 0.0
        %v542 = vmax.f32 %v499, 0.0
        %v543 = vmax.f32 %v501, 0.0
        %v544 = vmax.f32 %v504, 0.0
        %v545 = vmax.f32 %v506, 0.0
        %v546 = vmax.f32 %v509, 0.0
        %v547 = vmax.f32 %v511, 0.0
        %v548 = vmax.f32 %v514, 0.0
        %v549 = vmax.f32 %v516, 0.0
        %vm550 = vcmask 60416
        %551 = vst.msk [vmem:[#allocation2] sm:$0xf] %vm550, 0
        %552 = vst.msk [vmem:[#allocation2 + $0x4] sm:$0xf] %vm550, 0
        %vm553 = vcmask 57344
        %554 = vst.msk [vmem:[#allocation2 + $0x8] sm:$0x1] %vm553, 0
        %555 = vst.msk [vmem:[#allocation2 + $0xc] sm:$0xf] %vm550, 0
        %556 = vst.msk [vmem:[#allocation2 + $0x10] sm:$0xf] %vm550, 0
        %557 = vst.msk [vmem:[#allocation2 + $0x14] sm:$0x1] %vm553, 0
        %558 = vst.msk [vmem:[#allocation2 + $0x18] sm:$0xf] %vm550, 0
        %559 = vst.msk [vmem:[#allocation2 + $0x1c] sm:$0xf] %vm550, 0
        %560 = vst.msk [vmem:[#allocation2 + $0x20] sm:$0x1] %vm553, 0
        %561 = vst.msk [vmem:[#allocation2 + $0x24] sm:$0xf] %vm550, 0
        %562 = vst.msk [vmem:[#allocation2 + $0x28] sm:$0xf] %vm550, 0
        %563 = vst.msk [vmem:[#allocation2 + $0x2c] sm:$0x1] %vm553, 0
        %564 = vst.msk [vmem:[#allocation2 + $0x30] sm:$0xf] %vm550, 0
        %565 = vst.msk [vmem:[#allocation2 + $0x34] sm:$0xf] %vm550, 0
        %566 = vst.msk [vmem:[#allocation2 + $0x38] sm:$0x1] %vm553, 0
        %567 = vst.msk [vmem:[#allocation2 + $0x3c] sm:$0xf] %vm550, 0
        %568 = vst.msk [vmem:[#allocation2 + $0x40] sm:$0xf] %vm550, 0
        %569 = vst.msk [vmem:[#allocation2 + $0x44] sm:$0x1] %vm553, 0
        %570 = vst.msk [vmem:[#allocation2 + $0x48] sm:$0xf] %vm550, 0
        %571 = vst.msk [vmem:[#allocation2 + $0x4c] sm:$0xf] %vm550, 0
        %572 = vst.msk [vmem:[#allocation2 + $0x50] sm:$0x1] %vm553, 0
        %573 = vst.msk [vmem:[#allocation2 + $0x54] sm:$0xf] %vm550, 0
        %574 = vst.msk [vmem:[#allocation2 + $0x58] sm:$0xf] %vm550, 0
        %575 = vst.msk [vmem:[#allocation2 + $0x5c] sm:$0x1] %vm553, 0
        %576 = vst.msk [vmem:[#allocation2 + $0x60] sm:$0xf] %vm550, 0
        %577 = vst.msk [vmem:[#allocation2 + $0x64] sm:$0xf] %vm550, 0
        %578 = vst.msk [vmem:[#allocation2 + $0x68] sm:$0x1] %vm553, 0
        %579 = vst.msk [vmem:[#allocation2 + $0x6c] sm:$0xf] %vm550, 0
        %580 = vst.msk [vmem:[#allocation2 + $0x70] sm:$0xf] %vm550, 0
        %581 = vst.msk [vmem:[#allocation2 + $0x74] sm:$0x1] %vm553, 0
        %582 = vst.msk [vmem:[#allocation2 + $0x78] sm:$0xf] %vm550, 0
        %583 = vst.msk [vmem:[#allocation2 + $0x7c] sm:$0xf] %vm550, 0
        %584 = vst.msk [vmem:[#allocation2 + $0x80] sm:$0x1] %vm553, 0
        %585 = vst.msk [vmem:[#allocation2 + $0x84] sm:$0xf] %vm550, 0
        %586 = vst.msk [vmem:[#allocation2 + $0x88] sm:$0xf] %vm550, 0
        %587 = vst.msk [vmem:[#allocation2 + $0x8c] sm:$0x1] %vm553, 0
        %588 = vst.msk [vmem:[#allocation2 + $0x90] sm:$0xf] %vm550, 0
        %589 = vst.msk [vmem:[#allocation2 + $0x94] sm:$0xf] %vm550, 0
        %590 = vst.msk [vmem:[#allocation2 + $0x98] sm:$0x1] %vm553, 0
        %591 = vst.msk [vmem:[#allocation2 + $0x9c] sm:$0xf] %vm550, 0
        %592 = vst.msk [vmem:[#allocation2 + $0xa0] sm:$0xf] %vm550, 0
        %593 = vst.msk [vmem:[#allocation2 + $0xa4] sm:$0x1] %vm553, 0
        %594 = vst.msk [vmem:[#allocation2 + $0xa8] sm:$0xf] %vm550, 0
        %595 = vst.msk [vmem:[#allocation2 + $0xac] sm:$0xf] %vm550, 0
        %596 = vst.msk [vmem:[#allocation2 + $0xb0] sm:$0x1] %vm553, 0
        %597 = vst.msk [vmem:[#allocation2 + $0xb4] sm:$0xf] %vm550, 0
        %598 = vst.msk [vmem:[#allocation2 + $0xb8] sm:$0xf] %vm550, 0
        %599 = vst.msk [vmem:[#allocation2 + $0xbc] sm:$0x1] %vm553, 0
        %600 = vst.msk [vmem:[#allocation2 + $0xc0] sm:$0xf] %vm550, 0
        %601 = vst.msk [vmem:[#allocation2 + $0xc4] sm:$0xf] %vm550, 0
        %602 = vst.msk [vmem:[#allocation2 + $0xc8] sm:$0x1] %vm553, 0
        %603 = vst.msk [vmem:[#allocation2 + $0xcc] sm:$0xf] %vm550, 0
        %604 = vst.msk [vmem:[#allocation2 + $0xd0] sm:$0xf] %vm550, 0
        %605 = vst.msk [vmem:[#allocation2 + $0xd4] sm:$0x1] %vm553, 0
        %v606 = vpack.c.bf16 %v518, %v518
        %v607 = vpack.c.bf16 %v519, %v519
        %v608 = vpack.c.bf16 %v520, %v520
        %v609 = vpack.c.bf16 %v521, %v521
        %v610 = vpack.c.bf16 %v522, %v522
        %v611 = vpack.c.bf16 %v523, %v523
        %v612 = vpack.c.bf16 %v524, %v524
        %v613 = vpack.c.bf16 %v525, %v525
        %v614 = vpack.c.bf16 %v526, %v526
        %v615 = vpack.c.bf16 %v527, %v527
        %v616 = vpack.c.bf16 %v528, %v528
        %v617 = vpack.c.bf16 %v529, %v529
        %v618 = vpack.c.bf16 %v530, %v530
        %v619 = vpack.c.bf16 %v531, %v531
        %v620 = vpack.c.bf16 %v532, %v532
        %v621 = vpack.c.bf16 %v533, %v533
        %v622 = vpack.c.bf16 %v534, %v534
        %v623 = vpack.c.bf16 %v535, %v535
        %v624 = vpack.c.bf16 %v536, %v536
        %v625 = vpack.c.bf16 %v537, %v537
        %v626 = vpack.c.bf16 %v538, %v538
        %v627 = vpack.c.bf16 %v539, %v539
        %v628 = vpack.c.bf16 %v540, %v540
        %v629 = vpack.c.bf16 %v541, %v541
        %v630 = vpack.c.bf16 %v542, %v542
        %v631 = vpack.c.bf16 %v543, %v543
        %v632 = vpack.c.bf16 %v544, %v544
        %v633 = vpack.c.bf16 %v545, %v545
        %v634 = vpack.c.bf16 %v546, %v546
        %v635 = vpack.c.bf16 %v547, %v547
        %v636 = vpack.c.bf16 %v548, %v548
        %v637 = vpack.c.bf16 %v549, %v549
        %vm638 = vsmask.f32 256
        %vm639 = vsmask.f32 4368
        %vm640 = vmor %vm638, %vm639
        %v642 = vshrl.u32 %v606, 16
        %v644 = vrot.slane %v642, 7
        %v645 = vshll.u32 %v606, 16
        %v647 = vor.u32 %v644, %v645
        %v648 = vrot.slane %v644, 4
        %v650 = vshrl.u32 %v607, 16
        %v652 = vrot.slane %v650, 7
        %v653 = vshll.u32 %v607, 16
        %v655 = vor.u32 %v652, %v653
        %v656 = vsel %vm640, %v648, %v655
        %v657 = vrot.slane %v652, 4
        %v659 = vshrl.u32 %v608, 16
        %v661 = vrot.slane %v659, 7
        %v662 = vshll.u32 %v608, 16
        %v664 = vor.u32 %v661, %v662
        %v665 = vrot.slane %v661, 4
        %v667 = vshrl.u32 %v609, 16
        %v669 = vrot.slane %v667, 7
        %v670 = vshll.u32 %v609, 16
        %v672 = vor.u32 %v669, %v670
        %v673 = vsel %vm640, %v665, %v672
        %v674 = vrot.slane %v669, 4
        %v676 = vshrl.u32 %v610, 16
        %v678 = vrot.slane %v676, 7
        %v679 = vshll.u32 %v610, 16
        %v681 = vor.u32 %v678, %v679
        %v682 = vrot.slane %v678, 4
        %v684 = vshrl.u32 %v611, 16
        %v686 = vrot.slane %v684, 7
        %v687 = vshll.u32 %v611, 16
        %v689 = vor.u32 %v686, %v687
        %v690 = vsel %vm640, %v682, %v689
        %v691 = vrot.slane %v686, 4
        %v693 = vshrl.u32 %v612, 16
        %v695 = vrot.slane %v693, 7
        %v696 = vshll.u32 %v612, 16
        %v698 = vor.u32 %v695, %v696
        %v699 = vrot.slane %v695, 4
        %v701 = vshrl.u32 %v613, 16
        %v703 = vrot.slane %v701, 7
        %v704 = vshll.u32 %v613, 16
        %v706 = vor.u32 %v703, %v704
        %v707 = vsel %vm640, %v699, %v706
        %v708 = vrot.slane %v703, 4
        %v710 = vshrl.u32 %v614, 16
        %v712 = vrot.slane %v710, 7
        %v713 = vshll.u32 %v614, 16
        %v715 = vor.u32 %v712, %v713
        %v716 = vrot.slane %v712, 4
        %v718 = vshrl.u32 %v615, 16
        %v720 = vrot.slane %v718, 7
        %v721 = vshll.u32 %v615, 16
        %v723 = vor.u32 %v720, %v721
        %v724 = vsel %vm640, %v716, %v723
        %v725 = vrot.slane %v720, 4
        %v727 = vshrl.u32 %v616, 16
        %v729 = vrot.slane %v727, 7
        %v730 = vshll.u32 %v616, 16
        %v732 = vor.u32 %v729, %v730
        %v733 = vrot.slane %v729, 4
        %v735 = vshrl.u32 %v617, 16
        %v737 = vrot.slane %v735, 7
        %v738 = vshll.u32 %v617, 16
        %v740 = vor.u32 %v737, %v738
        %v741 = vsel %vm640, %v733, %v740
        %v742 = vrot.slane %v737, 4
        %v744 = vshrl.u32 %v618, 16
        %v746 = vrot.slane %v744, 7
        %v747 = vshll.u32 %v618, 16
        %v749 = vor.u32 %v746, %v747
        %v750 = vrot.slane %v746, 4
        %v752 = vshrl.u32 %v619, 16
        %v754 = vrot.slane %v752, 7
        %v755 = vshll.u32 %v619, 16
        %v757 = vor.u32 %v754, %v755
        %v758 = vsel %vm640, %v750, %v757
        %v759 = vrot.slane %v754, 4
        %v761 = vshrl.u32 %v620, 16
        %v763 = vrot.slane %v761, 7
        %v764 = vshll.u32 %v620, 16
        %v766 = vor.u32 %v763, %v764
        %v767 = vrot.slane %v763, 4
        %v769 = vshrl.u32 %v621, 16
        %v771 = vrot.slane %v769, 7
        %v772 = vshll.u32 %v621, 16
        %v774 = vor.u32 %v771, %v772
        %v775 = vsel %vm640, %v767, %v774
        %v776 = vrot.slane %v771, 4
        %v778 = vshrl.u32 %v622, 16
        %v780 = vrot.slane %v778, 7
        %v781 = vshll.u32 %v622, 16
        %v783 = vor.u32 %v780, %v781
        %v784 = vrot.slane %v780, 4
        %v786 = vshrl.u32 %v623, 16
        %v788 = vrot.slane %v786, 7
        %v789 = vshll.u32 %v623, 16
        %v791 = vor.u32 %v788, %v789
        %v792 = vsel %vm640, %v784, %v791
        %v793 = vrot.slane %v788, 4
        %v795 = vshrl.u32 %v624, 16
        %v797 = vrot.slane %v795, 7
        %v798 = vshll.u32 %v624, 16
        %v800 = vor.u32 %v797, %v798
        %v801 = vrot.slane %v797, 4
        %v803 = vshrl.u32 %v625, 16
        %v805 = vrot.slane %v803, 7
        %v806 = vshll.u32 %v625, 16
        %v808 = vor.u32 %v805, %v806
        %v809 = vsel %vm640, %v801, %v808
        %v810 = vrot.slane %v805, 4
        %v812 = vshrl.u32 %v626, 16
        %v814 = vrot.slane %v812, 7
        %v815 = vshll.u32 %v626, 16
        %v817 = vor.u32 %v814, %v815
        %v818 = vrot.slane %v814, 4
        %v820 = vshrl.u32 %v627, 16
        %v822 = vrot.slane %v820, 7
        %v823 = vshll.u32 %v627, 16
        %v825 = vor.u32 %v822, %v823
        %v826 = vsel %vm640, %v818, %v825
        %v827 = vrot.slane %v822, 4
        %v829 = vshrl.u32 %v628, 16
        %v831 = vrot.slane %v829, 7
        %v832 = vshll.u32 %v628, 16
        %v834 = vor.u32 %v831, %v832
        %v835 = vrot.slane %v831, 4
        %v837 = vshrl.u32 %v629, 16
        %v839 = vrot.slane %v837, 7
        %v840 = vshll.u32 %v629, 16
        %v842 = vor.u32 %v839, %v840
        %v843 = vsel %vm640, %v835, %v842
        %v844 = vrot.slane %v839, 4
        %v846 = vshrl.u32 %v630, 16
        %v848 = vrot.slane %v846, 7
        %v849 = vshll.u32 %v630, 16
        %v851 = vor.u32 %v848, %v849
        %v852 = vrot.slane %v848, 4
        %v854 = vshrl.u32 %v631, 16
        %v856 = vrot.slane %v854, 7
        %v857 = vshll.u32 %v631, 16
        %v859 = vor.u32 %v856, %v857
        %v860 = vsel %vm640, %v852, %v859
        %v861 = vrot.slane %v856, 4
        %v863 = vshrl.u32 %v632, 16
        %v865 = vrot.slane %v863, 7
        %v866 = vshll.u32 %v632, 16
        %v868 = vor.u32 %v865, %v866
        %v869 = vrot.slane %v865, 4
        %v871 = vshrl.u32 %v633, 16
        %v873 = vrot.slane %v871, 7
        %v874 = vshll.u32 %v633, 16
        %v876 = vor.u32 %v873, %v874
        %v877 = vsel %vm640, %v869, %v876
        %v878 = vrot.slane %v873, 4
        %v880 = vshrl.u32 %v634, 16
        %v882 = vrot.slane %v880, 7
        %v883 = vshll.u32 %v634, 16
        %v885 = vor.u32 %v882, %v883
        %v886 = vrot.slane %v882, 4
        %v888 = vshrl.u32 %v635, 16
        %v890 = vrot.slane %v888, 7
        %v891 = vshll.u32 %v635, 16
        %v893 = vor.u32 %v890, %v891
        %v894 = vsel %vm640, %v886, %v893
        %v895 = vrot.slane %v890, 4
        %v897 = vshrl.u32 %v636, 16
        %v899 = vrot.slane %v897, 7
        %v900 = vshll.u32 %v636, 16
        %v902 = vor.u32 %v899, %v900
        %v903 = vrot.slane %v899, 4
        %v905 = vshrl.u32 %v637, 16
        %v907 = vrot.slane %v905, 7
        %v908 = vshll.u32 %v637, 16
        %v910 = vor.u32 %v907, %v908
        %v911 = vsel %vm640, %v903, %v910
        %v912 = vrot.slane %v907, 4
        %s961 = scalar_lea.vmem [#allocation2], 12
        %vm962 = vcmask 60416
        %vm963 = vsmask.f32 7938
        %vm964 = vmand %vm962, %vm963
        %v965 = vld [vmem:[%s961] sm:$0xf]
        %v966 = vsel %vm964, %v647, %v965
        %967 = vst [vmem:[%s961] sm:$0xf] %v966
        %968 = vst.msk [vmem:[%s961 + $0x4] sm:$0xf] %vm550, %v656
        %vm969 = vcmask 57344
        %vm970 = vmand %vm969, %vm638
        %v971 = vld [vmem:[%s961 + $0x8] sm:$0x1]
        %v972 = vsel %vm970, %v657, %v971
        %973 = vst [vmem:[%s961 + $0x8] sm:$0x1] %v972
        %v974 = vld [vmem:[%s961 + $0xc] sm:$0xf]
        %v975 = vsel %vm964, %v664, %v974
        %976 = vst [vmem:[%s961 + $0xc] sm:$0xf] %v975
        %977 = vst.msk [vmem:[%s961 + $0x10] sm:$0xf] %vm550, %v673
        %v978 = vld [vmem:[%s961 + $0x14] sm:$0x1]
        %v979 = vsel %vm970, %v674, %v978
        %980 = vst [vmem:[%s961 + $0x14] sm:$0x1] %v979
        %v981 = vld [vmem:[%s961 + $0x18] sm:$0xf]
        %v982 = vsel %vm964, %v681, %v981
        %983 = vst [vmem:[%s961 + $0x18] sm:$0xf] %v982
        %984 = vst.msk [vmem:[%s961 + $0x1c] sm:$0xf] %vm550, %v690
        %v985 = vld [vmem:[%s961 + $0x20] sm:$0x1]
        %v986 = vsel %vm970, %v691, %v985
        %987 = vst [vmem:[%s961 + $0x20] sm:$0x1] %v986
        %v988 = vld [vmem:[%s961 + $0x24] sm:$0xf]
        %v989 = vsel %vm964, %v698, %v988
        %990 = vst [vmem:[%s961 + $0x24] sm:$0xf] %v989
        %991 = vst.msk [vmem:[%s961 + $0x28] sm:$0xf] %vm550, %v707
        %v992 = vld [vmem:[%s961 + $0x2c] sm:$0x1]
        %v993 = vsel %vm970, %v708, %v992
        %994 = vst [vmem:[%s961 + $0x2c] sm:$0x1] %v993
        %v995 = vld [vmem:[%s961 + $0x30] sm:$0xf]
        %v996 = vsel %vm964, %v715, %v995
        %997 = vst [vmem:[%s961 + $0x30] sm:$0xf] %v996
        %998 = vst.msk [vmem:[%s961 + $0x34] sm:$0xf] %vm550, %v724
        %v999 = vld [vmem:[%s961 + $0x38] sm:$0x1]
        %v1000 = vsel %vm970, %v725, %v999
        %1001 = vst [vmem:[%s961 + $0x38] sm:$0x1] %v1000
        %v1002 = vld [vmem:[%s961 + $0x3c] sm:$0xf]
        %v1003 = vsel %vm964, %v732, %v1002
        %1004 = vst [vmem:[%s961 + $0x3c] sm:$0xf] %v1003
        %1005 = vst.msk [vmem:[%s961 + $0x40] sm:$0xf] %vm550, %v741
        %v1006 = vld [vmem:[%s961 + $0x44] sm:$0x1]
        %v1007 = vsel %vm970, %v742, %v1006
        %1008 = vst [vmem:[%s961 + $0x44] sm:$0x1] %v1007
        %v1009 = vld [vmem:[%s961 + $0x48] sm:$0xf]
        %v1010 = vsel %vm964, %v749, %v1009
        %1011 = vst [vmem:[%s961 + $0x48] sm:$0xf] %v1010
        %1012 = vst.msk [vmem:[%s961 + $0x4c] sm:$0xf] %vm550, %v758
        %v1013 = vld [vmem:[%s961 + $0x50] sm:$0x1]
        %v1014 = vsel %vm970, %v759, %v1013
        %1015 = vst [vmem:[%s961 + $0x50] sm:$0x1] %v1014
        %v1016 = vld [vmem:[%s961 + $0x54] sm:$0xf]
        %v1017 = vsel %vm964, %v766, %v1016
        %1018 = vst [vmem:[%s961 + $0x54] sm:$0xf] %v1017
        %1019 = vst.msk [vmem:[%s961 + $0x58] sm:$0xf] %vm550, %v775
        %v1020 = vld [vmem:[%s961 + $0x5c] sm:$0x1]
        %v1021 = vsel %vm970, %v776, %v1020
        %1022 = vst [vmem:[%s961 + $0x5c] sm:$0x1] %v1021
        %v1023 = vld [vmem:[%s961 + $0x60] sm:$0xf]
        %v1024 = vsel %vm964, %v783, %v1023
        %1025 = vst [vmem:[%s961 + $0x60] sm:$0xf] %v1024
        %1026 = vst.msk [vmem:[%s961 + $0x64] sm:$0xf] %vm550, %v792
        %v1027 = vld [vmem:[%s961 + $0x68] sm:$0x1]
        %v1028 = vsel %vm970, %v793, %v1027
        %1029 = vst [vmem:[%s961 + $0x68] sm:$0x1] %v1028
        %v1030 = vld [vmem:[%s961 + $0x6c] sm:$0xf]
        %v1031 = vsel %vm964, %v800, %v1030
        %1032 = vst [vmem:[%s961 + $0x6c] sm:$0xf] %v1031
        %1033 = vst.msk [vmem:[%s961 + $0x70] sm:$0xf] %vm550, %v809
        %v1034 = vld [vmem:[%s961 + $0x74] sm:$0x1]
        %v1035 = vsel %vm970, %v810, %v1034
        %1036 = vst [vmem:[%s961 + $0x74] sm:$0x1] %v1035
        %v1037 = vld [vmem:[%s961 + $0x78] sm:$0xf]
        %v1038 = vsel %vm964, %v817, %v1037
        %1039 = vst [vmem:[%s961 + $0x78] sm:$0xf] %v1038
        %1040 = vst.msk [vmem:[%s961 + $0x7c] sm:$0xf] %vm550, %v826
        %v1041 = vld [vmem:[%s961 + $0x80] sm:$0x1]
        %v1042 = vsel %vm970, %v827, %v1041
        %1043 = vst [vmem:[%s961 + $0x80] sm:$0x1] %v1042
        %v1044 = vld [vmem:[%s961 + $0x84] sm:$0xf]
        %v1045 = vsel %vm964, %v834, %v1044
        %1046 = vst [vmem:[%s961 + $0x84] sm:$0xf] %v1045
        %1047 = vst.msk [vmem:[%s961 + $0x88] sm:$0xf] %vm550, %v843
        %v1048 = vld [vmem:[%s961 + $0x8c] sm:$0x1]
        %v1049 = vsel %vm970, %v844, %v1048
        %1050 = vst [vmem:[%s961 + $0x8c] sm:$0x1] %v1049
        %v1051 = vld [vmem:[%s961 + $0x90] sm:$0xf]
        %v1052 = vsel %vm964, %v851, %v1051
        %1053 = vst [vmem:[%s961 + $0x90] sm:$0xf] %v1052
        %1054 = vst.msk [vmem:[%s961 + $0x94] sm:$0xf] %vm550, %v860
        %v1055 = vld [vmem:[%s961 + $0x98] sm:$0x1]
        %v1056 = vsel %vm970, %v861, %v1055
        %1057 = vst [vmem:[%s961 + $0x98] sm:$0x1] %v1056
        %v1058 = vld [vmem:[%s961 + $0x9c] sm:$0xf]
        %v1059 = vsel %vm964, %v868, %v1058
        %1060 = vst [vmem:[%s961 + $0x9c] sm:$0xf] %v1059
        %1061 = vst.msk [vmem:[%s961 + $0xa0] sm:$0xf] %vm550, %v877
        %v1062 = vld [vmem:[%s961 + $0xa4] sm:$0x1]
        %v1063 = vsel %vm970, %v878, %v1062
        %1064 = vst [vmem:[%s961 + $0xa4] sm:$0x1] %v1063
        %v1065 = vld [vmem:[%s961 + $0xa8] sm:$0xf]
        %v1066 = vsel %vm964, %v885, %v1065
        %1067 = vst [vmem:[%s961 + $0xa8] sm:$0xf] %v1066
        %1068 = vst.msk [vmem:[%s961 + $0xac] sm:$0xf] %vm550, %v894
        %v1069 = vld [vmem:[%s961 + $0xb0] sm:$0x1]
        %v1070 = vsel %vm970, %v895, %v1069
        %1071 = vst [vmem:[%s961 + $0xb0] sm:$0x1] %v1070
        %v1072 = vld [vmem:[%s961 + $0xb4] sm:$0xf]
        %v1073 = vsel %vm964, %v902, %v1072
        %1074 = vst [vmem:[%s961 + $0xb4] sm:$0xf] %v1073
        %1075 = vst.msk [vmem:[%s961 + $0xb8] sm:$0xf] %vm550, %v911
        %v1076 = vld [vmem:[%s961 + $0xbc] sm:$0x1]
        %v1077 = vsel %vm970, %v912, %v1076
        %1078 = vst [vmem:[%s961 + $0xbc] sm:$0x1] %v1077
        %v1079 = vld [vmem:[#allocation2] sm:$0xf]
        %v1080 = vld [vmem:[#allocation2 + $0x4] sm:$0xf]
        %v1081 = vld [vmem:[#allocation2 + $0xc] sm:$0xf]
        %v1082 = vld [vmem:[#allocation2 + $0x10] sm:$0xf]
        %v1083 = vld [vmem:[#allocation2 + $0x18] sm:$0xf]
        %v1084 = vld [vmem:[#allocation2 + $0x1c] sm:$0xf]
        %v1085 = vld [vmem:[#allocation2 + $0x24] sm:$0xf]
        %v1086 = vld [vmem:[#allocation2 + $0x28] sm:$0xf]
        %v1087 = vld [vmem:[#allocation2 + $0x30] sm:$0xf]
        %v1088 = vld [vmem:[#allocation2 + $0x34] sm:$0xf]
        %v1089 = vld [vmem:[#allocation2 + $0x3c] sm:$0xf]
        %v1090 = vld [vmem:[#allocation2 + $0x40] sm:$0xf]
        %v1091 = vld [vmem:[#allocation2 + $0x48] sm:$0xf]
        %v1092 = vld [vmem:[#allocation2 + $0x4c] sm:$0xf]
        %v1093 = vld [vmem:[#allocation2 + $0x54] sm:$0xf]
        %v1094 = vld [vmem:[#allocation2 + $0x58] sm:$0xf]
        %v1095 = vld [vmem:[#allocation2 + $0x60] sm:$0xf]
        %v1096 = vld [vmem:[#allocation2 + $0x64] sm:$0xf]
        %v1097 = vld [vmem:[#allocation2 + $0x6c] sm:$0xf]
        %v1098 = vld [vmem:[#allocation2 + $0x70] sm:$0xf]
        %v1099 = vld [vmem:[#allocation2 + $0x78] sm:$0xf]
        %v1100 = vld [vmem:[#allocation2 + $0x7c] sm:$0xf]
        %v1101 = vld [vmem:[#allocation2 + $0x84] sm:$0xf]
        %v1102 = vld [vmem:[#allocation2 + $0x88] sm:$0xf]
        %v1103 = vld [vmem:[#allocation2 + $0x90] sm:$0xf]
        %v1104 = vld [vmem:[#allocation2 + $0x94] sm:$0xf]
        %v1105 = vld [vmem:[#allocation2 + $0x9c] sm:$0xf]
        %v1106 = vld [vmem:[#allocation2 + $0xa0] sm:$0xf]
        %v1107 = vld [vmem:[#allocation2 + $0xa8] sm:$0xf]
        %v1108 = vld [vmem:[#allocation2 + $0xac] sm:$0xf]
        %v1109 = vld [vmem:[#allocation2 + $0xb4] sm:$0xf]
        %v1110 = vld [vmem:[#allocation2 + $0xb8] sm:$0xf]
        %v1111 = vld [vmem:[%s3] sm:$0xf]
        %v1112 = vld [vmem:[#allocation2 + $0x8] sm:$0x1]
        %v1113 = vld [vmem:[#allocation2 + $0x14] sm:$0x1]
        %v1114 = vld [vmem:[#allocation2 + $0x20] sm:$0x1]
        %v1115 = vld [vmem:[#allocation2 + $0x2c] sm:$0x1]
        %v1116 = vld [vmem:[#allocation2 + $0x38] sm:$0x1]
        %v1117 = vld [vmem:[#allocation2 + $0x44] sm:$0x1]
        %v1118 = vld [vmem:[#allocation2 + $0x50] sm:$0x1]
        %v1119 = vld [vmem:[#allocation2 + $0x5c] sm:$0x1]
        %v1120 = vld [vmem:[#allocation2 + $0x68] sm:$0x1]
        %v1121 = vld [vmem:[#allocation2 + $0x74] sm:$0x1]
        %v1122 = vld [vmem:[#allocation2 + $0x80] sm:$0x1]
        %v1123 = vld [vmem:[#allocation2 + $0x8c] sm:$0x1]
        %v1124 = vld [vmem:[#allocation2 + $0x98] sm:$0x1]
        %v1125 = vld [vmem:[#allocation2 + $0xa4] sm:$0x1]
        %v1126 = vld [vmem:[#allocation2 + $0xb0] sm:$0x1]
        %v1127 = vld [vmem:[#allocation2 + $0xbc] sm:$0x1]
        %vm1128 = vsmask.f32 3328
        %vm1129 = vsmask.f32 7440
        %vm1130 = vmor %vm1128, %vm1129
        %v1132 = vshrl.u32 %v1079, 16
        %v1134 = vrot.slane %v1132, 4
        %v1135 = vshll.u32 %v1079, 16
        %v1137 = vrot.slane %v1135, 5
        %v1138 = vor.u32 %v1134, %v1137
        %v1139 = vrot.slane %v1138, 4
        %v1141 = vshll.u32 %v1080, 16
        %v1143 = vrot.slane %v1141, 5
        %v1144 = vsel %vm1130, %v1139, %v1143
        %v1145 = vshrl.u32 %v1080, 16
        %v1147 = vrot.slane %v1145, 4
        %v1148 = vor.u32 %v1147, %v1143
        %v1149 = vrot.slane %v1148, 4
        %v1151 = vshll.u32 %v1112, 16
        %v1153 = vrot.slane %v1151, 5
        %v1154 = vsel %vm1130, %v1149, %v1153
        %v1156 = vshrl.u32 %v1081, 16
        %v1158 = vrot.slane %v1156, 4
        %v1159 = vshll.u32 %v1081, 16
        %v1161 = vrot.slane %v1159, 5
        %v1162 = vor.u32 %v1158, %v1161
        %v1163 = vrot.slane %v1162, 4
        %v1165 = vshll.u32 %v1082, 16
        %v1167 = vrot.slane %v1165, 5
        %v1168 = vsel %vm1130, %v1163, %v1167
        %v1169 = vshrl.u32 %v1082, 16
        %v1171 = vrot.slane %v1169, 4
        %v1172 = vor.u32 %v1171, %v1167
        %v1173 = vrot.slane %v1172, 4
        %v1175 = vshll.u32 %v1113, 16
        %v1177 = vrot.slane %v1175, 5
        %v1178 = vsel %vm1130, %v1173, %v1177
        %v1180 = vshrl.u32 %v1083, 16
        %v1182 = vrot.slane %v1180, 4
        %v1183 = vshll.u32 %v1083, 16
        %v1185 = vrot.slane %v1183, 5
        %v1186 = vor.u32 %v1182, %v1185
        %v1187 = vrot.slane %v1186, 4
        %v1189 = vshll.u32 %v1084, 16
        %v1191 = vrot.slane %v1189, 5
        %v1192 = vsel %vm1130, %v1187, %v1191
        %v1193 = vshrl.u32 %v1084, 16
        %v1195 = vrot.slane %v1193, 4
        %v1196 = vor.u32 %v1195, %v1191
        %v1197 = vrot.slane %v1196, 4
        %v1199 = vshll.u32 %v1114, 16
        %v1201 = vrot.slane %v1199, 5
        %v1202 = vsel %vm1130, %v1197, %v1201
        %v1204 = vshrl.u32 %v1085, 16
        %v1206 = vrot.slane %v1204, 4
        %v1207 = vshll.u32 %v1085, 16
        %v1209 = vrot.slane %v1207, 5
        %v1210 = vor.u32 %v1206, %v1209
        %v1211 = vrot.slane %v1210, 4
        %v1213 = vshll.u32 %v1086, 16
        %v1215 = vrot.slane %v1213, 5
        %v1216 = vsel %vm1130, %v1211, %v1215
        %v1217 = vshrl.u32 %v1086, 16
        %v1219 = vrot.slane %v1217, 4
        %v1220 = vor.u32 %v1219, %v1215
        %v1221 = vrot.slane %v1220, 4
        %v1223 = vshll.u32 %v1115, 16
        %v1225 = vrot.slane %v1223, 5
        %v1226 = vsel %vm1130, %v1221, %v1225
        %v1228 = vshrl.u32 %v1087, 16
        %v1230 = vrot.slane %v1228, 4
        %v1231 = vshll.u32 %v1087, 16
        %v1233 = vrot.slane %v1231, 5
        %v1234 = vor.u32 %v1230, %v1233
        %v1235 = vrot.slane %v1234, 4
        %v1237 = vshll.u32 %v1088, 16
        %v1239 = vrot.slane %v1237, 5
        %v1240 = vsel %vm1130, %v1235, %v1239
        %v1241 = vshrl.u32 %v1088, 16
        %v1243 = vrot.slane %v1241, 4
        %v1244 = vor.u32 %v1243, %v1239
        %v1245 = vrot.slane %v1244, 4
        %v1247 = vshll.u32 %v1116, 16
        %v1249 = vrot.slane %v1247, 5
        %v1250 = vsel %vm1130, %v1245, %v1249
        %v1252 = vshrl.u32 %v1089, 16
        %v1254 = vrot.slane %v1252, 4
        %v1255 = vshll.u32 %v1089, 16
        %v1257 = vrot.slane %v1255, 5
        %v1258 = vor.u32 %v1254, %v1257
        %v1259 = vrot.slane %v1258, 4
        %v1261 = vshll.u32 %v1090, 16
        %v1263 = vrot.slane %v1261, 5
        %v1264 = vsel %vm1130, %v1259, %v1263
        %v1265 = vshrl.u32 %v1090, 16
        %v1267 = vrot.slane %v1265, 4
        %v1268 = vor.u32 %v1267, %v1263
        %v1269 = vrot.slane %v1268, 4
        %v1271 = vshll.u32 %v1117, 16
        %v1273 = vrot.slane %v1271, 5
        %v1274 = vsel %vm1130, %v1269, %v1273
        %v1276 = vshrl.u32 %v1091, 16
        %v1278 = vrot.slane %v1276, 4
        %v1279 = vshll.u32 %v1091, 16
        %v1281 = vrot.slane %v1279, 5
        %v1282 = vor.u32 %v1278, %v1281
        %v1283 = vrot.slane %v1282, 4
        %v1285 = vshll.u32 %v1092, 16
        %v1287 = vrot.slane %v1285, 5
        %v1288 = vsel %vm1130, %v1283, %v1287
        %v1289 = vshrl.u32 %v1092, 16
        %v1291 = vrot.slane %v1289, 4
        %v1292 = vor.u32 %v1291, %v1287
        %v1293 = vrot.slane %v1292, 4
        %v1295 = vshll.u32 %v1118, 16
        %v1297 = vrot.slane %v1295, 5
        %v1298 = vsel %vm1130, %v1293, %v1297
        %v1300 = vshrl.u32 %v1093, 16
        %v1302 = vrot.slane %v1300, 4
        %v1303 = vshll.u32 %v1093, 16
        %v1305 = vrot.slane %v1303, 5
        %v1306 = vor.u32 %v1302, %v1305
        %v1307 = vrot.slane %v1306, 4
        %v1309 = vshll.u32 %v1094, 16
        %v1311 = vrot.slane %v1309, 5
        %v1312 = vsel %vm1130, %v1307, %v1311
        %v1313 = vshrl.u32 %v1094, 16
        %v1315 = vrot.slane %v1313, 4
        %v1316 = vor.u32 %v1315, %v1311
        %v1317 = vrot.slane %v1316, 4
        %v1319 = vshll.u32 %v1119, 16
        %v1321 = vrot.slane %v1319, 5
        %v1322 = vsel %vm1130, %v1317, %v1321
        %v1324 = vshrl.u32 %v1095, 16
        %v1326 = vrot.slane %v1324, 4
        %v1327 = vshll.u32 %v1095, 16
        %v1329 = vrot.slane %v1327, 5
        %v1330 = vor.u32 %v1326, %v1329
        %v1331 = vrot.slane %v1330, 4
        %v1333 = vshll.u32 %v1096, 16
        %v1335 = vrot.slane %v1333, 5
        %v1336 = vsel %vm1130, %v1331, %v1335
        %v1337 = vshrl.u32 %v1096, 16
        %v1339 = vrot.slane %v1337, 4
        %v1340 = vor.u32 %v1339, %v1335
        %v1341 = vrot.slane %v1340, 4
        %v1343 = vshll.u32 %v1120, 16
        %v1345 = vrot.slane %v1343, 5
        %v1346 = vsel %vm1130, %v1341, %v1345
        %v1348 = vshrl.u32 %v1097, 16
        %v1350 = vrot.slane %v1348, 4
        %v1351 = vshll.u32 %v1097, 16
        %v1353 = vrot.slane %v1351, 5
        %v1354 = vor.u32 %v1350, %v1353
        %v1355 = vrot.slane %v1354, 4
        %v1357 = vshll.u32 %v1098, 16
        %v1359 = vrot.slane %v1357, 5
        %v1360 = vsel %vm1130, %v1355, %v1359
        %v1361 = vshrl.u32 %v1098, 16
        %v1363 = vrot.slane %v1361, 4
        %v1364 = vor.u32 %v1363, %v1359
        %v1365 = vrot.slane %v1364, 4
        %v1367 = vshll.u32 %v1121, 16
        %v1369 = vrot.slane %v1367, 5
        %v1370 = vsel %vm1130, %v1365, %v1369
        %v1372 = vshrl.u32 %v1099, 16
        %v1374 = vrot.slane %v1372, 4
        %v1375 = vshll.u32 %v1099, 16
        %v1377 = vrot.slane %v1375, 5
        %v1378 = vor.u32 %v1374, %v1377
        %v1379 = vrot.slane %v1378, 4
        %v1381 = vshll.u32 %v1100, 16
        %v1383 = vrot.slane %v1381, 5
        %v1384 = vsel %vm1130, %v1379, %v1383
        %v1385 = vshrl.u32 %v1100, 16
        %v1387 = vrot.slane %v1385, 4
        %v1388 = vor.u32 %v1387, %v1383
        %v1389 = vrot.slane %v1388, 4
        %v1391 = vshll.u32 %v1122, 16
        %v1393 = vrot.slane %v1391, 5
        %v1394 = vsel %vm1130, %v1389, %v1393
        %v1396 = vshrl.u32 %v1101, 16
        %v1398 = vrot.slane %v1396, 4
        %v1399 = vshll.u32 %v1101, 16
        %v1401 = vrot.slane %v1399, 5
        %v1402 = vor.u32 %v1398, %v1401
        %v1403 = vrot.slane %v1402, 4
        %v1405 = vshll.u32 %v1102, 16
        %v1407 = vrot.slane %v1405, 5
        %v1408 = vsel %vm1130, %v1403, %v1407
        %v1409 = vshrl.u32 %v1102, 16
        %v1411 = vrot.slane %v1409, 4
        %v1412 = vor.u32 %v1411, %v1407
        %v1413 = vrot.slane %v1412, 4
        %v1415 = vshll.u32 %v1123, 16
        %v1417 = vrot.slane %v1415, 5
        %v1418 = vsel %vm1130, %v1413, %v1417
        %v1420 = vshrl.u32 %v1103, 16
        %v1422 = vrot.slane %v1420, 4
        %v1423 = vshll.u32 %v1103, 16
        %v1425 = vrot.slane %v1423, 5
        %v1426 = vor.u32 %v1422, %v1425
        %v1427 = vrot.slane %v1426, 4
        %v1429 = vshll.u32 %v1104, 16
        %v1431 = vrot.slane %v1429, 5
        %v1432 = vsel %vm1130, %v1427, %v1431
        %v1433 = vshrl.u32 %v1104, 16
        %v1435 = vrot.slane %v1433, 4
        %v1436 = vor.u32 %v1435, %v1431
        %v1437 = vrot.slane %v1436, 4
        %v1439 = vshll.u32 %v1124, 16
        %v1441 = vrot.slane %v1439, 5
        %v1442 = vsel %vm1130, %v1437, %v1441
        %v1444 = vshrl.u32 %v1105, 16
        %v1446 = vrot.slane %v1444, 4
        %v1447 = vshll.u32 %v1105, 16
        %v1449 = vrot.slane %v1447, 5
        %v1450 = vor.u32 %v1446, %v1449
        %v1451 = vrot.slane %v1450, 4
        %v1453 = vshll.u32 %v1106, 16
        %v1455 = vrot.slane %v1453, 5
        %v1456 = vsel %vm1130, %v1451, %v1455
        %v1457 = vshrl.u32 %v1106, 16
        %v1459 = vrot.slane %v1457, 4
        %v1460 = vor.u32 %v1459, %v1455
        %v1461 = vrot.slane %v1460, 4
        %v1463 = vshll.u32 %v1125, 16
        %v1465 = vrot.slane %v1463, 5
        %v1466 = vsel %vm1130, %v1461, %v1465
        %v1468 = vshrl.u32 %v1107, 16
        %v1470 = vrot.slane %v1468, 4
        %v1471 = vshll.u32 %v1107, 16
        %v1473 = vrot.slane %v1471, 5
        %v1474 = vor.u32 %v1470, %v1473
        %v1475 = vrot.slane %v1474, 4
        %v1477 = vshll.u32 %v1108, 16
        %v1479 = vrot.slane %v1477, 5
        %v1480 = vsel %vm1130, %v1475, %v1479
        %v1481 = vshrl.u32 %v1108, 16
        %v1483 = vrot.slane %v1481, 4
        %v1484 = vor.u32 %v1483, %v1479
        %v1485 = vrot.slane %v1484, 4
        %v1487 = vshll.u32 %v1126, 16
        %v1489 = vrot.slane %v1487, 5
        %v1490 = vsel %vm1130, %v1485, %v1489
        %v1492 = vshrl.u32 %v1109, 16
        %v1494 = vrot.slane %v1492, 4
        %v1495 = vshll.u32 %v1109, 16
        %v1497 = vrot.slane %v1495, 5
        %v1498 = vor.u32 %v1494, %v1497
        %v1499 = vrot.slane %v1498, 4
        %v1501 = vshll.u32 %v1110, 16
        %v1503 = vrot.slane %v1501, 5
        %v1504 = vsel %vm1130, %v1499, %v1503
        %v1505 = vshrl.u32 %v1110, 16
        %v1507 = vrot.slane %v1505, 4
        %v1508 = vor.u32 %v1507, %v1503
        %v1509 = vrot.slane %v1508, 4
        %v1511 = vshll.u32 %v1127, 16
        %v1513 = vrot.slane %v1511, 5
        %v1514 = vsel %vm1130, %v1509, %v1513
        %s1515 = scalar_lea.vmem %s3, 4
        %v1516 = vld [vmem:[%s1515] sm:$0xf]
        %v1517 = vunpack.c.l.b16 %v1144
        %v1518 = vunpack.c.l.b16 %v1154
        %v1519 = vunpack.c.l.b16 %v1168
        %v1520 = vunpack.c.l.b16 %v1178
        %v1521 = vunpack.c.l.b16 %v1192
        %v1522 = vunpack.c.l.b16 %v1202
        %v1523 = vunpack.c.l.b16 %v1216
        %v1524 = vunpack.c.l.b16 %v1226
        %v1525 = vunpack.c.l.b16 %v1240
        %v1526 = vunpack.c.l.b16 %v1250
        %v1527 = vunpack.c.l.b16 %v1264
        %v1528 = vunpack.c.l.b16 %v1274
        %v1529 = vunpack.c.l.b16 %v1288
        %v1530 = vunpack.c.l.b16 %v1298
        %v1531 = vunpack.c.l.b16 %v1312
        %v1532 = vunpack.c.l.b16 %v1322
        %v1533 = vunpack.c.l.b16 %v1336
        %v1534 = vunpack.c.l.b16 %v1346
        %v1535 = vunpack.c.l.b16 %v1360
        %v1536 = vunpack.c.l.b16 %v1370
        %v1537 = vunpack.c.l.b16 %v1384
        %v1538 = vunpack.c.l.b16 %v1394
        %v1539 = vunpack.c.l.b16 %v1408
        %v1540 = vunpack.c.l.b16 %v1418
        %v1541 = vunpack.c.l.b16 %v1432
        %v1542 = vunpack.c.l.b16 %v1442
        %v1543 = vunpack.c.l.b16 %v1456
        %v1544 = vunpack.c.l.b16 %v1466
        %v1545 = vunpack.c.l.b16 %v1480
        %v1546 = vunpack.c.l.b16 %v1490
        %v1547 = vunpack.c.l.b16 %v1504
        %v1548 = vunpack.c.l.b16 %v1514
        %v1549 = vpack.c.b16 %v1518, %v1517
        %v1550 = vpack.c.b16 %v1520, %v1519
        %v1551 = vpack.c.b16 %v1522, %v1521
        %v1552 = vpack.c.b16 %v1524, %v1523
        %v1553 = vpack.c.b16 %v1526, %v1525
        %v1554 = vpack.c.b16 %v1528, %v1527
        %v1555 = vpack.c.b16 %v1530, %v1529
        %v1556 = vpack.c.b16 %v1532, %v1531
        %v1557 = vpack.c.b16 %v1534, %v1533
        %v1558 = vpack.c.b16 %v1536, %v1535
        %v1559 = vpack.c.b16 %v1538, %v1537
        %v1560 = vpack.c.b16 %v1540, %v1539
        %v1561 = vpack.c.b16 %v1542, %v1541
        %v1562 = vpack.c.b16 %v1544, %v1543
        %v1563 = vpack.c.b16 %v1546, %v1545
        %v1564 = vpack.c.b16 %v1548, %v1547
        %vm1565 = vcmask 64512
        %v1567 = vsel %vm1565, %v1549, 0
        %v1570 = vsel %vm1565, %v1550, 0
        %v1573 = vsel %vm1565, %v1551, 0
        %v1576 = vsel %vm1565, %v1552, 0
        %v1579 = vsel %vm1565, %v1553, 0
        %v1582 = vsel %vm1565, %v1554, 0
        %v1585 = vsel %vm1565, %v1555, 0
        %v1588 = vsel %vm1565, %v1556, 0
        %v1591 = vsel %vm1565, %v1557, 0
        %v1594 = vsel %vm1565, %v1558, 0
        %v1597 = vsel %vm1565, %v1559, 0
        %v1600 = vsel %vm1565, %v1560, 0
        %v1603 = vsel %vm1565, %v1561, 0
        %v1606 = vsel %vm1565, %v1562, 0
        %v1609 = vsel %vm1565, %v1563, 0
        %v1612 = vsel %vm1565, %v1564, 0
        %vm1614 = vcmask 1043456
        %v1616 = vsel %vm1614, %v1516, 0
        %1618 = vmatpush.bf16.msra.mxu0 0
        %1619 = vmatpush.bf16.msra.mxu0 0
        %1620 = vmatpush.bf16.msra.mxu0 0
        %1621 = vmatpush.bf16.msra.mxu0 0
        %1622 = vmatpush.bf16.msra.mxu0 0
        %1623 = vmatpush.bf16.msra.mxu0 0
        %1624 = vmatpush.bf16.msra.mxu0 0
        %1625 = vmatpush.bf16.msra.mxu0 %v1616
        %1626 = vmatmul.bf16.gmra.mxu0 %v1567
        %v1627 = vpop.f32.mrf.mxu0
        %v1628 = vadd.f32 0.0, %v1627
        %v1629 = vpop.f32.mrf.mxu0
        %v1630 = vadd.f32 0.0, %v1629
        %1631 = vmatmul.bf16.gmra.mxu0 %v1570
        %v1632 = vpop.f32.mrf.mxu0
        %v1633 = vadd.f32 0.0, %v1632
        %v1634 = vpop.f32.mrf.mxu0
        %v1635 = vadd.f32 0.0, %v1634
        %1636 = vmatmul.bf16.gmra.mxu0 %v1573
        %v1637 = vpop.f32.mrf.mxu0
        %v1638 = vadd.f32 0.0, %v1637
        %v1639 = vpop.f32.mrf.mxu0
        %v1640 = vadd.f32 0.0, %v1639
        %1641 = vmatmul.bf16.gmra.mxu0 %v1576
        %v1642 = vpop.f32.mrf.mxu0
        %v1643 = vadd.f32 0.0, %v1642
        %v1644 = vpop.f32.mrf.mxu0
        %v1645 = vadd.f32 0.0, %v1644
        %1646 = vmatmul.bf16.gmra.mxu0 %v1579
        %v1647 = vpop.f32.mrf.mxu0
        %v1648 = vadd.f32 0.0, %v1647
        %v1649 = vpop.f32.mrf.mxu0
        %v1650 = vadd.f32 0.0, %v1649
        %1651 = vmatmul.bf16.gmra.mxu0 %v1582
        %v1652 = vpop.f32.mrf.mxu0
        %v1653 = vadd.f32 0.0, %v1652
        %v1654 = vpop.f32.mrf.mxu0
        %v1655 = vadd.f32 0.0, %v1654
        %1656 = vmatmul.bf16.gmra.mxu0 %v1585
        %v1657 = vpop.f32.mrf.mxu0
        %v1658 = vadd.f32 0.0, %v1657
        %v1659 = vpop.f32.mrf.mxu0
        %v1660 = vadd.f32 0.0, %v1659
        %1661 = vmatmul.bf16.gmra.mxu0 %v1588
        %v1662 = vpop.f32.mrf.mxu0
        %v1663 = vadd.f32 0.0, %v1662
        %v1664 = vpop.f32.mrf.mxu0
        %v1665 = vadd.f32 0.0, %v1664
        %1666 = vmatmul.bf16.gmra.mxu0 %v1591
        %v1667 = vpop.f32.mrf.mxu0
        %v1668 = vadd.f32 0.0, %v1667
        %v1669 = vpop.f32.mrf.mxu0
        %v1670 = vadd.f32 0.0, %v1669
        %1671 = vmatmul.bf16.gmra.mxu0 %v1594
        %v1672 = vpop.f32.mrf.mxu0
        %v1673 = vadd.f32 0.0, %v1672
        %v1674 = vpop.f32.mrf.mxu0
        %v1675 = vadd.f32 0.0, %v1674
        %1676 = vmatmul.bf16.gmra.mxu0 %v1597
        %v1677 = vpop.f32.mrf.mxu0
        %v1678 = vadd.f32 0.0, %v1677
        %v1679 = vpop.f32.mrf.mxu0
        %v1680 = vadd.f32 0.0, %v1679
        %1681 = vmatmul.bf16.gmra.mxu0 %v1600
        %v1682 = vpop.f32.mrf.mxu0
        %v1683 = vadd.f32 0.0, %v1682
        %v1684 = vpop.f32.mrf.mxu0
        %v1685 = vadd.f32 0.0, %v1684
        %1686 = vmatmul.bf16.gmra.mxu0 %v1603
        %v1687 = vpop.f32.mrf.mxu0
        %v1688 = vadd.f32 0.0, %v1687
        %v1689 = vpop.f32.mrf.mxu0
        %v1690 = vadd.f32 0.0, %v1689
        %1691 = vmatmul.bf16.gmra.mxu0 %v1606
        %v1692 = vpop.f32.mrf.mxu0
        %v1693 = vadd.f32 0.0, %v1692
        %v1694 = vpop.f32.mrf.mxu0
        %v1695 = vadd.f32 0.0, %v1694
        %1696 = vmatmul.bf16.gmra.mxu0 %v1609
        %v1697 = vpop.f32.mrf.mxu0
        %v1698 = vadd.f32 0.0, %v1697
        %v1699 = vpop.f32.mrf.mxu0
        %v1700 = vadd.f32 0.0, %v1699
        %1701 = vmatmul.bf16.gmra.mxu0 %v1612
        %v1702 = vpop.f32.mrf.mxu0
        %v1703 = vadd.f32 0.0, %v1702
        %v1704 = vpop.f32.mrf.mxu0
        %v1705 = vadd.f32 0.0, %v1704
        %1706 = vdwg.mxu0
        %v1739 = vunpack.c.l.b16 %v1079
        %v1740 = vunpack.c.l.b16 %v1080
        %v1741 = vunpack.c.l.b16 %v1081
        %v1742 = vunpack.c.l.b16 %v1082
        %v1743 = vunpack.c.l.b16 %v1083
        %v1744 = vunpack.c.l.b16 %v1084
        %v1745 = vunpack.c.l.b16 %v1085
        %v1746 = vunpack.c.l.b16 %v1086
        %v1747 = vunpack.c.l.b16 %v1087
        %v1748 = vunpack.c.l.b16 %v1088
        %v1749 = vunpack.c.l.b16 %v1089
        %v1750 = vunpack.c.l.b16 %v1090
        %v1751 = vunpack.c.l.b16 %v1091
        %v1752 = vunpack.c.l.b16 %v1092
        %v1753 = vunpack.c.l.b16 %v1093
        %v1754 = vunpack.c.l.b16 %v1094
        %v1755 = vunpack.c.l.b16 %v1095
        %v1756 = vunpack.c.l.b16 %v1096
        %v1757 = vunpack.c.l.b16 %v1097
        %v1758 = vunpack.c.l.b16 %v1098
        %v1759 = vunpack.c.l.b16 %v1099
        %v1760 = vunpack.c.l.b16 %v1100
        %v1761 = vunpack.c.l.b16 %v1101
        %v1762 = vunpack.c.l.b16 %v1102
        %v1763 = vunpack.c.l.b16 %v1103
        %v1764 = vunpack.c.l.b16 %v1104
        %v1765 = vunpack.c.l.b16 %v1105
        %v1766 = vunpack.c.l.b16 %v1106
        %v1767 = vunpack.c.l.b16 %v1107
        %v1768 = vunpack.c.l.b16 %v1108
        %v1769 = vunpack.c.l.b16 %v1109
        %v1770 = vunpack.c.l.b16 %v1110
        %v1771 = vpack.c.b16 %v1740, %v1739
        %v1772 = vpack.c.b16 %v1742, %v1741
        %v1773 = vpack.c.b16 %v1744, %v1743
        %v1774 = vpack.c.b16 %v1746, %v1745
        %v1775 = vpack.c.b16 %v1748, %v1747
        %v1776 = vpack.c.b16 %v1750, %v1749
        %v1777 = vpack.c.b16 %v1752, %v1751
        %v1778 = vpack.c.b16 %v1754, %v1753
        %v1779 = vpack.c.b16 %v1756, %v1755
        %v1780 = vpack.c.b16 %v1758, %v1757
        %v1781 = vpack.c.b16 %v1760, %v1759
        %v1782 = vpack.c.b16 %v1762, %v1761
        %v1783 = vpack.c.b16 %v1764, %v1763
        %v1784 = vpack.c.b16 %v1766, %v1765
        %v1785 = vpack.c.b16 %v1768, %v1767
        %v1786 = vpack.c.b16 %v1770, %v1769
        %v1788 = vsel %vm1565, %v1771, 0
        %v1791 = vsel %vm1565, %v1772, 0
        %v1794 = vsel %vm1565, %v1773, 0
        %v1797 = vsel %vm1565, %v1774, 0
        %v1800 = vsel %vm1565, %v1775, 0
        %v1803 = vsel %vm1565, %v1776, 0
        %v1806 = vsel %vm1565, %v1777, 0
        %v1809 = vsel %vm1565, %v1778, 0
        %v1812 = vsel %vm1565, %v1779, 0
        %v1815 = vsel %vm1565, %v1780, 0
        %v1818 = vsel %vm1565, %v1781, 0
        %v1821 = vsel %vm1565, %v1782, 0
        %v1824 = vsel %vm1565, %v1783, 0
        %v1827 = vsel %vm1565, %v1784, 0
        %v1830 = vsel %vm1565, %v1785, 0
        %v1833 = vsel %vm1565, %v1786, 0
        %v1836 = vsel %vm1614, %v1111, 0
        %1838 = vmatpush.bf16.msra.mxu0 0
        %1839 = vmatpush.bf16.msra.mxu0 0
        %1840 = vmatpush.bf16.msra.mxu0 0
        %1841 = vmatpush.bf16.msra.mxu0 0
        %1842 = vmatpush.bf16.msra.mxu0 0
        %1843 = vmatpush.bf16.msra.mxu0 0
        %1844 = vmatpush.bf16.msra.mxu0 0
        %1845 = vmatpush.bf16.msra.mxu0 %v1836
        %1846 = vmatmul.bf16.gmra.mxu0 %v1788
        %v1847 = vpop.f32.mrf.mxu0
        %v1848 = vadd.f32 %v1628, %v1847
        %v1849 = vpop.f32.mrf.mxu0
        %v1850 = vadd.f32 %v1630, %v1849
        %1851 = vmatmul.bf16.gmra.mxu0 %v1791
        %v1852 = vpop.f32.mrf.mxu0
        %v1853 = vadd.f32 %v1633, %v1852
        %v1854 = vpop.f32.mrf.mxu0
        %v1855 = vadd.f32 %v1635, %v1854
        %1856 = vmatmul.bf16.gmra.mxu0 %v1794
        %v1857 = vpop.f32.mrf.mxu0
        %v1858 = vadd.f32 %v1638, %v1857
        %v1859 = vpop.f32.mrf.mxu0
        %v1860 = vadd.f32 %v1640, %v1859
        %1861 = vmatmul.bf16.gmra.mxu0 %v1797
        %v1862 = vpop.f32.mrf.mxu0
        %v1863 = vadd.f32 %v1643, %v1862
        %v1864 = vpop.f32.mrf.mxu0
        %v1865 = vadd.f32 %v1645, %v1864
        %1866 = vmatmul.bf16.gmra.mxu0 %v1800
        %v1867 = vpop.f32.mrf.mxu0
        %v1868 = vadd.f32 %v1648, %v1867
        %v1869 = vpop.f32.mrf.mxu0
        %v1870 = vadd.f32 %v1650, %v1869
        %1871 = vmatmul.bf16.gmra.mxu0 %v1803
        %v1872 = vpop.f32.mrf.mxu0
        %v1873 = vadd.f32 %v1653, %v1872
        %v1874 = vpop.f32.mrf.mxu0
        %v1875 = vadd.f32 %v1655, %v1874
        %1876 = vmatmul.bf16.gmra.mxu0 %v1806
        %v1877 = vpop.f32.mrf.mxu0
        %v1878 = vadd.f32 %v1658, %v1877
        %v1879 = vpop.f32.mrf.mxu0
        %v1880 = vadd.f32 %v1660, %v1879
        %1881 = vmatmul.bf16.gmra.mxu0 %v1809
        %v1882 = vpop.f32.mrf.mxu0
        %v1883 = vadd.f32 %v1663, %v1882
        %v1884 = vpop.f32.mrf.mxu0
        %v1885 = vadd.f32 %v1665, %v1884
        %1886 = vmatmul.bf16.gmra.mxu0 %v1812
        %v1887 = vpop.f32.mrf.mxu0
        %v1888 = vadd.f32 %v1668, %v1887
        %v1889 = vpop.f32.mrf.mxu0
        %v1890 = vadd.f32 %v1670, %v1889
        %1891 = vmatmul.bf16.gmra.mxu0 %v1815
        %v1892 = vpop.f32.mrf.mxu0
        %v1893 = vadd.f32 %v1673, %v1892
        %v1894 = vpop.f32.mrf.mxu0
        %v1895 = vadd.f32 %v1675, %v1894
        %1896 = vmatmul.bf16.gmra.mxu0 %v1818
        %v1897 = vpop.f32.mrf.mxu0
        %v1898 = vadd.f32 %v1678, %v1897
        %v1899 = vpop.f32.mrf.mxu0
        %v1900 = vadd.f32 %v1680, %v1899
        %1901 = vmatmul.bf16.gmra.mxu0 %v1821
        %v1902 = vpop.f32.mrf.mxu0
        %v1903 = vadd.f32 %v1683, %v1902
        %v1904 = vpop.f32.mrf.mxu0
        %v1905 = vadd.f32 %v1685, %v1904
        %1906 = vmatmul.bf16.gmra.mxu0 %v1824
        %v1907 = vpop.f32.mrf.mxu0
        %v1908 = vadd.f32 %v1688, %v1907
        %v1909 = vpop.f32.mrf.mxu0
        %v1910 = vadd.f32 %v1690, %v1909
        %1911 = vmatmul.bf16.gmra.mxu0 %v1827
        %v1912 = vpop.f32.mrf.mxu0
        %v1913 = vadd.f32 %v1693, %v1912
        %v1914 = vpop.f32.mrf.mxu0
        %v1915 = vadd.f32 %v1695, %v1914
        %1916 = vmatmul.bf16.gmra.mxu0 %v1830
        %v1917 = vpop.f32.mrf.mxu0
        %v1918 = vadd.f32 %v1698, %v1917
        %v1919 = vpop.f32.mrf.mxu0
        %v1920 = vadd.f32 %v1700, %v1919
        %1921 = vmatmul.bf16.gmra.mxu0 %v1833
        %v1922 = vpop.f32.mrf.mxu0
        %v1923 = vadd.f32 %v1703, %v1922
        %v1924 = vpop.f32.mrf.mxu0
        %v1925 = vadd.f32 %v1705, %v1924
        %1926 = vdwg.mxu0
        %v1927 = vld [vmem:[#allocation2] sm:$0xe]
        %v1928 = vld [vmem:[#allocation2 + $0xc] sm:$0xe]
        %v1929 = vld [vmem:[#allocation2 + $0x18] sm:$0xe]
        %v1930 = vld [vmem:[#allocation2 + $0x24] sm:$0xe]
        %v1931 = vld [vmem:[#allocation2 + $0x30] sm:$0xe]
        %v1932 = vld [vmem:[#allocation2 + $0x3c] sm:$0xe]
        %v1933 = vld [vmem:[#allocation2 + $0x48] sm:$0xe]
        %v1934 = vld [vmem:[#allocation2 + $0x54] sm:$0xe]
        %v1935 = vld [vmem:[#allocation2 + $0x60] sm:$0xe]
        %v1936 = vld [vmem:[#allocation2 + $0x6c] sm:$0xe]
        %v1937 = vld [vmem:[#allocation2 + $0x78] sm:$0xe]
        %v1938 = vld [vmem:[#allocation2 + $0x84] sm:$0xe]
        %v1939 = vld [vmem:[#allocation2 + $0x90] sm:$0xe]
        %v1940 = vld [vmem:[#allocation2 + $0x9c] sm:$0xe]
        %v1941 = vld [vmem:[#allocation2 + $0xa8] sm:$0xe]
        %v1942 = vld [vmem:[#allocation2 + $0xb4] sm:$0xe]
        %vm1975 = vcmask 1042432
        %vm1976 = vcmask 1046532
        %vm1977 = vmor %vm1975, %vm1976
        %v1978 = vrot.slane %v1927, 5
        %v1979 = vrot.slane %v1978, 4
        %v1980 = vrot.slane %v1080, 5
        %v1981 = vsel %vm1977, %v1979, %v1980
        %v1982 = vrot.slane %v1980, 4
        %v1983 = vrot.slane %v1112, 5
        %v1984 = vsel %vm1977, %v1982, %v1983
        %v1985 = vrot.slane %v1928, 5
        %v1986 = vrot.slane %v1985, 4
        %v1987 = vrot.slane %v1082, 5
        %v1988 = vsel %vm1977, %v1986, %v1987
        %v1989 = vrot.slane %v1987, 4
        %v1990 = vrot.slane %v1113, 5
        %v1991 = vsel %vm1977, %v1989, %v1990
        %v1992 = vrot.slane %v1929, 5
        %v1993 = vrot.slane %v1992, 4
        %v1994 = vrot.slane %v1084, 5
        %v1995 = vsel %vm1977, %v1993, %v1994
        %v1996 = vrot.slane %v1994, 4
        %v1997 = vrot.slane %v1114, 5
        %v1998 = vsel %vm1977, %v1996, %v1997
        %v1999 = vrot.slane %v1930, 5
        %v2000 = vrot.slane %v1999, 4
        %v2001 = vrot.slane %v1086, 5
        %v2002 = vsel %vm1977, %v2000, %v2001
        %v2003 = vrot.slane %v2001, 4
        %v2004 = vrot.slane %v1115, 5
        %v2005 = vsel %vm1977, %v2003, %v2004
        %v2006 = vrot.slane %v1931, 5
        %v2007 = vrot.slane %v2006, 4
        %v2008 = vrot.slane %v1088, 5
        %v2009 = vsel %vm1977, %v2007, %v2008
        %v2010 = vrot.slane %v2008, 4
        %v2011 = vrot.slane %v1116, 5
        %v2012 = vsel %vm1977, %v2010, %v2011
        %v2013 = vrot.slane %v1932, 5
        %v2014 = vrot.slane %v2013, 4
        %v2015 = vrot.slane %v1090, 5
        %v2016 = vsel %vm1977, %v2014, %v2015
        %v2017 = vrot.slane %v2015, 4
        %v2018 = vrot.slane %v1117, 5
        %v2019 = vsel %vm1977, %v2017, %v2018
        %v2020 = vrot.slane %v1933, 5
        %v2021 = vrot.slane %v2020, 4
        %v2022 = vrot.slane %v1092, 5
        %v2023 = vsel %vm1977, %v2021, %v2022
        %v2024 = vrot.slane %v2022, 4
        %v2025 = vrot.slane %v1118, 5
        %v2026 = vsel %vm1977, %v2024, %v2025
        %v2027 = vrot.slane %v1934, 5
        %v2028 = vrot.slane %v2027, 4
        %v2029 = vrot.slane %v1094, 5
        %v2030 = vsel %vm1977, %v2028, %v2029
        %v2031 = vrot.slane %v2029, 4
        %v2032 = vrot.slane %v1119, 5
        %v2033 = vsel %vm1977, %v2031, %v2032
        %v2034 = vrot.slane %v1935, 5
        %v2035 = vrot.slane %v2034, 4
        %v2036 = vrot.slane %v1096, 5
        %v2037 = vsel %vm1977, %v2035, %v2036
        %v2038 = vrot.slane %v2036, 4
        %v2039 = vrot.slane %v1120, 5
        %v2040 = vsel %vm1977, %v2038, %v2039
        %v2041 = vrot.slane %v1936, 5
        %v2042 = vrot.slane %v2041, 4
        %v2043 = vrot.slane %v1098, 5
        %v2044 = vsel %vm1977, %v2042, %v2043
        %v2045 = vrot.slane %v2043, 4
        %v2046 = vrot.slane %v1121, 5
        %v2047 = vsel %vm1977, %v2045, %v2046
        %v2048 = vrot.slane %v1937, 5
        %v2049 = vrot.slane %v2048, 4
        %v2050 = vrot.slane %v1100, 5
        %v2051 = vsel %vm1977, %v2049, %v2050
        %v2052 = vrot.slane %v2050, 4
        %v2053 = vrot.slane %v1122, 5
        %v2054 = vsel %vm1977, %v2052, %v2053
        %v2055 = vrot.slane %v1938, 5
        %v2056 = vrot.slane %v2055, 4
        %v2057 = vrot.slane %v1102, 5
        %v2058 = vsel %vm1977, %v2056, %v2057
        %v2059 = vrot.slane %v2057, 4
        %v2060 = vrot.slane %v1123, 5
        %v2061 = vsel %vm1977, %v2059, %v2060
        %v2062 = vrot.slane %v1939, 5
        %v2063 = vrot.slane %v2062, 4
        %v2064 = vrot.slane %v1104, 5
        %v2065 = vsel %vm1977, %v2063, %v2064
        %v2066 = vrot.slane %v2064, 4
        %v2067 = vrot.slane %v1124, 5
        %v2068 = vsel %vm1977, %v2066, %v2067
        %v2069 = vrot.slane %v1940, 5
        %v2070 = vrot.slane %v2069, 4
        %v2071 = vrot.slane %v1106, 5
        %v2072 = vsel %vm1977, %v2070, %v2071
        %v2073 = vrot.slane %v2071, 4
        %v2074 = vrot.slane %v1125, 5
        %v2075 = vsel %vm1977, %v2073, %v2074
        %v2076 = vrot.slane %v1941, 5
        %v2077 = vrot.slane %v2076, 4
        %v2078 = vrot.slane %v1108, 5
        %v2079 = vsel %vm1977, %v2077, %v2078
        %v2080 = vrot.slane %v2078, 4
        %v2081 = vrot.slane %v1126, 5
        %v2082 = vsel %vm1977, %v2080, %v2081
        %v2083 = vrot.slane %v1942, 5
        %v2084 = vrot.slane %v2083, 4
        %v2085 = vrot.slane %v1110, 5
        %v2086 = vsel %vm1977, %v2084, %v2085
        %v2087 = vrot.slane %v2085, 4
        %v2088 = vrot.slane %v1127, 5
        %v2089 = vsel %vm1977, %v2087, %v2088
        %s2090 = scalar_lea.vmem %s3, 8
        %v2091 = vld [vmem:[%s2090] sm:$0xf]
        %v2092 = vunpack.c.l.b16 %v1981
        %v2093 = vunpack.c.l.b16 %v1984
        %v2094 = vunpack.c.l.b16 %v1988
        %v2095 = vunpack.c.l.b16 %v1991
        %v2096 = vunpack.c.l.b16 %v1995
        %v2097 = vunpack.c.l.b16 %v1998
        %v2098 = vunpack.c.l.b16 %v2002
        %v2099 = vunpack.c.l.b16 %v2005
        %v2100 = vunpack.c.l.b16 %v2009
        %v2101 = vunpack.c.l.b16 %v2012
        %v2102 = vunpack.c.l.b16 %v2016
        %v2103 = vunpack.c.l.b16 %v2019
        %v2104 = vunpack.c.l.b16 %v2023
        %v2105 = vunpack.c.l.b16 %v2026
        %v2106 = vunpack.c.l.b16 %v2030
        %v2107 = vunpack.c.l.b16 %v2033
        %v2108 = vunpack.c.l.b16 %v2037
        %v2109 = vunpack.c.l.b16 %v2040
        %v2110 = vunpack.c.l.b16 %v2044
        %v2111 = vunpack.c.l.b16 %v2047
        %v2112 = vunpack.c.l.b16 %v2051
        %v2113 = vunpack.c.l.b16 %v2054
        %v2114 = vunpack.c.l.b16 %v2058
        %v2115 = vunpack.c.l.b16 %v2061
        %v2116 = vunpack.c.l.b16 %v2065
        %v2117 = vunpack.c.l.b16 %v2068
        %v2118 = vunpack.c.l.b16 %v2072
        %v2119 = vunpack.c.l.b16 %v2075
        %v2120 = vunpack.c.l.b16 %v2079
        %v2121 = vunpack.c.l.b16 %v2082
        %v2122 = vunpack.c.l.b16 %v2086
        %v2123 = vunpack.c.l.b16 %v2089
        %v2124 = vpack.c.b16 %v2093, %v2092
        %v2125 = vpack.c.b16 %v2095, %v2094
        %v2126 = vpack.c.b16 %v2097, %v2096
        %v2127 = vpack.c.b16 %v2099, %v2098
        %v2128 = vpack.c.b16 %v2101, %v2100
        %v2129 = vpack.c.b16 %v2103, %v2102
        %v2130 = vpack.c.b16 %v2105, %v2104
        %v2131 = vpack.c.b16 %v2107, %v2106
        %v2132 = vpack.c.b16 %v2109, %v2108
        %v2133 = vpack.c.b16 %v2111, %v2110
        %v2134 = vpack.c.b16 %v2113, %v2112
        %v2135 = vpack.c.b16 %v2115, %v2114
        %v2136 = vpack.c.b16 %v2117, %v2116
        %v2137 = vpack.c.b16 %v2119, %v2118
        %v2138 = vpack.c.b16 %v2121, %v2120
        %v2139 = vpack.c.b16 %v2123, %v2122
        %v2141 = vsel %vm1565, %v2124, 0
        %v2144 = vsel %vm1565, %v2125, 0
        %v2147 = vsel %vm1565, %v2126, 0
        %v2150 = vsel %vm1565, %v2127, 0
        %v2153 = vsel %vm1565, %v2128, 0
        %v2156 = vsel %vm1565, %v2129, 0
        %v2159 = vsel %vm1565, %v2130, 0
        %v2162 = vsel %vm1565, %v2131, 0
        %v2165 = vsel %vm1565, %v2132, 0
        %v2168 = vsel %vm1565, %v2133, 0
        %v2171 = vsel %vm1565, %v2134, 0
        %v2174 = vsel %vm1565, %v2135, 0
        %v2177 = vsel %vm1565, %v2136, 0
        %v2180 = vsel %vm1565, %v2137, 0
        %v2183 = vsel %vm1565, %v2138, 0
        %v2186 = vsel %vm1565, %v2139, 0
        %v2189 = vsel %vm1614, %v2091, 0
        %2191 = vmatpush.bf16.msra.mxu0 0
        %2192 = vmatpush.bf16.msra.mxu0 0
        %2193 = vmatpush.bf16.msra.mxu0 0
        %2194 = vmatpush.bf16.msra.mxu0 0
        %2195 = vmatpush.bf16.msra.mxu0 0
        %2196 = vmatpush.bf16.msra.mxu0 0
        %2197 = vmatpush.bf16.msra.mxu0 0
        %2198 = vmatpush.bf16.msra.mxu0 %v2189
        %2199 = vmatmul.bf16.gmra.mxu0 %v2141
        %v2200 = vpop.f32.mrf.mxu0
        %v2201 = vadd.f32 0.0, %v2200
        %v2202 = vpop.f32.mrf.mxu0
        %v2203 = vadd.f32 0.0, %v2202
        %2204 = vmatmul.bf16.gmra.mxu0 %v2144
        %v2205 = vpop.f32.mrf.mxu0
        %v2206 = vadd.f32 0.0, %v2205
        %v2207 = vpop.f32.mrf.mxu0
        %v2208 = vadd.f32 0.0, %v2207
        %2209 = vmatmul.bf16.gmra.mxu0 %v2147
        %v2210 = vpop.f32.mrf.mxu0
        %v2211 = vadd.f32 0.0, %v2210
        %v2212 = vpop.f32.mrf.mxu0
        %v2213 = vadd.f32 0.0, %v2212
        %2214 = vmatmul.bf16.gmra.mxu0 %v2150
        %v2215 = vpop.f32.mrf.mxu0
        %v2216 = vadd.f32 0.0, %v2215
        %v2217 = vpop.f32.mrf.mxu0
        %v2218 = vadd.f32 0.0, %v2217
        %2219 = vmatmul.bf16.gmra.mxu0 %v2153
        %v2220 = vpop.f32.mrf.mxu0
        %v2221 = vadd.f32 0.0, %v2220
        %v2222 = vpop.f32.mrf.mxu0
        %v2223 = vadd.f32 0.0, %v2222
        %2224 = vmatmul.bf16.gmra.mxu0 %v2156
        %v2225 = vpop.f32.mrf.mxu0
        %v2226 = vadd.f32 0.0, %v2225
        %v2227 = vpop.f32.mrf.mxu0
        %v2228 = vadd.f32 0.0, %v2227
        %2229 = vmatmul.bf16.gmra.mxu0 %v2159
        %v2230 = vpop.f32.mrf.mxu0
        %v2231 = vadd.f32 0.0, %v2230
        %v2232 = vpop.f32.mrf.mxu0
        %v2233 = vadd.f32 0.0, %v2232
        %2234 = vmatmul.bf16.gmra.mxu0 %v2162
        %v2235 = vpop.f32.mrf.mxu0
        %v2236 = vadd.f32 0.0, %v2235
        %v2237 = vpop.f32.mrf.mxu0
        %v2238 = vadd.f32 0.0, %v2237
        %2239 = vmatmul.bf16.gmra.mxu0 %v2165
        %v2240 = vpop.f32.mrf.mxu0
        %v2241 = vadd.f32 0.0, %v2240
        %v2242 = vpop.f32.mrf.mxu0
        %v2243 = vadd.f32 0.0, %v2242
        %2244 = vmatmul.bf16.gmra.mxu0 %v2168
        %v2245 = vpop.f32.mrf.mxu0
        %v2246 = vadd.f32 0.0, %v2245
        %v2247 = vpop.f32.mrf.mxu0
        %v2248 = vadd.f32 0.0, %v2247
        %2249 = vmatmul.bf16.gmra.mxu0 %v2171
        %v2250 = vpop.f32.mrf.mxu0
        %v2251 = vadd.f32 0.0, %v2250
        %v2252 = vpop.f32.mrf.mxu0
        %v2253 = vadd.f32 0.0, %v2252
        %2254 = vmatmul.bf16.gmra.mxu0 %v2174
        %v2255 = vpop.f32.mrf.mxu0
        %v2256 = vadd.f32 0.0, %v2255
        %v2257 = vpop.f32.mrf.mxu0
        %v2258 = vadd.f32 0.0, %v2257
        %2259 = vmatmul.bf16.gmra.mxu0 %v2177
        %v2260 = vpop.f32.mrf.mxu0
        %v2261 = vadd.f32 0.0, %v2260
        %v2262 = vpop.f32.mrf.mxu0
        %v2263 = vadd.f32 0.0, %v2262
        %2264 = vmatmul.bf16.gmra.mxu0 %v2180
        %v2265 = vpop.f32.mrf.mxu0
        %v2266 = vadd.f32 0.0, %v2265
        %v2267 = vpop.f32.mrf.mxu0
        %v2268 = vadd.f32 0.0, %v2267
        %2269 = vmatmul.bf16.gmra.mxu0 %v2183
        %v2270 = vpop.f32.mrf.mxu0
        %v2271 = vadd.f32 0.0, %v2270
        %v2272 = vpop.f32.mrf.mxu0
        %v2273 = vadd.f32 0.0, %v2272
        %2274 = vmatmul.bf16.gmra.mxu0 %v2186
        %v2275 = vpop.f32.mrf.mxu0
        %v2276 = vadd.f32 0.0, %v2275
        %v2277 = vpop.f32.mrf.mxu0
        %v2278 = vadd.f32 0.0, %v2277
        %2279 = vdwg.mxu0
        %v2280 = vadd.f32 %v1848, %v2201
        %v2281 = vadd.f32 %v1850, %v2203
        %v2282 = vadd.f32 %v1853, %v2206
        %v2283 = vadd.f32 %v1855, %v2208
        %v2284 = vadd.f32 %v1858, %v2211
        %v2285 = vadd.f32 %v1860, %v2213
        %v2286 = vadd.f32 %v1863, %v2216
        %v2287 = vadd.f32 %v1865, %v2218
        %v2288 = vadd.f32 %v1868, %v2221
        %v2289 = vadd.f32 %v1870, %v2223
        %v2290 = vadd.f32 %v1873, %v2226
        %v2291 = vadd.f32 %v1875, %v2228
        %v2292 = vadd.f32 %v1878, %v2231
        %v2293 = vadd.f32 %v1880, %v2233
        %v2294 = vadd.f32 %v1883, %v2236
        %v2295 = vadd.f32 %v1885, %v2238
        %v2296 = vadd.f32 %v1888, %v2241
        %v2297 = vadd.f32 %v1890, %v2243
        %v2298 = vadd.f32 %v1893, %v2246
        %v2299 = vadd.f32 %v1895, %v2248
        %v2300 = vadd.f32 %v1898, %v2251
        %v2301 = vadd.f32 %v1900, %v2253
        %v2302 = vadd.f32 %v1903, %v2256
        %v2303 = vadd.f32 %v1905, %v2258
        %v2304 = vadd.f32 %v1908, %v2261
        %v2305 = vadd.f32 %v1910, %v2263
        %v2306 = vadd.f32 %v1913, %v2266
        %v2307 = vadd.f32 %v1915, %v2268
        %v2308 = vadd.f32 %v1918, %v2271
        %v2309 = vadd.f32 %v1920, %v2273
        %v2310 = vadd.f32 %v1923, %v2276
        %v2311 = vadd.f32 %v1925, %v2278
        %v2312 = vld [vmem:[%s961] sm:$0xf]
        %v2313 = vld [vmem:[%s961 + $0x4] sm:$0xf]
        %v2314 = vld [vmem:[%s961 + $0xc] sm:$0xf]
        %v2315 = vld [vmem:[%s961 + $0x10] sm:$0xf]
        %v2316 = vld [vmem:[%s961 + $0x18] sm:$0xf]
        %v2317 = vld [vmem:[%s961 + $0x1c] sm:$0xf]
        %v2318 = vld [vmem:[%s961 + $0x24] sm:$0xf]
        %v2319 = vld [vmem:[%s961 + $0x28] sm:$0xf]
        %v2320 = vld [vmem:[%s961 + $0x30] sm:$0xf]
        %v2321 = vld [vmem:[%s961 + $0x34] sm:$0xf]
        %v2322 = vld [vmem:[%s961 + $0x3c] sm:$0xf]
        %v2323 = vld [vmem:[%s961 + $0x40] sm:$0xf]
        %v2324 = vld [vmem:[%s961 + $0x48] sm:$0xf]
        %v2325 = vld [vmem:[%s961 + $0x4c] sm:$0xf]
        %v2326 = vld [vmem:[%s961 + $0x54] sm:$0xf]
        %v2327 = vld [vmem:[%s961 + $0x58] sm:$0xf]
        %v2328 = vld [vmem:[%s961 + $0x60] sm:$0xf]
        %v2329 = vld [vmem:[%s961 + $0x64] sm:$0xf]
        %v2330 = vld [vmem:[%s961 + $0x6c] sm:$0xf]
        %v2331 = vld [vmem:[%s961 + $0x70] sm:$0xf]
        %v2332 = vld [vmem:[%s961 + $0x78] sm:$0xf]
        %v2333 = vld [vmem:[%s961 + $0x7c] sm:$0xf]
        %v2334 = vld [vmem:[%s961 + $0x84] sm:$0xf]
        %v2335 = vld [vmem:[%s961 + $0x88] sm:$0xf]
        %v2336 = vld [vmem:[%s961 + $0x90] sm:$0xf]
        %v2337 = vld [vmem:[%s961 + $0x94] sm:$0xf]
        %v2338 = vld [vmem:[%s961 + $0x9c] sm:$0xf]
        %v2339 = vld [vmem:[%s961 + $0xa0] sm:$0xf]
        %v2340 = vld [vmem:[%s961 + $0xa8] sm:$0xf]
        %v2341 = vld [vmem:[%s961 + $0xac] sm:$0xf]
        %v2342 = vld [vmem:[%s961 + $0xb4] sm:$0xf]
        %v2343 = vld [vmem:[%s961 + $0xb8] sm:$0xf]
        %s2344 = scalar_lea.vmem %s3, 12
        %v2345 = vld [vmem:[%s2344] sm:$0xf]
        %v2378 = vunpack.c.l.b16 %v2312
        %v2379 = vunpack.c.l.b16 %v2313
        %v2380 = vunpack.c.l.b16 %v2314
        %v2381 = vunpack.c.l.b16 %v2315
        %v2382 = vunpack.c.l.b16 %v2316
        %v2383 = vunpack.c.l.b16 %v2317
        %v2384 = vunpack.c.l.b16 %v2318
        %v2385 = vunpack.c.l.b16 %v2319
        %v2386 = vunpack.c.l.b16 %v2320
        %v2387 = vunpack.c.l.b16 %v2321
        %v2388 = vunpack.c.l.b16 %v2322
        %v2389 = vunpack.c.l.b16 %v2323
        %v2390 = vunpack.c.l.b16 %v2324
        %v2391 = vunpack.c.l.b16 %v2325
        %v2392 = vunpack.c.l.b16 %v2326
        %v2393 = vunpack.c.l.b16 %v2327
        %v2394 = vunpack.c.l.b16 %v2328
        %v2395 = vunpack.c.l.b16 %v2329
        %v2396 = vunpack.c.l.b16 %v2330
        %v2397 = vunpack.c.l.b16 %v2331
        %v2398 = vunpack.c.l.b16 %v2332
        %v2399 = vunpack.c.l.b16 %v2333
        %v2400 = vunpack.c.l.b16 %v2334
        %v2401 = vunpack.c.l.b16 %v2335
        %v2402 = vunpack.c.l.b16 %v2336
        %v2403 = vunpack.c.l.b16 %v2337
        %v2404 = vunpack.c.l.b16 %v2338
        %v2405 = vunpack.c.l.b16 %v2339
        %v2406 = vunpack.c.l.b16 %v2340
        %v2407 = vunpack.c.l.b16 %v2341
        %v2408 = vunpack.c.l.b16 %v2342
        %v2409 = vunpack.c.l.b16 %v2343
        %v2410 = vpack.c.b16 %v2379, %v2378
        %v2411 = vpack.c.b16 %v2381, %v2380
        %v2412 = vpack.c.b16 %v2383, %v2382
        %v2413 = vpack.c.b16 %v2385, %v2384
        %v2414 = vpack.c.b16 %v2387, %v2386
        %v2415 = vpack.c.b16 %v2389, %v2388
        %v2416 = vpack.c.b16 %v2391, %v2390
        %v2417 = vpack.c.b16 %v2393, %v2392
        %v2418 = vpack.c.b16 %v2395, %v2394
        %v2419 = vpack.c.b16 %v2397, %v2396
        %v2420 = vpack.c.b16 %v2399, %v2398
        %v2421 = vpack.c.b16 %v2401, %v2400
        %v2422 = vpack.c.b16 %v2403, %v2402
        %v2423 = vpack.c.b16 %v2405, %v2404
        %v2424 = vpack.c.b16 %v2407, %v2406
        %v2425 = vpack.c.b16 %v2409, %v2408
        %v2427 = vsel %vm1565, %v2410, 0
        %v2430 = vsel %vm1565, %v2411, 0
        %v2433 = vsel %vm1565, %v2412, 0
        %v2436 = vsel %vm1565, %v2413, 0
        %v2439 = vsel %vm1565, %v2414, 0
        %v2442 = vsel %vm1565, %v2415, 0
        %v2445 = vsel %vm1565, %v2416, 0
        %v2448 = vsel %vm1565, %v2417, 0
        %v2451 = vsel %vm1565, %v2418, 0
        %v2454 = vsel %vm1565, %v2419, 0
        %v2457 = vsel %vm1565, %v2420, 0
        %v2460 = vsel %vm1565, %v2421, 0
        %v2463 = vsel %vm1565, %v2422, 0
        %v2466 = vsel %vm1565, %v2423, 0
        %v2469 = vsel %vm1565, %v2424, 0
        %v2472 = vsel %vm1565, %v2425, 0
        %v2475 = vsel %vm1614, %v2345, 0
        %2477 = vmatpush.bf16.msra.mxu0 0
        %2478 = vmatpush.bf16.msra.mxu0 0
        %2479 = vmatpush.bf16.msra.mxu0 0
        %2480 = vmatpush.bf16.msra.mxu0 0
        %2481 = vmatpush.bf16.msra.mxu0 0
        %2482 = vmatpush.bf16.msra.mxu0 0
        %2483 = vmatpush.bf16.msra.mxu0 0
        %2484 = vmatpush.bf16.msra.mxu0 %v2475
        %2485 = vmatmul.bf16.gmra.mxu0 %v2427
        %v2486 = vpop.f32.mrf.mxu0
        %v2487 = vadd.f32 0.0, %v2486
        %v2488 = vpop.f32.mrf.mxu0
        %v2489 = vadd.f32 0.0, %v2488
        %2490 = vmatmul.bf16.gmra.mxu0 %v2430
        %v2491 = vpop.f32.mrf.mxu0
        %v2492 = vadd.f32 0.0, %v2491
        %v2493 = vpop.f32.mrf.mxu0
        %v2494 = vadd.f32 0.0, %v2493
        %2495 = vmatmul.bf16.gmra.mxu0 %v2433
        %v2496 = vpop.f32.mrf.mxu0
        %v2497 = vadd.f32 0.0, %v2496
        %v2498 = vpop.f32.mrf.mxu0
        %v2499 = vadd.f32 0.0, %v2498
        %2500 = vmatmul.bf16.gmra.mxu0 %v2436
        %v2501 = vpop.f32.mrf.mxu0
        %v2502 = vadd.f32 0.0, %v2501
        %v2503 = vpop.f32.mrf.mxu0
        %v2504 = vadd.f32 0.0, %v2503
        %2505 = vmatmul.bf16.gmra.mxu0 %v2439
        %v2506 = vpop.f32.mrf.mxu0
        %v2507 = vadd.f32 0.0, %v2506
        %v2508 = vpop.f32.mrf.mxu0
        %v2509 = vadd.f32 0.0, %v2508
        %2510 = vmatmul.bf16.gmra.mxu0 %v2442
        %v2511 = vpop.f32.mrf.mxu0
        %v2512 = vadd.f32 0.0, %v2511
        %v2513 = vpop.f32.mrf.mxu0
        %v2514 = vadd.f32 0.0, %v2513
        %2515 = vmatmul.bf16.gmra.mxu0 %v2445
        %v2516 = vpop.f32.mrf.mxu0
        %v2517 = vadd.f32 0.0, %v2516
        %v2518 = vpop.f32.mrf.mxu0
        %v2519 = vadd.f32 0.0, %v2518
        %2520 = vmatmul.bf16.gmra.mxu0 %v2448
        %v2521 = vpop.f32.mrf.mxu0
        %v2522 = vadd.f32 0.0, %v2521
        %v2523 = vpop.f32.mrf.mxu0
        %v2524 = vadd.f32 0.0, %v2523
        %2525 = vmatmul.bf16.gmra.mxu0 %v2451
        %v2526 = vpop.f32.mrf.mxu0
        %v2527 = vadd.f32 0.0, %v2526
        %v2528 = vpop.f32.mrf.mxu0
        %v2529 = vadd.f32 0.0, %v2528
        %2530 = vmatmul.bf16.gmra.mxu0 %v2454
        %v2531 = vpop.f32.mrf.mxu0
        %v2532 = vadd.f32 0.0, %v2531
        %v2533 = vpop.f32.mrf.mxu0
        %v2534 = vadd.f32 0.0, %v2533
        %2535 = vmatmul.bf16.gmra.mxu0 %v2457
        %v2536 = vpop.f32.mrf.mxu0
        %v2537 = vadd.f32 0.0, %v2536
        %v2538 = vpop.f32.mrf.mxu0
        %v2539 = vadd.f32 0.0, %v2538
        %2540 = vmatmul.bf16.gmra.mxu0 %v2460
        %v2541 = vpop.f32.mrf.mxu0
        %v2542 = vadd.f32 0.0, %v2541
        %v2543 = vpop.f32.mrf.mxu0
        %v2544 = vadd.f32 0.0, %v2543
        %2545 = vmatmul.bf16.gmra.mxu0 %v2463
        %v2546 = vpop.f32.mrf.mxu0
        %v2547 = vadd.f32 0.0, %v2546
        %v2548 = vpop.f32.mrf.mxu0
        %v2549 = vadd.f32 0.0, %v2548
        %2550 = vmatmul.bf16.gmra.mxu0 %v2466
        %v2551 = vpop.f32.mrf.mxu0
        %v2552 = vadd.f32 0.0, %v2551
        %v2553 = vpop.f32.mrf.mxu0
        %v2554 = vadd.f32 0.0, %v2553
        %2555 = vmatmul.bf16.gmra.mxu0 %v2469
        %v2556 = vpop.f32.mrf.mxu0
        %v2557 = vadd.f32 0.0, %v2556
        %v2558 = vpop.f32.mrf.mxu0
        %v2559 = vadd.f32 0.0, %v2558
        %2560 = vmatmul.bf16.gmra.mxu0 %v2472
        %v2561 = vpop.f32.mrf.mxu0
        %v2562 = vadd.f32 0.0, %v2561
        %v2563 = vpop.f32.mrf.mxu0
        %v2564 = vadd.f32 0.0, %v2563
        %2565 = vdwg.mxu0
        %v2566 = vadd.f32 %v2280, %v2487
        %v2567 = vadd.f32 %v2281, %v2489
        %v2568 = vadd.f32 %v2282, %v2492
        %v2569 = vadd.f32 %v2283, %v2494
        %v2570 = vadd.f32 %v2284, %v2497
        %v2571 = vadd.f32 %v2285, %v2499
        %v2572 = vadd.f32 %v2286, %v2502
        %v2573 = vadd.f32 %v2287, %v2504
        %v2574 = vadd.f32 %v2288, %v2507
        %v2575 = vadd.f32 %v2289, %v2509
        %v2576 = vadd.f32 %v2290, %v2512
        %v2577 = vadd.f32 %v2291, %v2514
        %v2578 = vadd.f32 %v2292, %v2517
        %v2579 = vadd.f32 %v2293, %v2519
        %v2580 = vadd.f32 %v2294, %v2522
        %v2581 = vadd.f32 %v2295, %v2524
        %v2582 = vadd.f32 %v2296, %v2527
        %v2583 = vadd.f32 %v2297, %v2529
        %v2584 = vadd.f32 %v2298, %v2532
        %v2585 = vadd.f32 %v2299, %v2534
        %v2586 = vadd.f32 %v2300, %v2537
        %v2587 = vadd.f32 %v2301, %v2539
        %v2588 = vadd.f32 %v2302, %v2542
        %v2589 = vadd.f32 %v2303, %v2544
        %v2590 = vadd.f32 %v2304, %v2547
        %v2591 = vadd.f32 %v2305, %v2549
        %v2592 = vadd.f32 %v2306, %v2552
        %v2593 = vadd.f32 %v2307, %v2554
        %v2594 = vadd.f32 %v2308, %v2557
        %v2595 = vadd.f32 %v2309, %v2559
        %v2596 = vadd.f32 %v2310, %v2562
        %v2597 = vadd.f32 %v2311, %v2564
        %v2598 = vld [vmem:[%s961] sm:$0xf]
        %v2599 = vld [vmem:[%s961 + $0x4] sm:$0xf]
        %v2600 = vld [vmem:[%s961 + $0x8] sm:$0x1]
        %v2601 = vld [vmem:[%s961 + $0xc] sm:$0xf]
        %v2602 = vld [vmem:[%s961 + $0x10] sm:$0xf]
        %v2603 = vld [vmem:[%s961 + $0x14] sm:$0x1]
        %v2604 = vld [vmem:[%s961 + $0x18] sm:$0xf]
        %v2605 = vld [vmem:[%s961 + $0x1c] sm:$0xf]
        %v2606 = vld [vmem:[%s961 + $0x20] sm:$0x1]
        %v2607 = vld [vmem:[%s961 + $0x24] sm:$0xf]
        %v2608 = vld [vmem:[%s961 + $0x28] sm:$0xf]
        %v2609 = vld [vmem:[%s961 + $0x2c] sm:$0x1]
        %v2610 = vld [vmem:[%s961 + $0x30] sm:$0xf]
        %v2611 = vld [vmem:[%s961 + $0x34] sm:$0xf]
        %v2612 = vld [vmem:[%s961 + $0x38] sm:$0x1]
        %v2613 = vld [vmem:[%s961 + $0x3c] sm:$0xf]
        %v2614 = vld [vmem:[%s961 + $0x40] sm:$0xf]
        %v2615 = vld [vmem:[%s961 + $0x44] sm:$0x1]
        %v2616 = vld [vmem:[%s961 + $0x48] sm:$0xf]
        %v2617 = vld [vmem:[%s961 + $0x4c] sm:$0xf]
        %v2618 = vld [vmem:[%s961 + $0x50] sm:$0x1]
        %v2619 = vld [vmem:[%s961 + $0x54] sm:$0xf]
        %v2620 = vld [vmem:[%s961 + $0x58] sm:$0xf]
        %v2621 = vld [vmem:[%s961 + $0x5c] sm:$0x1]
        %v2622 = vld [vmem:[%s961 + $0x60] sm:$0xf]
        %v2623 = vld [vmem:[%s961 + $0x64] sm:$0xf]
        %v2624 = vld [vmem:[%s961 + $0x68] sm:$0x1]
        %v2625 = vld [vmem:[%s961 + $0x6c] sm:$0xf]
        %v2626 = vld [vmem:[%s961 + $0x70] sm:$0xf]
        %v2627 = vld [vmem:[%s961 + $0x74] sm:$0x1]
        %v2628 = vld [vmem:[%s961 + $0x78] sm:$0xf]
        %v2629 = vld [vmem:[%s961 + $0x7c] sm:$0xf]
        %v2630 = vld [vmem:[%s961 + $0x80] sm:$0x1]
        %v2631 = vld [vmem:[%s961 + $0x84] sm:$0xf]
        %v2632 = vld [vmem:[%s961 + $0x88] sm:$0xf]
        %v2633 = vld [vmem:[%s961 + $0x8c] sm:$0x1]
        %v2634 = vld [vmem:[%s961 + $0x90] sm:$0xf]
        %v2635 = vld [vmem:[%s961 + $0x94] sm:$0xf]
        %v2636 = vld [vmem:[%s961 + $0x98] sm:$0x1]
        %v2637 = vld [vmem:[%s961 + $0x9c] sm:$0xf]
        %v2638 = vld [vmem:[%s961 + $0xa0] sm:$0xf]
        %v2639 = vld [vmem:[%s961 + $0xa4] sm:$0x1]
        %v2640 = vld [vmem:[%s961 + $0xa8] sm:$0xf]
        %v2641 = vld [vmem:[%s961 + $0xac] sm:$0xf]
        %v2642 = vld [vmem:[%s961 + $0xb0] sm:$0x1]
        %v2643 = vld [vmem:[%s961 + $0xb4] sm:$0xf]
        %v2644 = vld [vmem:[%s961 + $0xb8] sm:$0xf]
        %v2645 = vld [vmem:[%s961 + $0xbc] sm:$0x1]
        %v2647 = vshrl.u32 %v2598, 16
        %v2649 = vrot.slane %v2647, 4
        %v2650 = vshll.u32 %v2598, 16
        %v2652 = vrot.slane %v2650, 5
        %v2653 = vor.u32 %v2649, %v2652
        %v2654 = vrot.slane %v2653, 4
        %v2656 = vshll.u32 %v2599, 16
        %v2658 = vrot.slane %v2656, 5
        %v2659 = vsel %vm1130, %v2654, %v2658
        %v2660 = vshrl.u32 %v2599, 16
        %v2662 = vrot.slane %v2660, 4
        %v2663 = vor.u32 %v2662, %v2658
        %v2664 = vrot.slane %v2663, 4
        %v2666 = vshll.u32 %v2600, 16
        %v2668 = vrot.slane %v2666, 5
        %v2669 = vsel %vm1130, %v2664, %v2668
        %v2671 = vshrl.u32 %v2601, 16
        %v2673 = vrot.slane %v2671, 4
        %v2674 = vshll.u32 %v2601, 16
        %v2676 = vrot.slane %v2674, 5
        %v2677 = vor.u32 %v2673, %v2676
        %v2678 = vrot.slane %v2677, 4
        %v2680 = vshll.u32 %v2602, 16
        %v2682 = vrot.slane %v2680, 5
        %v2683 = vsel %vm1130, %v2678, %v2682
        %v2684 = vshrl.u32 %v2602, 16
        %v2686 = vrot.slane %v2684, 4
        %v2687 = vor.u32 %v2686, %v2682
        %v2688 = vrot.slane %v2687, 4
        %v2690 = vshll.u32 %v2603, 16
        %v2692 = vrot.slane %v2690, 5
        %v2693 = vsel %vm1130, %v2688, %v2692
        %v2695 = vshrl.u32 %v2604, 16
        %v2697 = vrot.slane %v2695, 4
        %v2698 = vshll.u32 %v2604, 16
        %v2700 = vrot.slane %v2698, 5
        %v2701 = vor.u32 %v2697, %v2700
        %v2702 = vrot.slane %v2701, 4
        %v2704 = vshll.u32 %v2605, 16
        %v2706 = vrot.slane %v2704, 5
        %v2707 = vsel %vm1130, %v2702, %v2706
        %v2708 = vshrl.u32 %v2605, 16
        %v2710 = vrot.slane %v2708, 4
        %v2711 = vor.u32 %v2710, %v2706
        %v2712 = vrot.slane %v2711, 4
        %v2714 = vshll.u32 %v2606, 16
        %v2716 = vrot.slane %v2714, 5
        %v2717 = vsel %vm1130, %v2712, %v2716
        %v2719 = vshrl.u32 %v2607, 16
        %v2721 = vrot.slane %v2719, 4
        %v2722 = vshll.u32 %v2607, 16
        %v2724 = vrot.slane %v2722, 5
        %v2725 = vor.u32 %v2721, %v2724
        %v2726 = vrot.slane %v2725, 4
        %v2728 = vshll.u32 %v2608, 16
        %v2730 = vrot.slane %v2728, 5
        %v2731 = vsel %vm1130, %v2726, %v2730
        %v2732 = vshrl.u32 %v2608, 16
        %v2734 = vrot.slane %v2732, 4
        %v2735 = vor.u32 %v2734, %v2730
        %v2736 = vrot.slane %v2735, 4
        %v2738 = vshll.u32 %v2609, 16
        %v2740 = vrot.slane %v2738, 5
        %v2741 = vsel %vm1130, %v2736, %v2740
        %v2743 = vshrl.u32 %v2610, 16
        %v2745 = vrot.slane %v2743, 4
        %v2746 = vshll.u32 %v2610, 16
        %v2748 = vrot.slane %v2746, 5
        %v2749 = vor.u32 %v2745, %v2748
        %v2750 = vrot.slane %v2749, 4
        %v2752 = vshll.u32 %v2611, 16
        %v2754 = vrot.slane %v2752, 5
        %v2755 = vsel %vm1130, %v2750, %v2754
        %v2756 = vshrl.u32 %v2611, 16
        %v2758 = vrot.slane %v2756, 4
        %v2759 = vor.u32 %v2758, %v2754
        %v2760 = vrot.slane %v2759, 4
        %v2762 = vshll.u32 %v2612, 16
        %v2764 = vrot.slane %v2762, 5
        %v2765 = vsel %vm1130, %v2760, %v2764
        %v2767 = vshrl.u32 %v2613, 16
        %v2769 = vrot.slane %v2767, 4
        %v2770 = vshll.u32 %v2613, 16
        %v2772 = vrot.slane %v2770, 5
        %v2773 = vor.u32 %v2769, %v2772
        %v2774 = vrot.slane %v2773, 4
        %v2776 = vshll.u32 %v2614, 16
        %v2778 = vrot.slane %v2776, 5
        %v2779 = vsel %vm1130, %v2774, %v2778
        %v2780 = vshrl.u32 %v2614, 16
        %v2782 = vrot.slane %v2780, 4
        %v2783 = vor.u32 %v2782, %v2778
        %v2784 = vrot.slane %v2783, 4
        %v2786 = vshll.u32 %v2615, 16
        %v2788 = vrot.slane %v2786, 5
        %v2789 = vsel %vm1130, %v2784, %v2788
        %v2791 = vshrl.u32 %v2616, 16
        %v2793 = vrot.slane %v2791, 4
        %v2794 = vshll.u32 %v2616, 16
        %v2796 = vrot.slane %v2794, 5
        %v2797 = vor.u32 %v2793, %v2796
        %v2798 = vrot.slane %v2797, 4
        %v2800 = vshll.u32 %v2617, 16
        %v2802 = vrot.slane %v2800, 5
        %v2803 = vsel %vm1130, %v2798, %v2802
        %v2804 = vshrl.u32 %v2617, 16
        %v2806 = vrot.slane %v2804, 4
        %v2807 = vor.u32 %v2806, %v2802
        %v2808 = vrot.slane %v2807, 4
        %v2810 = vshll.u32 %v2618, 16
        %v2812 = vrot.slane %v2810, 5
        %v2813 = vsel %vm1130, %v2808, %v2812
        %v2815 = vshrl.u32 %v2619, 16
        %v2817 = vrot.slane %v2815, 4
        %v2818 = vshll.u32 %v2619, 16
        %v2820 = vrot.slane %v2818, 5
        %v2821 = vor.u32 %v2817, %v2820
        %v2822 = vrot.slane %v2821, 4
        %v2824 = vshll.u32 %v2620, 16
        %v2826 = vrot.slane %v2824, 5
        %v2827 = vsel %vm1130, %v2822, %v2826
        %v2828 = vshrl.u32 %v2620, 16
        %v2830 = vrot.slane %v2828, 4
        %v2831 = vor.u32 %v2830, %v2826
        %v2832 = vrot.slane %v2831, 4
        %v2834 = vshll.u32 %v2621, 16
        %v2836 = vrot.slane %v2834, 5
        %v2837 = vsel %vm1130, %v2832, %v2836
        %v2839 = vshrl.u32 %v2622, 16
        %v2841 = vrot.slane %v2839, 4
        %v2842 = vshll.u32 %v2622, 16
        %v2844 = vrot.slane %v2842, 5
        %v2845 = vor.u32 %v2841, %v2844
        %v2846 = vrot.slane %v2845, 4
        %v2848 = vshll.u32 %v2623, 16
        %v2850 = vrot.slane %v2848, 5
        %v2851 = vsel %vm1130, %v2846, %v2850
        %v2852 = vshrl.u32 %v2623, 16
        %v2854 = vrot.slane %v2852, 4
        %v2855 = vor.u32 %v2854, %v2850
        %v2856 = vrot.slane %v2855, 4
        %v2858 = vshll.u32 %v2624, 16
        %v2860 = vrot.slane %v2858, 5
        %v2861 = vsel %vm1130, %v2856, %v2860
        %v2863 = vshrl.u32 %v2625, 16
        %v2865 = vrot.slane %v2863, 4
        %v2866 = vshll.u32 %v2625, 16
        %v2868 = vrot.slane %v2866, 5
        %v2869 = vor.u32 %v2865, %v2868
        %v2870 = vrot.slane %v2869, 4
        %v2872 = vshll.u32 %v2626, 16
        %v2874 = vrot.slane %v2872, 5
        %v2875 = vsel %vm1130, %v2870, %v2874
        %v2876 = vshrl.u32 %v2626, 16
        %v2878 = vrot.slane %v2876, 4
        %v2879 = vor.u32 %v2878, %v2874
        %v2880 = vrot.slane %v2879, 4
        %v2882 = vshll.u32 %v2627, 16
        %v2884 = vrot.slane %v2882, 5
        %v2885 = vsel %vm1130, %v2880, %v2884
        %v2887 = vshrl.u32 %v2628, 16
        %v2889 = vrot.slane %v2887, 4
        %v2890 = vshll.u32 %v2628, 16
        %v2892 = vrot.slane %v2890, 5
        %v2893 = vor.u32 %v2889, %v2892
        %v2894 = vrot.slane %v2893, 4
        %v2896 = vshll.u32 %v2629, 16
        %v2898 = vrot.slane %v2896, 5
        %v2899 = vsel %vm1130, %v2894, %v2898
        %v2900 = vshrl.u32 %v2629, 16
        %v2902 = vrot.slane %v2900, 4
        %v2903 = vor.u32 %v2902, %v2898
        %v2904 = vrot.slane %v2903, 4
        %v2906 = vshll.u32 %v2630, 16
        %v2908 = vrot.slane %v2906, 5
        %v2909 = vsel %vm1130, %v2904, %v2908
        %v2911 = vshrl.u32 %v2631, 16
        %v2913 = vrot.slane %v2911, 4
        %v2914 = vshll.u32 %v2631, 16
        %v2916 = vrot.slane %v2914, 5
        %v2917 = vor.u32 %v2913, %v2916
        %v2918 = vrot.slane %v2917, 4
        %v2920 = vshll.u32 %v2632, 16
        %v2922 = vrot.slane %v2920, 5
        %v2923 = vsel %vm1130, %v2918, %v2922
        %v2924 = vshrl.u32 %v2632, 16
        %v2926 = vrot.slane %v2924, 4
        %v2927 = vor.u32 %v2926, %v2922
        %v2928 = vrot.slane %v2927, 4
        %v2930 = vshll.u32 %v2633, 16
        %v2932 = vrot.slane %v2930, 5
        %v2933 = vsel %vm1130, %v2928, %v2932
        %v2935 = vshrl.u32 %v2634, 16
        %v2937 = vrot.slane %v2935, 4
        %v2938 = vshll.u32 %v2634, 16
        %v2940 = vrot.slane %v2938, 5
        %v2941 = vor.u32 %v2937, %v2940
        %v2942 = vrot.slane %v2941, 4
        %v2944 = vshll.u32 %v2635, 16
        %v2946 = vrot.slane %v2944, 5
        %v2947 = vsel %vm1130, %v2942, %v2946
        %v2948 = vshrl.u32 %v2635, 16
        %v2950 = vrot.slane %v2948, 4
        %v2951 = vor.u32 %v2950, %v2946
        %v2952 = vrot.slane %v2951, 4
        %v2954 = vshll.u32 %v2636, 16
        %v2956 = vrot.slane %v2954, 5
        %v2957 = vsel %vm1130, %v2952, %v2956
        %v2959 = vshrl.u32 %v2637, 16
        %v2961 = vrot.slane %v2959, 4
        %v2962 = vshll.u32 %v2637, 16
        %v2964 = vrot.slane %v2962, 5
        %v2965 = vor.u32 %v2961, %v2964
        %v2966 = vrot.slane %v2965, 4
        %v2968 = vshll.u32 %v2638, 16
        %v2970 = vrot.slane %v2968, 5
        %v2971 = vsel %vm1130, %v2966, %v2970
        %v2972 = vshrl.u32 %v2638, 16
        %v2974 = vrot.slane %v2972, 4
        %v2975 = vor.u32 %v2974, %v2970
        %v2976 = vrot.slane %v2975, 4
        %v2978 = vshll.u32 %v2639, 16
        %v2980 = vrot.slane %v2978, 5
        %v2981 = vsel %vm1130, %v2976, %v2980
        %v2983 = vshrl.u32 %v2640, 16
        %v2985 = vrot.slane %v2983, 4
        %v2986 = vshll.u32 %v2640, 16
        %v2988 = vrot.slane %v2986, 5
        %v2989 = vor.u32 %v2985, %v2988
        %v2990 = vrot.slane %v2989, 4
        %v2992 = vshll.u32 %v2641, 16
        %v2994 = vrot.slane %v2992, 5
        %v2995 = vsel %vm1130, %v2990, %v2994
        %v2996 = vshrl.u32 %v2641, 16
        %v2998 = vrot.slane %v2996, 4
        %v2999 = vor.u32 %v2998, %v2994
        %v3000 = vrot.slane %v2999, 4
        %v3002 = vshll.u32 %v2642, 16
        %v3004 = vrot.slane %v3002, 5
        %v3005 = vsel %vm1130, %v3000, %v3004
        %v3007 = vshrl.u32 %v2643, 16
        %v3009 = vrot.slane %v3007, 4
        %v3010 = vshll.u32 %v2643, 16
        %v3012 = vrot.slane %v3010, 5
        %v3013 = vor.u32 %v3009, %v3012
        %v3014 = vrot.slane %v3013, 4
        %v3016 = vshll.u32 %v2644, 16
        %v3018 = vrot.slane %v3016, 5
        %v3019 = vsel %vm1130, %v3014, %v3018
        %v3020 = vshrl.u32 %v2644, 16
        %v3022 = vrot.slane %v3020, 4
        %v3023 = vor.u32 %v3022, %v3018
        %v3024 = vrot.slane %v3023, 4
        %v3026 = vshll.u32 %v2645, 16
        %v3028 = vrot.slane %v3026, 5
        %v3029 = vsel %vm1130, %v3024, %v3028
        %s3030 = scalar_lea.vmem %s3, 16
        %v3031 = vld [vmem:[%s3030] sm:$0xf]
        %v3032 = vunpack.c.l.b16 %v2659
        %v3033 = vunpack.c.l.b16 %v2669
        %v3034 = vunpack.c.l.b16 %v2683
        %v3035 = vunpack.c.l.b16 %v2693
        %v3036 = vunpack.c.l.b16 %v2707
        %v3037 = vunpack.c.l.b16 %v2717
        %v3038 = vunpack.c.l.b16 %v2731
        %v3039 = vunpack.c.l.b16 %v2741
        %v3040 = vunpack.c.l.b16 %v2755
        %v3041 = vunpack.c.l.b16 %v2765
        %v3042 = vunpack.c.l.b16 %v2779
        %v3043 = vunpack.c.l.b16 %v2789
        %v3044 = vunpack.c.l.b16 %v2803
        %v3045 = vunpack.c.l.b16 %v2813
        %v3046 = vunpack.c.l.b16 %v2827
        %v3047 = vunpack.c.l.b16 %v2837
        %v3048 = vunpack.c.l.b16 %v2851
        %v3049 = vunpack.c.l.b16 %v2861
        %v3050 = vunpack.c.l.b16 %v2875
        %v3051 = vunpack.c.l.b16 %v2885
        %v3052 = vunpack.c.l.b16 %v2899
        %v3053 = vunpack.c.l.b16 %v2909
        %v3054 = vunpack.c.l.b16 %v2923
        %v3055 = vunpack.c.l.b16 %v2933
        %v3056 = vunpack.c.l.b16 %v2947
        %v3057 = vunpack.c.l.b16 %v2957
        %v3058 = vunpack.c.l.b16 %v2971
        %v3059 = vunpack.c.l.b16 %v2981
        %v3060 = vunpack.c.l.b16 %v2995
        %v3061 = vunpack.c.l.b16 %v3005
        %v3062 = vunpack.c.l.b16 %v3019
        %v3063 = vunpack.c.l.b16 %v3029
        %v3064 = vpack.c.b16 %v3033, %v3032
        %v3065 = vpack.c.b16 %v3035, %v3034
        %v3066 = vpack.c.b16 %v3037, %v3036
        %v3067 = vpack.c.b16 %v3039, %v3038
        %v3068 = vpack.c.b16 %v3041, %v3040
        %v3069 = vpack.c.b16 %v3043, %v3042
        %v3070 = vpack.c.b16 %v3045, %v3044
        %v3071 = vpack.c.b16 %v3047, %v3046
        %v3072 = vpack.c.b16 %v3049, %v3048
        %v3073 = vpack.c.b16 %v3051, %v3050
        %v3074 = vpack.c.b16 %v3053, %v3052
        %v3075 = vpack.c.b16 %v3055, %v3054
        %v3076 = vpack.c.b16 %v3057, %v3056
        %v3077 = vpack.c.b16 %v3059, %v3058
        %v3078 = vpack.c.b16 %v3061, %v3060
        %v3079 = vpack.c.b16 %v3063, %v3062
        %v3081 = vsel %vm1565, %v3064, 0
        %v3084 = vsel %vm1565, %v3065, 0
        %v3087 = vsel %vm1565, %v3066, 0
        %v3090 = vsel %vm1565, %v3067, 0
        %v3093 = vsel %vm1565, %v3068, 0
        %v3096 = vsel %vm1565, %v3069, 0
        %v3099 = vsel %vm1565, %v3070, 0
        %v3102 = vsel %vm1565, %v3071, 0
        %v3105 = vsel %vm1565, %v3072, 0
        %v3108 = vsel %vm1565, %v3073, 0
        %v3111 = vsel %vm1565, %v3074, 0
        %v3114 = vsel %vm1565, %v3075, 0
        %v3117 = vsel %vm1565, %v3076, 0
        %v3120 = vsel %vm1565, %v3077, 0
        %v3123 = vsel %vm1565, %v3078, 0
        %v3126 = vsel %vm1565, %v3079, 0
        %v3129 = vsel %vm1614, %v3031, 0
        %3131 = vmatpush.bf16.msra.mxu0 0
        %3132 = vmatpush.bf16.msra.mxu0 0
        %3133 = vmatpush.bf16.msra.mxu0 0
        %3134 = vmatpush.bf16.msra.mxu0 0
        %3135 = vmatpush.bf16.msra.mxu0 0
        %3136 = vmatpush.bf16.msra.mxu0 0
        %3137 = vmatpush.bf16.msra.mxu0 0
        %3138 = vmatpush.bf16.msra.mxu0 %v3129
        %3139 = vmatmul.bf16.gmra.mxu0 %v3081
        %v3140 = vpop.f32.mrf.mxu0
        %v3141 = vadd.f32 0.0, %v3140
        %v3142 = vpop.f32.mrf.mxu0
        %v3143 = vadd.f32 0.0, %v3142
        %3144 = vmatmul.bf16.gmra.mxu0 %v3084
        %v3145 = vpop.f32.mrf.mxu0
        %v3146 = vadd.f32 0.0, %v3145
        %v3147 = vpop.f32.mrf.mxu0
        %v3148 = vadd.f32 0.0, %v3147
        %3149 = vmatmul.bf16.gmra.mxu0 %v3087
        %v3150 = vpop.f32.mrf.mxu0
        %v3151 = vadd.f32 0.0, %v3150
        %v3152 = vpop.f32.mrf.mxu0
        %v3153 = vadd.f32 0.0, %v3152
        %3154 = vmatmul.bf16.gmra.mxu0 %v3090
        %v3155 = vpop.f32.mrf.mxu0
        %v3156 = vadd.f32 0.0, %v3155
        %v3157 = vpop.f32.mrf.mxu0
        %v3158 = vadd.f32 0.0, %v3157
        %3159 = vmatmul.bf16.gmra.mxu0 %v3093
        %v3160 = vpop.f32.mrf.mxu0
        %v3161 = vadd.f32 0.0, %v3160
        %v3162 = vpop.f32.mrf.mxu0
        %v3163 = vadd.f32 0.0, %v3162
        %3164 = vmatmul.bf16.gmra.mxu0 %v3096
        %v3165 = vpop.f32.mrf.mxu0
        %v3166 = vadd.f32 0.0, %v3165
        %v3167 = vpop.f32.mrf.mxu0
        %v3168 = vadd.f32 0.0, %v3167
        %3169 = vmatmul.bf16.gmra.mxu0 %v3099
        %v3170 = vpop.f32.mrf.mxu0
        %v3171 = vadd.f32 0.0, %v3170
        %v3172 = vpop.f32.mrf.mxu0
        %v3173 = vadd.f32 0.0, %v3172
        %3174 = vmatmul.bf16.gmra.mxu0 %v3102
        %v3175 = vpop.f32.mrf.mxu0
        %v3176 = vadd.f32 0.0, %v3175
        %v3177 = vpop.f32.mrf.mxu0
        %v3178 = vadd.f32 0.0, %v3177
        %3179 = vmatmul.bf16.gmra.mxu0 %v3105
        %v3180 = vpop.f32.mrf.mxu0
        %v3181 = vadd.f32 0.0, %v3180
        %v3182 = vpop.f32.mrf.mxu0
        %v3183 = vadd.f32 0.0, %v3182
        %3184 = vmatmul.bf16.gmra.mxu0 %v3108
        %v3185 = vpop.f32.mrf.mxu0
        %v3186 = vadd.f32 0.0, %v3185
        %v3187 = vpop.f32.mrf.mxu0
        %v3188 = vadd.f32 0.0, %v3187
        %3189 = vmatmul.bf16.gmra.mxu0 %v3111
        %v3190 = vpop.f32.mrf.mxu0
        %v3191 = vadd.f32 0.0, %v3190
        %v3192 = vpop.f32.mrf.mxu0
        %v3193 = vadd.f32 0.0, %v3192
        %3194 = vmatmul.bf16.gmra.mxu0 %v3114
        %v3195 = vpop.f32.mrf.mxu0
        %v3196 = vadd.f32 0.0, %v3195
        %v3197 = vpop.f32.mrf.mxu0
        %v3198 = vadd.f32 0.0, %v3197
        %3199 = vmatmul.bf16.gmra.mxu0 %v3117
        %v3200 = vpop.f32.mrf.mxu0
        %v3201 = vadd.f32 0.0, %v3200
        %v3202 = vpop.f32.mrf.mxu0
        %v3203 = vadd.f32 0.0, %v3202
        %3204 = vmatmul.bf16.gmra.mxu0 %v3120
        %v3205 = vpop.f32.mrf.mxu0
        %v3206 = vadd.f32 0.0, %v3205
        %v3207 = vpop.f32.mrf.mxu0
        %v3208 = vadd.f32 0.0, %v3207
        %3209 = vmatmul.bf16.gmra.mxu0 %v3123
        %v3210 = vpop.f32.mrf.mxu0
        %v3211 = vadd.f32 0.0, %v3210
        %v3212 = vpop.f32.mrf.mxu0
        %v3213 = vadd.f32 0.0, %v3212
        %3214 = vmatmul.bf16.gmra.mxu0 %v3126
        %v3215 = vpop.f32.mrf.mxu0
        %v3216 = vadd.f32 0.0, %v3215
        %v3217 = vpop.f32.mrf.mxu0
        %v3218 = vadd.f32 0.0, %v3217
        %3219 = vdwg.mxu0
        %v3220 = vadd.f32 %v2566, %v3141
        %v3221 = vadd.f32 %v2567, %v3143
        %v3222 = vadd.f32 %v2568, %v3146
        %v3223 = vadd.f32 %v2569, %v3148
        %v3224 = vadd.f32 %v2570, %v3151
        %v3225 = vadd.f32 %v2571, %v3153
        %v3226 = vadd.f32 %v2572, %v3156
        %v3227 = vadd.f32 %v2573, %v3158
        %v3228 = vadd.f32 %v2574, %v3161
        %v3229 = vadd.f32 %v2575, %v3163
        %v3230 = vadd.f32 %v2576, %v3166
        %v3231 = vadd.f32 %v2577, %v3168
        %v3232 = vadd.f32 %v2578, %v3171
        %v3233 = vadd.f32 %v2579, %v3173
        %v3234 = vadd.f32 %v2580, %v3176
        %v3235 = vadd.f32 %v2581, %v3178
        %v3236 = vadd.f32 %v2582, %v3181
        %v3237 = vadd.f32 %v2583, %v3183
        %v3238 = vadd.f32 %v2584, %v3186
        %v3239 = vadd.f32 %v2585, %v3188
        %v3240 = vadd.f32 %v2586, %v3191
        %v3241 = vadd.f32 %v2587, %v3193
        %v3242 = vadd.f32 %v2588, %v3196
        %v3243 = vadd.f32 %v2589, %v3198
        %v3244 = vadd.f32 %v2590, %v3201
        %v3245 = vadd.f32 %v2591, %v3203
        %v3246 = vadd.f32 %v2592, %v3206
        %v3247 = vadd.f32 %v2593, %v3208
        %v3248 = vadd.f32 %v2594, %v3211
        %v3249 = vadd.f32 %v2595, %v3213
        %v3250 = vadd.f32 %v2596, %v3216
        %v3251 = vadd.f32 %v2597, %v3218
        %v3252 = vld [vmem:[%s961] sm:$0xe]
        %v3253 = vld [vmem:[%s961 + $0xc] sm:$0xe]
        %v3254 = vld [vmem:[%s961 + $0x18] sm:$0xe]
        %v3255 = vld [vmem:[%s961 + $0x24] sm:$0xe]
        %v3256 = vld [vmem:[%s961 + $0x30] sm:$0xe]
        %v3257 = vld [vmem:[%s961 + $0x3c] sm:$0xe]
        %v3258 = vld [vmem:[%s961 + $0x48] sm:$0xe]
        %v3259 = vld [vmem:[%s961 + $0x54] sm:$0xe]
        %v3260 = vld [vmem:[%s961 + $0x60] sm:$0xe]
        %v3261 = vld [vmem:[%s961 + $0x6c] sm:$0xe]
        %v3262 = vld [vmem:[%s961 + $0x78] sm:$0xe]
        %v3263 = vld [vmem:[%s961 + $0x84] sm:$0xe]
        %v3264 = vld [vmem:[%s961 + $0x90] sm:$0xe]
        %v3265 = vld [vmem:[%s961 + $0x9c] sm:$0xe]
        %v3266 = vld [vmem:[%s961 + $0xa8] sm:$0xe]
        %v3267 = vld [vmem:[%s961 + $0xb4] sm:$0xe]
        %v3316 = vrot.slane %v3252, 5
        %v3317 = vrot.slane %v3316, 4
        %v3318 = vrot.slane %v2599, 5
        %v3319 = vsel %vm1977, %v3317, %v3318
        %v3320 = vrot.slane %v3318, 4
        %v3321 = vrot.slane %v2600, 5
        %v3322 = vsel %vm1977, %v3320, %v3321
        %v3323 = vrot.slane %v3253, 5
        %v3324 = vrot.slane %v3323, 4
        %v3325 = vrot.slane %v2602, 5
        %v3326 = vsel %vm1977, %v3324, %v3325
        %v3327 = vrot.slane %v3325, 4
        %v3328 = vrot.slane %v2603, 5
        %v3329 = vsel %vm1977, %v3327, %v3328
        %v3330 = vrot.slane %v3254, 5
        %v3331 = vrot.slane %v3330, 4
        %v3332 = vrot.slane %v2605, 5
        %v3333 = vsel %vm1977, %v3331, %v3332
        %v3334 = vrot.slane %v3332, 4
        %v3335 = vrot.slane %v2606, 5
        %v3336 = vsel %vm1977, %v3334, %v3335
        %v3337 = vrot.slane %v3255, 5
        %v3338 = vrot.slane %v3337, 4
        %v3339 = vrot.slane %v2608, 5
        %v3340 = vsel %vm1977, %v3338, %v3339
        %v3341 = vrot.slane %v3339, 4
        %v3342 = vrot.slane %v2609, 5
        %v3343 = vsel %vm1977, %v3341, %v3342
        %v3344 = vrot.slane %v3256, 5
        %v3345 = vrot.slane %v3344, 4
        %v3346 = vrot.slane %v2611, 5
        %v3347 = vsel %vm1977, %v3345, %v3346
        %v3348 = vrot.slane %v3346, 4
        %v3349 = vrot.slane %v2612, 5
        %v3350 = vsel %vm1977, %v3348, %v3349
        %v3351 = vrot.slane %v3257, 5
        %v3352 = vrot.slane %v3351, 4
        %v3353 = vrot.slane %v2614, 5
        %v3354 = vsel %vm1977, %v3352, %v3353
        %v3355 = vrot.slane %v3353, 4
        %v3356 = vrot.slane %v2615, 5
        %v3357 = vsel %vm1977, %v3355, %v3356
        %v3358 = vrot.slane %v3258, 5
        %v3359 = vrot.slane %v3358, 4
        %v3360 = vrot.slane %v2617, 5
        %v3361 = vsel %vm1977, %v3359, %v3360
        %v3362 = vrot.slane %v3360, 4
        %v3363 = vrot.slane %v2618, 5
        %v3364 = vsel %vm1977, %v3362, %v3363
        %v3365 = vrot.slane %v3259, 5
        %v3366 = vrot.slane %v3365, 4
        %v3367 = vrot.slane %v2620, 5
        %v3368 = vsel %vm1977, %v3366, %v3367
        %v3369 = vrot.slane %v3367, 4
        %v3370 = vrot.slane %v2621, 5
        %v3371 = vsel %vm1977, %v3369, %v3370
        %v3372 = vrot.slane %v3260, 5
        %v3373 = vrot.slane %v3372, 4
        %v3374 = vrot.slane %v2623, 5
        %v3375 = vsel %vm1977, %v3373, %v3374
        %v3376 = vrot.slane %v3374, 4
        %v3377 = vrot.slane %v2624, 5
        %v3378 = vsel %vm1977, %v3376, %v3377
        %v3379 = vrot.slane %v3261, 5
        %v3380 = vrot.slane %v3379, 4
        %v3381 = vrot.slane %v2626, 5
        %v3382 = vsel %vm1977, %v3380, %v3381
        %v3383 = vrot.slane %v3381, 4
        %v3384 = vrot.slane %v2627, 5
        %v3385 = vsel %vm1977, %v3383, %v3384
        %v3386 = vrot.slane %v3262, 5
        %v3387 = vrot.slane %v3386, 4
        %v3388 = vrot.slane %v2629, 5
        %v3389 = vsel %vm1977, %v3387, %v3388
        %v3390 = vrot.slane %v3388, 4
        %v3391 = vrot.slane %v2630, 5
        %v3392 = vsel %vm1977, %v3390, %v3391
        %v3393 = vrot.slane %v3263, 5
        %v3394 = vrot.slane %v3393, 4
        %v3395 = vrot.slane %v2632, 5
        %v3396 = vsel %vm1977, %v3394, %v3395
        %v3397 = vrot.slane %v3395, 4
        %v3398 = vrot.slane %v2633, 5
        %v3399 = vsel %vm1977, %v3397, %v3398
        %v3400 = vrot.slane %v3264, 5
        %v3401 = vrot.slane %v3400, 4
        %v3402 = vrot.slane %v2635, 5
        %v3403 = vsel %vm1977, %v3401, %v3402
        %v3404 = vrot.slane %v3402, 4
        %v3405 = vrot.slane %v2636, 5
        %v3406 = vsel %vm1977, %v3404, %v3405
        %v3407 = vrot.slane %v3265, 5
        %v3408 = vrot.slane %v3407, 4
        %v3409 = vrot.slane %v2638, 5
        %v3410 = vsel %vm1977, %v3408, %v3409
        %v3411 = vrot.slane %v3409, 4
        %v3412 = vrot.slane %v2639, 5
        %v3413 = vsel %vm1977, %v3411, %v3412
        %v3414 = vrot.slane %v3266, 5
        %v3415 = vrot.slane %v3414, 4
        %v3416 = vrot.slane %v2641, 5
        %v3417 = vsel %vm1977, %v3415, %v3416
        %v3418 = vrot.slane %v3416, 4
        %v3419 = vrot.slane %v2642, 5
        %v3420 = vsel %vm1977, %v3418, %v3419
        %v3421 = vrot.slane %v3267, 5
        %v3422 = vrot.slane %v3421, 4
        %v3423 = vrot.slane %v2644, 5
        %v3424 = vsel %vm1977, %v3422, %v3423
        %v3425 = vrot.slane %v3423, 4
        %v3426 = vrot.slane %v2645, 5
        %v3427 = vsel %vm1977, %v3425, %v3426
        %s3428 = scalar_lea.vmem %s3, 20
        %v3429 = vld [vmem:[%s3428] sm:$0xf]
        %v3430 = vunpack.c.l.b16 %v3319
        %v3431 = vunpack.c.l.b16 %v3322
        %v3432 = vunpack.c.l.b16 %v3326
        %v3433 = vunpack.c.l.b16 %v3329
        %v3434 = vunpack.c.l.b16 %v3333
        %v3435 = vunpack.c.l.b16 %v3336
        %v3436 = vunpack.c.l.b16 %v3340
        %v3437 = vunpack.c.l.b16 %v3343
        %v3438 = vunpack.c.l.b16 %v3347
        %v3439 = vunpack.c.l.b16 %v3350
        %v3440 = vunpack.c.l.b16 %v3354
        %v3441 = vunpack.c.l.b16 %v3357
        %v3442 = vunpack.c.l.b16 %v3361
        %v3443 = vunpack.c.l.b16 %v3364
        %v3444 = vunpack.c.l.b16 %v3368
        %v3445 = vunpack.c.l.b16 %v3371
        %v3446 = vunpack.c.l.b16 %v3375
        %v3447 = vunpack.c.l.b16 %v3378
        %v3448 = vunpack.c.l.b16 %v3382
        %v3449 = vunpack.c.l.b16 %v3385
        %v3450 = vunpack.c.l.b16 %v3389
        %v3451 = vunpack.c.l.b16 %v3392
        %v3452 = vunpack.c.l.b16 %v3396
        %v3453 = vunpack.c.l.b16 %v3399
        %v3454 = vunpack.c.l.b16 %v3403
        %v3455 = vunpack.c.l.b16 %v3406
        %v3456 = vunpack.c.l.b16 %v3410
        %v3457 = vunpack.c.l.b16 %v3413
        %v3458 = vunpack.c.l.b16 %v3417
        %v3459 = vunpack.c.l.b16 %v3420
        %v3460 = vunpack.c.l.b16 %v3424
        %v3461 = vunpack.c.l.b16 %v3427
        %v3462 = vpack.c.b16 %v3431, %v3430
        %v3463 = vpack.c.b16 %v3433, %v3432
        %v3464 = vpack.c.b16 %v3435, %v3434
        %v3465 = vpack.c.b16 %v3437, %v3436
        %v3466 = vpack.c.b16 %v3439, %v3438
        %v3467 = vpack.c.b16 %v3441, %v3440
        %v3468 = vpack.c.b16 %v3443, %v3442
        %v3469 = vpack.c.b16 %v3445, %v3444
        %v3470 = vpack.c.b16 %v3447, %v3446
        %v3471 = vpack.c.b16 %v3449, %v3448
        %v3472 = vpack.c.b16 %v3451, %v3450
        %v3473 = vpack.c.b16 %v3453, %v3452
        %v3474 = vpack.c.b16 %v3455, %v3454
        %v3475 = vpack.c.b16 %v3457, %v3456
        %v3476 = vpack.c.b16 %v3459, %v3458
        %v3477 = vpack.c.b16 %v3461, %v3460
        %v3479 = vsel %vm1565, %v3462, 0
        %v3482 = vsel %vm1565, %v3463, 0
        %v3485 = vsel %vm1565, %v3464, 0
        %v3488 = vsel %vm1565, %v3465, 0
        %v3491 = vsel %vm1565, %v3466, 0
        %v3494 = vsel %vm1565, %v3467, 0
        %v3497 = vsel %vm1565, %v3468, 0
        %v3500 = vsel %vm1565, %v3469, 0
        %v3503 = vsel %vm1565, %v3470, 0
        %v3506 = vsel %vm1565, %v3471, 0
        %v3509 = vsel %vm1565, %v3472, 0
        %v3512 = vsel %vm1565, %v3473, 0
        %v3515 = vsel %vm1565, %v3474, 0
        %v3518 = vsel %vm1565, %v3475, 0
        %v3521 = vsel %vm1565, %v3476, 0
        %v3524 = vsel %vm1565, %v3477, 0
        %v3527 = vsel %vm1614, %v3429, 0
        %3529 = vmatpush.bf16.msra.mxu0 0
        %3530 = vmatpush.bf16.msra.mxu0 0
        %3531 = vmatpush.bf16.msra.mxu0 0
        %3532 = vmatpush.bf16.msra.mxu0 0
        %3533 = vmatpush.bf16.msra.mxu0 0
        %3534 = vmatpush.bf16.msra.mxu0 0
        %3535 = vmatpush.bf16.msra.mxu0 0
        %3536 = vmatpush.bf16.msra.mxu0 %v3527
        %3537 = vmatmul.bf16.gmra.mxu0 %v3479
        %v3538 = vpop.f32.mrf.mxu0
        %v3539 = vadd.f32 0.0, %v3538
        %v3540 = vpop.f32.mrf.mxu0
        %v3541 = vadd.f32 0.0, %v3540
        %3542 = vmatmul.bf16.gmra.mxu0 %v3482
        %v3543 = vpop.f32.mrf.mxu0
        %v3544 = vadd.f32 0.0, %v3543
        %v3545 = vpop.f32.mrf.mxu0
        %v3546 = vadd.f32 0.0, %v3545
        %3547 = vmatmul.bf16.gmra.mxu0 %v3485
        %v3548 = vpop.f32.mrf.mxu0
        %v3549 = vadd.f32 0.0, %v3548
        %v3550 = vpop.f32.mrf.mxu0
        %v3551 = vadd.f32 0.0, %v3550
        %3552 = vmatmul.bf16.gmra.mxu0 %v3488
        %v3553 = vpop.f32.mrf.mxu0
        %v3554 = vadd.f32 0.0, %v3553
        %v3555 = vpop.f32.mrf.mxu0
        %v3556 = vadd.f32 0.0, %v3555
        %3557 = vmatmul.bf16.gmra.mxu0 %v3491
        %v3558 = vpop.f32.mrf.mxu0
        %v3559 = vadd.f32 0.0, %v3558
        %v3560 = vpop.f32.mrf.mxu0
        %v3561 = vadd.f32 0.0, %v3560
        %3562 = vmatmul.bf16.gmra.mxu0 %v3494
        %v3563 = vpop.f32.mrf.mxu0
        %v3564 = vadd.f32 0.0, %v3563
        %v3565 = vpop.f32.mrf.mxu0
        %v3566 = vadd.f32 0.0, %v3565
        %3567 = vmatmul.bf16.gmra.mxu0 %v3497
        %v3568 = vpop.f32.mrf.mxu0
        %v3569 = vadd.f32 0.0, %v3568
        %v3570 = vpop.f32.mrf.mxu0
        %v3571 = vadd.f32 0.0, %v3570
        %3572 = vmatmul.bf16.gmra.mxu0 %v3500
        %v3573 = vpop.f32.mrf.mxu0
        %v3574 = vadd.f32 0.0, %v3573
        %v3575 = vpop.f32.mrf.mxu0
        %v3576 = vadd.f32 0.0, %v3575
        %3577 = vmatmul.bf16.gmra.mxu0 %v3503
        %v3578 = vpop.f32.mrf.mxu0
        %v3579 = vadd.f32 0.0, %v3578
        %v3580 = vpop.f32.mrf.mxu0
        %v3581 = vadd.f32 0.0, %v3580
        %3582 = vmatmul.bf16.gmra.mxu0 %v3506
        %v3583 = vpop.f32.mrf.mxu0
        %v3584 = vadd.f32 0.0, %v3583
        %v3585 = vpop.f32.mrf.mxu0
        %v3586 = vadd.f32 0.0, %v3585
        %3587 = vmatmul.bf16.gmra.mxu0 %v3509
        %v3588 = vpop.f32.mrf.mxu0
        %v3589 = vadd.f32 0.0, %v3588
        %v3590 = vpop.f32.mrf.mxu0
        %v3591 = vadd.f32 0.0, %v3590
        %3592 = vmatmul.bf16.gmra.mxu0 %v3512
        %v3593 = vpop.f32.mrf.mxu0
        %v3594 = vadd.f32 0.0, %v3593
        %v3595 = vpop.f32.mrf.mxu0
        %v3596 = vadd.f32 0.0, %v3595
        %3597 = vmatmul.bf16.gmra.mxu0 %v3515
        %v3598 = vpop.f32.mrf.mxu0
        %v3599 = vadd.f32 0.0, %v3598
        %v3600 = vpop.f32.mrf.mxu0
        %v3601 = vadd.f32 0.0, %v3600
        %3602 = vmatmul.bf16.gmra.mxu0 %v3518
        %v3603 = vpop.f32.mrf.mxu0
        %v3604 = vadd.f32 0.0, %v3603
        %v3605 = vpop.f32.mrf.mxu0
        %v3606 = vadd.f32 0.0, %v3605
        %3607 = vmatmul.bf16.gmra.mxu0 %v3521
        %v3608 = vpop.f32.mrf.mxu0
        %v3609 = vadd.f32 0.0, %v3608
        %v3610 = vpop.f32.mrf.mxu0
        %v3611 = vadd.f32 0.0, %v3610
        %3612 = vmatmul.bf16.gmra.mxu0 %v3524
        %v3613 = vpop.f32.mrf.mxu0
        %v3614 = vadd.f32 0.0, %v3613
        %v3615 = vpop.f32.mrf.mxu0
        %v3616 = vadd.f32 0.0, %v3615
        %3617 = vdwg.mxu0
        %v3618 = vadd.f32 %v3220, %v3539
        %v3619 = vadd.f32 %v3221, %v3541
        %v3620 = vadd.f32 %v3222, %v3544
        %v3621 = vadd.f32 %v3223, %v3546
        %v3622 = vadd.f32 %v3224, %v3549
        %v3623 = vadd.f32 %v3225, %v3551
        %v3624 = vadd.f32 %v3226, %v3554
        %v3625 = vadd.f32 %v3227, %v3556
        %v3626 = vadd.f32 %v3228, %v3559
        %v3627 = vadd.f32 %v3229, %v3561
        %v3628 = vadd.f32 %v3230, %v3564
        %v3629 = vadd.f32 %v3231, %v3566
        %v3630 = vadd.f32 %v3232, %v3569
        %v3631 = vadd.f32 %v3233, %v3571
        %v3632 = vadd.f32 %v3234, %v3574
        %v3633 = vadd.f32 %v3235, %v3576
        %v3634 = vadd.f32 %v3236, %v3579
        %v3635 = vadd.f32 %v3237, %v3581
        %v3636 = vadd.f32 %v3238, %v3584
        %v3637 = vadd.f32 %v3239, %v3586
        %v3638 = vadd.f32 %v3240, %v3589
        %v3639 = vadd.f32 %v3241, %v3591
        %v3640 = vadd.f32 %v3242, %v3594
        %v3641 = vadd.f32 %v3243, %v3596
        %v3642 = vadd.f32 %v3244, %v3599
        %v3643 = vadd.f32 %v3245, %v3601
        %v3644 = vadd.f32 %v3246, %v3604
        %v3645 = vadd.f32 %v3247, %v3606
        %v3646 = vadd.f32 %v3248, %v3609
        %v3647 = vadd.f32 %v3249, %v3611
        %v3648 = vadd.f32 %v3250, %v3614
        %v3649 = vadd.f32 %v3251, %v3616
        %s3650 = scalar_lea.vmem [#allocation2], 24
        %v3651 = vld [vmem:[%s3650] sm:$0xf]
        %v3652 = vld [vmem:[%s3650 + $0x4] sm:$0xf]
        %v3653 = vld [vmem:[%s3650 + $0xc] sm:$0xf]
        %v3654 = vld [vmem:[%s3650 + $0x10] sm:$0xf]
        %v3655 = vld [vmem:[%s3650 + $0x18] sm:$0xf]
        %v3656 = vld [vmem:[%s3650 + $0x1c] sm:$0xf]
        %v3657 = vld [vmem:[%s3650 + $0x24] sm:$0xf]
        %v3658 = vld [vmem:[%s3650 + $0x28] sm:$0xf]
        %v3659 = vld [vmem:[%s3650 + $0x30] sm:$0xf]
        %v3660 = vld [vmem:[%s3650 + $0x34] sm:$0xf]
        %v3661 = vld [vmem:[%s3650 + $0x3c] sm:$0xf]
        %v3662 = vld [vmem:[%s3650 + $0x40] sm:$0xf]
        %v3663 = vld [vmem:[%s3650 + $0x48] sm:$0xf]
        %v3664 = vld [vmem:[%s3650 + $0x4c] sm:$0xf]
        %v3665 = vld [vmem:[%s3650 + $0x54] sm:$0xf]
        %v3666 = vld [vmem:[%s3650 + $0x58] sm:$0xf]
        %v3667 = vld [vmem:[%s3650 + $0x60] sm:$0xf]
        %v3668 = vld [vmem:[%s3650 + $0x64] sm:$0xf]
        %v3669 = vld [vmem:[%s3650 + $0x6c] sm:$0xf]
        %v3670 = vld [vmem:[%s3650 + $0x70] sm:$0xf]
        %v3671 = vld [vmem:[%s3650 + $0x78] sm:$0xf]
        %v3672 = vld [vmem:[%s3650 + $0x7c] sm:$0xf]
        %v3673 = vld [vmem:[%s3650 + $0x84] sm:$0xf]
        %v3674 = vld [vmem:[%s3650 + $0x88] sm:$0xf]
        %v3675 = vld [vmem:[%s3650 + $0x90] sm:$0xf]
        %v3676 = vld [vmem:[%s3650 + $0x94] sm:$0xf]
        %v3677 = vld [vmem:[%s3650 + $0x9c] sm:$0xf]
        %v3678 = vld [vmem:[%s3650 + $0xa0] sm:$0xf]
        %v3679 = vld [vmem:[%s3650 + $0xa8] sm:$0xf]
        %v3680 = vld [vmem:[%s3650 + $0xac] sm:$0xf]
        %v3681 = vld [vmem:[%s3650 + $0xb4] sm:$0xf]
        %v3682 = vld [vmem:[%s3650 + $0xb8] sm:$0xf]
        %s3683 = scalar_lea.vmem %s3, 24
        %v3684 = vld [vmem:[%s3683] sm:$0xf]
        %v3717 = vunpack.c.l.b16 %v3651
        %v3718 = vunpack.c.l.b16 %v3652
        %v3719 = vunpack.c.l.b16 %v3653
        %v3720 = vunpack.c.l.b16 %v3654
        %v3721 = vunpack.c.l.b16 %v3655
        %v3722 = vunpack.c.l.b16 %v3656
        %v3723 = vunpack.c.l.b16 %v3657
        %v3724 = vunpack.c.l.b16 %v3658
        %v3725 = vunpack.c.l.b16 %v3659
        %v3726 = vunpack.c.l.b16 %v3660
        %v3727 = vunpack.c.l.b16 %v3661
        %v3728 = vunpack.c.l.b16 %v3662
        %v3729 = vunpack.c.l.b16 %v3663
        %v3730 = vunpack.c.l.b16 %v3664
        %v3731 = vunpack.c.l.b16 %v3665
        %v3732 = vunpack.c.l.b16 %v3666
        %v3733 = vunpack.c.l.b16 %v3667
        %v3734 = vunpack.c.l.b16 %v3668
        %v3735 = vunpack.c.l.b16 %v3669
        %v3736 = vunpack.c.l.b16 %v3670
        %v3737 = vunpack.c.l.b16 %v3671
        %v3738 = vunpack.c.l.b16 %v3672
        %v3739 = vunpack.c.l.b16 %v3673
        %v3740 = vunpack.c.l.b16 %v3674
        %v3741 = vunpack.c.l.b16 %v3675
        %v3742 = vunpack.c.l.b16 %v3676
        %v3743 = vunpack.c.l.b16 %v3677
        %v3744 = vunpack.c.l.b16 %v3678
        %v3745 = vunpack.c.l.b16 %v3679
        %v3746 = vunpack.c.l.b16 %v3680
        %v3747 = vunpack.c.l.b16 %v3681
        %v3748 = vunpack.c.l.b16 %v3682
        %v3749 = vpack.c.b16 %v3718, %v3717
        %v3750 = vpack.c.b16 %v3720, %v3719
        %v3751 = vpack.c.b16 %v3722, %v3721
        %v3752 = vpack.c.b16 %v3724, %v3723
        %v3753 = vpack.c.b16 %v3726, %v3725
        %v3754 = vpack.c.b16 %v3728, %v3727
        %v3755 = vpack.c.b16 %v3730, %v3729
        %v3756 = vpack.c.b16 %v3732, %v3731
        %v3757 = vpack.c.b16 %v3734, %v3733
        %v3758 = vpack.c.b16 %v3736, %v3735
        %v3759 = vpack.c.b16 %v3738, %v3737
        %v3760 = vpack.c.b16 %v3740, %v3739
        %v3761 = vpack.c.b16 %v3742, %v3741
        %v3762 = vpack.c.b16 %v3744, %v3743
        %v3763 = vpack.c.b16 %v3746, %v3745
        %v3764 = vpack.c.b16 %v3748, %v3747
        %v3766 = vsel %vm1565, %v3749, 0
        %v3769 = vsel %vm1565, %v3750, 0
        %v3772 = vsel %vm1565, %v3751, 0
        %v3775 = vsel %vm1565, %v3752, 0
        %v3778 = vsel %vm1565, %v3753, 0
        %v3781 = vsel %vm1565, %v3754, 0
        %v3784 = vsel %vm1565, %v3755, 0
        %v3787 = vsel %vm1565, %v3756, 0
        %v3790 = vsel %vm1565, %v3757, 0
        %v3793 = vsel %vm1565, %v3758, 0
        %v3796 = vsel %vm1565, %v3759, 0
        %v3799 = vsel %vm1565, %v3760, 0
        %v3802 = vsel %vm1565, %v3761, 0
        %v3805 = vsel %vm1565, %v3762, 0
        %v3808 = vsel %vm1565, %v3763, 0
        %v3811 = vsel %vm1565, %v3764, 0
        %v3814 = vsel %vm1614, %v3684, 0
        %3816 = vmatpush.bf16.msra.mxu0 0
        %3817 = vmatpush.bf16.msra.mxu0 0
        %3818 = vmatpush.bf16.msra.mxu0 0
        %3819 = vmatpush.bf16.msra.mxu0 0
        %3820 = vmatpush.bf16.msra.mxu0 0
        %3821 = vmatpush.bf16.msra.mxu0 0
        %3822 = vmatpush.bf16.msra.mxu0 0
        %3823 = vmatpush.bf16.msra.mxu0 %v3814
        %3824 = vmatmul.bf16.gmra.mxu0 %v3766
        %v3825 = vpop.f32.mrf.mxu0
        %v3826 = vadd.f32 0.0, %v3825
        %v3827 = vpop.f32.mrf.mxu0
        %v3828 = vadd.f32 0.0, %v3827
        %3829 = vmatmul.bf16.gmra.mxu0 %v3769
        %v3830 = vpop.f32.mrf.mxu0
        %v3831 = vadd.f32 0.0, %v3830
        %v3832 = vpop.f32.mrf.mxu0
        %v3833 = vadd.f32 0.0, %v3832
        %3834 = vmatmul.bf16.gmra.mxu0 %v3772
        %v3835 = vpop.f32.mrf.mxu0
        %v3836 = vadd.f32 0.0, %v3835
        %v3837 = vpop.f32.mrf.mxu0
        %v3838 = vadd.f32 0.0, %v3837
        %3839 = vmatmul.bf16.gmra.mxu0 %v3775
        %v3840 = vpop.f32.mrf.mxu0
        %v3841 = vadd.f32 0.0, %v3840
        %v3842 = vpop.f32.mrf.mxu0
        %v3843 = vadd.f32 0.0, %v3842
        %3844 = vmatmul.bf16.gmra.mxu0 %v3778
        %v3845 = vpop.f32.mrf.mxu0
        %v3846 = vadd.f32 0.0, %v3845
        %v3847 = vpop.f32.mrf.mxu0
        %v3848 = vadd.f32 0.0, %v3847
        %3849 = vmatmul.bf16.gmra.mxu0 %v3781
        %v3850 = vpop.f32.mrf.mxu0
        %v3851 = vadd.f32 0.0, %v3850
        %v3852 = vpop.f32.mrf.mxu0
        %v3853 = vadd.f32 0.0, %v3852
        %3854 = vmatmul.bf16.gmra.mxu0 %v3784
        %v3855 = vpop.f32.mrf.mxu0
        %v3856 = vadd.f32 0.0, %v3855
        %v3857 = vpop.f32.mrf.mxu0
        %v3858 = vadd.f32 0.0, %v3857
        %3859 = vmatmul.bf16.gmra.mxu0 %v3787
        %v3860 = vpop.f32.mrf.mxu0
        %v3861 = vadd.f32 0.0, %v3860
        %v3862 = vpop.f32.mrf.mxu0
        %v3863 = vadd.f32 0.0, %v3862
        %3864 = vmatmul.bf16.gmra.mxu0 %v3790
        %v3865 = vpop.f32.mrf.mxu0
        %v3866 = vadd.f32 0.0, %v3865
        %v3867 = vpop.f32.mrf.mxu0
        %v3868 = vadd.f32 0.0, %v3867
        %3869 = vmatmul.bf16.gmra.mxu0 %v3793
        %v3870 = vpop.f32.mrf.mxu0
        %v3871 = vadd.f32 0.0, %v3870
        %v3872 = vpop.f32.mrf.mxu0
        %v3873 = vadd.f32 0.0, %v3872
        %3874 = vmatmul.bf16.gmra.mxu0 %v3796
        %v3875 = vpop.f32.mrf.mxu0
        %v3876 = vadd.f32 0.0, %v3875
        %v3877 = vpop.f32.mrf.mxu0
        %v3878 = vadd.f32 0.0, %v3877
        %3879 = vmatmul.bf16.gmra.mxu0 %v3799
        %v3880 = vpop.f32.mrf.mxu0
        %v3881 = vadd.f32 0.0, %v3880
        %v3882 = vpop.f32.mrf.mxu0
        %v3883 = vadd.f32 0.0, %v3882
        %3884 = vmatmul.bf16.gmra.mxu0 %v3802
        %v3885 = vpop.f32.mrf.mxu0
        %v3886 = vadd.f32 0.0, %v3885
        %v3887 = vpop.f32.mrf.mxu0
        %v3888 = vadd.f32 0.0, %v3887
        %3889 = vmatmul.bf16.gmra.mxu0 %v3805
        %v3890 = vpop.f32.mrf.mxu0
        %v3891 = vadd.f32 0.0, %v3890
        %v3892 = vpop.f32.mrf.mxu0
        %v3893 = vadd.f32 0.0, %v3892
        %3894 = vmatmul.bf16.gmra.mxu0 %v3808
        %v3895 = vpop.f32.mrf.mxu0
        %v3896 = vadd.f32 0.0, %v3895
        %v3897 = vpop.f32.mrf.mxu0
        %v3898 = vadd.f32 0.0, %v3897
        %3899 = vmatmul.bf16.gmra.mxu0 %v3811
        %v3900 = vpop.f32.mrf.mxu0
        %v3901 = vadd.f32 0.0, %v3900
        %v3902 = vpop.f32.mrf.mxu0
        %v3903 = vadd.f32 0.0, %v3902
        %3904 = vdwg.mxu0
        %v3905 = vadd.f32 %v3618, %v3826
        %v3906 = vadd.f32 %v3619, %v3828
        %v3907 = vadd.f32 %v3620, %v3831
        %v3908 = vadd.f32 %v3621, %v3833
        %v3909 = vadd.f32 %v3622, %v3836
        %v3910 = vadd.f32 %v3623, %v3838
        %v3911 = vadd.f32 %v3624, %v3841
        %v3912 = vadd.f32 %v3625, %v3843
        %v3913 = vadd.f32 %v3626, %v3846
        %v3914 = vadd.f32 %v3627, %v3848
        %v3915 = vadd.f32 %v3628, %v3851
        %v3916 = vadd.f32 %v3629, %v3853
        %v3917 = vadd.f32 %v3630, %v3856
        %v3918 = vadd.f32 %v3631, %v3858
        %v3919 = vadd.f32 %v3632, %v3861
        %v3920 = vadd.f32 %v3633, %v3863
        %v3921 = vadd.f32 %v3634, %v3866
        %v3922 = vadd.f32 %v3635, %v3868
        %v3923 = vadd.f32 %v3636, %v3871
        %v3924 = vadd.f32 %v3637, %v3873
        %v3925 = vadd.f32 %v3638, %v3876
        %v3926 = vadd.f32 %v3639, %v3878
        %v3927 = vadd.f32 %v3640, %v3881
        %v3928 = vadd.f32 %v3641, %v3883
        %v3929 = vadd.f32 %v3642, %v3886
        %v3930 = vadd.f32 %v3643, %v3888
        %v3931 = vadd.f32 %v3644, %v3891
        %v3932 = vadd.f32 %v3645, %v3893
        %v3933 = vadd.f32 %v3646, %v3896
        %v3934 = vadd.f32 %v3647, %v3898
        %v3935 = vadd.f32 %v3648, %v3901
        %v3936 = vadd.f32 %v3649, %v3903
        %v3937 = vld [vmem:[%s3650] sm:$0xf]
        %v3938 = vld [vmem:[%s3650 + $0x4] sm:$0xf]
        %v3939 = vld [vmem:[%s3650 + $0x8] sm:$0x1]
        %v3940 = vld [vmem:[%s3650 + $0xc] sm:$0xf]
        %v3941 = vld [vmem:[%s3650 + $0x10] sm:$0xf]
        %v3942 = vld [vmem:[%s3650 + $0x14] sm:$0x1]
        %v3943 = vld [vmem:[%s3650 + $0x18] sm:$0xf]
        %v3944 = vld [vmem:[%s3650 + $0x1c] sm:$0xf]
        %v3945 = vld [vmem:[%s3650 + $0x20] sm:$0x1]
        %v3946 = vld [vmem:[%s3650 + $0x24] sm:$0xf]
        %v3947 = vld [vmem:[%s3650 + $0x28] sm:$0xf]
        %v3948 = vld [vmem:[%s3650 + $0x2c] sm:$0x1]
        %v3949 = vld [vmem:[%s3650 + $0x30] sm:$0xf]
        %v3950 = vld [vmem:[%s3650 + $0x34] sm:$0xf]
        %v3951 = vld [vmem:[%s3650 + $0x38] sm:$0x1]
        %v3952 = vld [vmem:[%s3650 + $0x3c] sm:$0xf]
        %v3953 = vld [vmem:[%s3650 + $0x40] sm:$0xf]
        %v3954 = vld [vmem:[%s3650 + $0x44] sm:$0x1]
        %v3955 = vld [vmem:[%s3650 + $0x48] sm:$0xf]
        %v3956 = vld [vmem:[%s3650 + $0x4c] sm:$0xf]
        %v3957 = vld [vmem:[%s3650 + $0x50] sm:$0x1]
        %v3958 = vld [vmem:[%s3650 + $0x54] sm:$0xf]
        %v3959 = vld [vmem:[%s3650 + $0x58] sm:$0xf]
        %v3960 = vld [vmem:[%s3650 + $0x5c] sm:$0x1]
        %v3961 = vld [vmem:[%s3650 + $0x60] sm:$0xf]
        %v3962 = vld [vmem:[%s3650 + $0x64] sm:$0xf]
        %v3963 = vld [vmem:[%s3650 + $0x68] sm:$0x1]
        %v3964 = vld [vmem:[%s3650 + $0x6c] sm:$0xf]
        %v3965 = vld [vmem:[%s3650 + $0x70] sm:$0xf]
        %v3966 = vld [vmem:[%s3650 + $0x74] sm:$0x1]
        %v3967 = vld [vmem:[%s3650 + $0x78] sm:$0xf]
        %v3968 = vld [vmem:[%s3650 + $0x7c] sm:$0xf]
        %v3969 = vld [vmem:[%s3650 + $0x80] sm:$0x1]
        %v3970 = vld [vmem:[%s3650 + $0x84] sm:$0xf]
        %v3971 = vld [vmem:[%s3650 + $0x88] sm:$0xf]
        %v3972 = vld [vmem:[%s3650 + $0x8c] sm:$0x1]
        %v3973 = vld [vmem:[%s3650 + $0x90] sm:$0xf]
        %v3974 = vld [vmem:[%s3650 + $0x94] sm:$0xf]
        %v3975 = vld [vmem:[%s3650 + $0x98] sm:$0x1]
        %v3976 = vld [vmem:[%s3650 + $0x9c] sm:$0xf]
        %v3977 = vld [vmem:[%s3650 + $0xa0] sm:$0xf]
        %v3978 = vld [vmem:[%s3650 + $0xa4] sm:$0x1]
        %v3979 = vld [vmem:[%s3650 + $0xa8] sm:$0xf]
        %v3980 = vld [vmem:[%s3650 + $0xac] sm:$0xf]
        %v3981 = vld [vmem:[%s3650 + $0xb0] sm:$0x1]
        %v3982 = vld [vmem:[%s3650 + $0xb4] sm:$0xf]
        %v3983 = vld [vmem:[%s3650 + $0xb8] sm:$0xf]
        %v3984 = vld [vmem:[%s3650 + $0xbc] sm:$0x1]
        %v3986 = vshrl.u32 %v3937, 16
        %v3988 = vrot.slane %v3986, 4
        %v3989 = vshll.u32 %v3937, 16
        %v3991 = vrot.slane %v3989, 5
        %v3992 = vor.u32 %v3988, %v3991
        %v3993 = vrot.slane %v3992, 4
        %v3995 = vshll.u32 %v3938, 16
        %v3997 = vrot.slane %v3995, 5
        %v3998 = vsel %vm1130, %v3993, %v3997
        %v3999 = vshrl.u32 %v3938, 16
        %v4001 = vrot.slane %v3999, 4
        %v4002 = vor.u32 %v4001, %v3997
        %v4003 = vrot.slane %v4002, 4
        %v4005 = vshll.u32 %v3939, 16
        %v4007 = vrot.slane %v4005, 5
        %v4008 = vsel %vm1130, %v4003, %v4007
        %v4010 = vshrl.u32 %v3940, 16
        %v4012 = vrot.slane %v4010, 4
        %v4013 = vshll.u32 %v3940, 16
        %v4015 = vrot.slane %v4013, 5
        %v4016 = vor.u32 %v4012, %v4015
        %v4017 = vrot.slane %v4016, 4
        %v4019 = vshll.u32 %v3941, 16
        %v4021 = vrot.slane %v4019, 5
        %v4022 = vsel %vm1130, %v4017, %v4021
        %v4023 = vshrl.u32 %v3941, 16
        %v4025 = vrot.slane %v4023, 4
        %v4026 = vor.u32 %v4025, %v4021
        %v4027 = vrot.slane %v4026, 4
        %v4029 = vshll.u32 %v3942, 16
        %v4031 = vrot.slane %v4029, 5
        %v4032 = vsel %vm1130, %v4027, %v4031
        %v4034 = vshrl.u32 %v3943, 16
        %v4036 = vrot.slane %v4034, 4
        %v4037 = vshll.u32 %v3943, 16
        %v4039 = vrot.slane %v4037, 5
        %v4040 = vor.u32 %v4036, %v4039
        %v4041 = vrot.slane %v4040, 4
        %v4043 = vshll.u32 %v3944, 16
        %v4045 = vrot.slane %v4043, 5
        %v4046 = vsel %vm1130, %v4041, %v4045
        %v4047 = vshrl.u32 %v3944, 16
        %v4049 = vrot.slane %v4047, 4
        %v4050 = vor.u32 %v4049, %v4045
        %v4051 = vrot.slane %v4050, 4
        %v4053 = vshll.u32 %v3945, 16
        %v4055 = vrot.slane %v4053, 5
        %v4056 = vsel %vm1130, %v4051, %v4055
        %v4058 = vshrl.u32 %v3946, 16
        %v4060 = vrot.slane %v4058, 4
        %v4061 = vshll.u32 %v3946, 16
        %v4063 = vrot.slane %v4061, 5
        %v4064 = vor.u32 %v4060, %v4063
        %v4065 = vrot.slane %v4064, 4
        %v4067 = vshll.u32 %v3947, 16
        %v4069 = vrot.slane %v4067, 5
        %v4070 = vsel %vm1130, %v4065, %v4069
        %v4071 = vshrl.u32 %v3947, 16
        %v4073 = vrot.slane %v4071, 4
        %v4074 = vor.u32 %v4073, %v4069
        %v4075 = vrot.slane %v4074, 4
        %v4077 = vshll.u32 %v3948, 16
        %v4079 = vrot.slane %v4077, 5
        %v4080 = vsel %vm1130, %v4075, %v4079
        %v4082 = vshrl.u32 %v3949, 16
        %v4084 = vrot.slane %v4082, 4
        %v4085 = vshll.u32 %v3949, 16
        %v4087 = vrot.slane %v4085, 5
        %v4088 = vor.u32 %v4084, %v4087
        %v4089 = vrot.slane %v4088, 4
        %v4091 = vshll.u32 %v3950, 16
        %v4093 = vrot.slane %v4091, 5
        %v4094 = vsel %vm1130, %v4089, %v4093
        %v4095 = vshrl.u32 %v3950, 16
        %v4097 = vrot.slane %v4095, 4
        %v4098 = vor.u32 %v4097, %v4093
        %v4099 = vrot.slane %v4098, 4
        %v4101 = vshll.u32 %v3951, 16
        %v4103 = vrot.slane %v4101, 5
        %v4104 = vsel %vm1130, %v4099, %v4103
        %v4106 = vshrl.u32 %v3952, 16
        %v4108 = vrot.slane %v4106, 4
        %v4109 = vshll.u32 %v3952, 16
        %v4111 = vrot.slane %v4109, 5
        %v4112 = vor.u32 %v4108, %v4111
        %v4113 = vrot.slane %v4112, 4
        %v4115 = vshll.u32 %v3953, 16
        %v4117 = vrot.slane %v4115, 5
        %v4118 = vsel %vm1130, %v4113, %v4117
        %v4119 = vshrl.u32 %v3953, 16
        %v4121 = vrot.slane %v4119, 4
        %v4122 = vor.u32 %v4121, %v4117
        %v4123 = vrot.slane %v4122, 4
        %v4125 = vshll.u32 %v3954, 16
        %v4127 = vrot.slane %v4125, 5
        %v4128 = vsel %vm1130, %v4123, %v4127
        %v4130 = vshrl.u32 %v3955, 16
        %v4132 = vrot.slane %v4130, 4
        %v4133 = vshll.u32 %v3955, 16
        %v4135 = vrot.slane %v4133, 5
        %v4136 = vor.u32 %v4132, %v4135
        %v4137 = vrot.slane %v4136, 4
        %v4139 = vshll.u32 %v3956, 16
        %v4141 = vrot.slane %v4139, 5
        %v4142 = vsel %vm1130, %v4137, %v4141
        %v4143 = vshrl.u32 %v3956, 16
        %v4145 = vrot.slane %v4143, 4
        %v4146 = vor.u32 %v4145, %v4141
        %v4147 = vrot.slane %v4146, 4
        %v4149 = vshll.u32 %v3957, 16
        %v4151 = vrot.slane %v4149, 5
        %v4152 = vsel %vm1130, %v4147, %v4151
        %v4154 = vshrl.u32 %v3958, 16
        %v4156 = vrot.slane %v4154, 4
        %v4157 = vshll.u32 %v3958, 16
        %v4159 = vrot.slane %v4157, 5
        %v4160 = vor.u32 %v4156, %v4159
        %v4161 = vrot.slane %v4160, 4
        %v4163 = vshll.u32 %v3959, 16
        %v4165 = vrot.slane %v4163, 5
        %v4166 = vsel %vm1130, %v4161, %v4165
        %v4167 = vshrl.u32 %v3959, 16
        %v4169 = vrot.slane %v4167, 4
        %v4170 = vor.u32 %v4169, %v4165
        %v4171 = vrot.slane %v4170, 4
        %v4173 = vshll.u32 %v3960, 16
        %v4175 = vrot.slane %v4173, 5
        %v4176 = vsel %vm1130, %v4171, %v4175
        %v4178 = vshrl.u32 %v3961, 16
        %v4180 = vrot.slane %v4178, 4
        %v4181 = vshll.u32 %v3961, 16
        %v4183 = vrot.slane %v4181, 5
        %v4184 = vor.u32 %v4180, %v4183
        %v4185 = vrot.slane %v4184, 4
        %v4187 = vshll.u32 %v3962, 16
        %v4189 = vrot.slane %v4187, 5
        %v4190 = vsel %vm1130, %v4185, %v4189
        %v4191 = vshrl.u32 %v3962, 16
        %v4193 = vrot.slane %v4191, 4
        %v4194 = vor.u32 %v4193, %v4189
        %v4195 = vrot.slane %v4194, 4
        %v4197 = vshll.u32 %v3963, 16
        %v4199 = vrot.slane %v4197, 5
        %v4200 = vsel %vm1130, %v4195, %v4199
        %v4202 = vshrl.u32 %v3964, 16
        %v4204 = vrot.slane %v4202, 4
        %v4205 = vshll.u32 %v3964, 16
        %v4207 = vrot.slane %v4205, 5
        %v4208 = vor.u32 %v4204, %v4207
        %v4209 = vrot.slane %v4208, 4
        %v4211 = vshll.u32 %v3965, 16
        %v4213 = vrot.slane %v4211, 5
        %v4214 = vsel %vm1130, %v4209, %v4213
        %v4215 = vshrl.u32 %v3965, 16
        %v4217 = vrot.slane %v4215, 4
        %v4218 = vor.u32 %v4217, %v4213
        %v4219 = vrot.slane %v4218, 4
        %v4221 = vshll.u32 %v3966, 16
        %v4223 = vrot.slane %v4221, 5
        %v4224 = vsel %vm1130, %v4219, %v4223
        %v4226 = vshrl.u32 %v3967, 16
        %v4228 = vrot.slane %v4226, 4
        %v4229 = vshll.u32 %v3967, 16
        %v4231 = vrot.slane %v4229, 5
        %v4232 = vor.u32 %v4228, %v4231
        %v4233 = vrot.slane %v4232, 4
        %v4235 = vshll.u32 %v3968, 16
        %v4237 = vrot.slane %v4235, 5
        %v4238 = vsel %vm1130, %v4233, %v4237
        %v4239 = vshrl.u32 %v3968, 16
        %v4241 = vrot.slane %v4239, 4
        %v4242 = vor.u32 %v4241, %v4237
        %v4243 = vrot.slane %v4242, 4
        %v4245 = vshll.u32 %v3969, 16
        %v4247 = vrot.slane %v4245, 5
        %v4248 = vsel %vm1130, %v4243, %v4247
        %v4250 = vshrl.u32 %v3970, 16
        %v4252 = vrot.slane %v4250, 4
        %v4253 = vshll.u32 %v3970, 16
        %v4255 = vrot.slane %v4253, 5
        %v4256 = vor.u32 %v4252, %v4255
        %v4257 = vrot.slane %v4256, 4
        %v4259 = vshll.u32 %v3971, 16
        %v4261 = vrot.slane %v4259, 5
        %v4262 = vsel %vm1130, %v4257, %v4261
        %v4263 = vshrl.u32 %v3971, 16
        %v4265 = vrot.slane %v4263, 4
        %v4266 = vor.u32 %v4265, %v4261
        %v4267 = vrot.slane %v4266, 4
        %v4269 = vshll.u32 %v3972, 16
        %v4271 = vrot.slane %v4269, 5
        %v4272 = vsel %vm1130, %v4267, %v4271
        %v4274 = vshrl.u32 %v3973, 16
        %v4276 = vrot.slane %v4274, 4
        %v4277 = vshll.u32 %v3973, 16
        %v4279 = vrot.slane %v4277, 5
        %v4280 = vor.u32 %v4276, %v4279
        %v4281 = vrot.slane %v4280, 4
        %v4283 = vshll.u32 %v3974, 16
        %v4285 = vrot.slane %v4283, 5
        %v4286 = vsel %vm1130, %v4281, %v4285
        %v4287 = vshrl.u32 %v3974, 16
        %v4289 = vrot.slane %v4287, 4
        %v4290 = vor.u32 %v4289, %v4285
        %v4291 = vrot.slane %v4290, 4
        %v4293 = vshll.u32 %v3975, 16
        %v4295 = vrot.slane %v4293, 5
        %v4296 = vsel %vm1130, %v4291, %v4295
        %v4298 = vshrl.u32 %v3976, 16
        %v4300 = vrot.slane %v4298, 4
        %v4301 = vshll.u32 %v3976, 16
        %v4303 = vrot.slane %v4301, 5
        %v4304 = vor.u32 %v4300, %v4303
        %v4305 = vrot.slane %v4304, 4
        %v4307 = vshll.u32 %v3977, 16
        %v4309 = vrot.slane %v4307, 5
        %v4310 = vsel %vm1130, %v4305, %v4309
        %v4311 = vshrl.u32 %v3977, 16
        %v4313 = vrot.slane %v4311, 4
        %v4314 = vor.u32 %v4313, %v4309
        %v4315 = vrot.slane %v4314, 4
        %v4317 = vshll.u32 %v3978, 16
        %v4319 = vrot.slane %v4317, 5
        %v4320 = vsel %vm1130, %v4315, %v4319
        %v4322 = vshrl.u32 %v3979, 16
        %v4324 = vrot.slane %v4322, 4
        %v4325 = vshll.u32 %v3979, 16
        %v4327 = vrot.slane %v4325, 5
        %v4328 = vor.u32 %v4324, %v4327
        %v4329 = vrot.slane %v4328, 4
        %v4331 = vshll.u32 %v3980, 16
        %v4333 = vrot.slane %v4331, 5
        %v4334 = vsel %vm1130, %v4329, %v4333
        %v4335 = vshrl.u32 %v3980, 16
        %v4337 = vrot.slane %v4335, 4
        %v4338 = vor.u32 %v4337, %v4333
        %v4339 = vrot.slane %v4338, 4
        %v4341 = vshll.u32 %v3981, 16
        %v4343 = vrot.slane %v4341, 5
        %v4344 = vsel %vm1130, %v4339, %v4343
        %v4346 = vshrl.u32 %v3982, 16
        %v4348 = vrot.slane %v4346, 4
        %v4349 = vshll.u32 %v3982, 16
        %v4351 = vrot.slane %v4349, 5
        %v4352 = vor.u32 %v4348, %v4351
        %v4353 = vrot.slane %v4352, 4
        %v4355 = vshll.u32 %v3983, 16
        %v4357 = vrot.slane %v4355, 5
        %v4358 = vsel %vm1130, %v4353, %v4357
        %v4359 = vshrl.u32 %v3983, 16
        %v4361 = vrot.slane %v4359, 4
        %v4362 = vor.u32 %v4361, %v4357
        %v4363 = vrot.slane %v4362, 4
        %v4365 = vshll.u32 %v3984, 16
        %v4367 = vrot.slane %v4365, 5
        %v4368 = vsel %vm1130, %v4363, %v4367
        %s4369 = scalar_lea.vmem %s3, 28
        %v4370 = vld [vmem:[%s4369] sm:$0xf]
        %v4371 = vunpack.c.l.b16 %v3998
        %v4372 = vunpack.c.l.b16 %v4008
        %v4373 = vunpack.c.l.b16 %v4022
        %v4374 = vunpack.c.l.b16 %v4032
        %v4375 = vunpack.c.l.b16 %v4046
        %v4376 = vunpack.c.l.b16 %v4056
        %v4377 = vunpack.c.l.b16 %v4070
        %v4378 = vunpack.c.l.b16 %v4080
        %v4379 = vunpack.c.l.b16 %v4094
        %v4380 = vunpack.c.l.b16 %v4104
        %v4381 = vunpack.c.l.b16 %v4118
        %v4382 = vunpack.c.l.b16 %v4128
        %v4383 = vunpack.c.l.b16 %v4142
        %v4384 = vunpack.c.l.b16 %v4152
        %v4385 = vunpack.c.l.b16 %v4166
        %v4386 = vunpack.c.l.b16 %v4176
        %v4387 = vunpack.c.l.b16 %v4190
        %v4388 = vunpack.c.l.b16 %v4200
        %v4389 = vunpack.c.l.b16 %v4214
        %v4390 = vunpack.c.l.b16 %v4224
        %v4391 = vunpack.c.l.b16 %v4238
        %v4392 = vunpack.c.l.b16 %v4248
        %v4393 = vunpack.c.l.b16 %v4262
        %v4394 = vunpack.c.l.b16 %v4272
        %v4395 = vunpack.c.l.b16 %v4286
        %v4396 = vunpack.c.l.b16 %v4296
        %v4397 = vunpack.c.l.b16 %v4310
        %v4398 = vunpack.c.l.b16 %v4320
        %v4399 = vunpack.c.l.b16 %v4334
        %v4400 = vunpack.c.l.b16 %v4344
        %v4401 = vunpack.c.l.b16 %v4358
        %v4402 = vunpack.c.l.b16 %v4368
        %v4403 = vpack.c.b16 %v4372, %v4371
        %v4404 = vpack.c.b16 %v4374, %v4373
        %v4405 = vpack.c.b16 %v4376, %v4375
        %v4406 = vpack.c.b16 %v4378, %v4377
        %v4407 = vpack.c.b16 %v4380, %v4379
        %v4408 = vpack.c.b16 %v4382, %v4381
        %v4409 = vpack.c.b16 %v4384, %v4383
        %v4410 = vpack.c.b16 %v4386, %v4385
        %v4411 = vpack.c.b16 %v4388, %v4387
        %v4412 = vpack.c.b16 %v4390, %v4389
        %v4413 = vpack.c.b16 %v4392, %v4391
        %v4414 = vpack.c.b16 %v4394, %v4393
        %v4415 = vpack.c.b16 %v4396, %v4395
        %v4416 = vpack.c.b16 %v4398, %v4397
        %v4417 = vpack.c.b16 %v4400, %v4399
        %v4418 = vpack.c.b16 %v4402, %v4401
        %v4420 = vsel %vm1565, %v4403, 0
        %v4423 = vsel %vm1565, %v4404, 0
        %v4426 = vsel %vm1565, %v4405, 0
        %v4429 = vsel %vm1565, %v4406, 0
        %v4432 = vsel %vm1565, %v4407, 0
        %v4435 = vsel %vm1565, %v4408, 0
        %v4438 = vsel %vm1565, %v4409, 0
        %v4441 = vsel %vm1565, %v4410, 0
        %v4444 = vsel %vm1565, %v4411, 0
        %v4447 = vsel %vm1565, %v4412, 0
        %v4450 = vsel %vm1565, %v4413, 0
        %v4453 = vsel %vm1565, %v4414, 0
        %v4456 = vsel %vm1565, %v4415, 0
        %v4459 = vsel %vm1565, %v4416, 0
        %v4462 = vsel %vm1565, %v4417, 0
        %v4465 = vsel %vm1565, %v4418, 0
        %v4468 = vsel %vm1614, %v4370, 0
        %4470 = vmatpush.bf16.msra.mxu0 0
        %4471 = vmatpush.bf16.msra.mxu0 0
        %4472 = vmatpush.bf16.msra.mxu0 0
        %4473 = vmatpush.bf16.msra.mxu0 0
        %4474 = vmatpush.bf16.msra.mxu0 0
        %4475 = vmatpush.bf16.msra.mxu0 0
        %4476 = vmatpush.bf16.msra.mxu0 0
        %4477 = vmatpush.bf16.msra.mxu0 %v4468
        %4478 = vmatmul.bf16.gmra.mxu0 %v4420
        %v4479 = vpop.f32.mrf.mxu0
        %v4480 = vadd.f32 0.0, %v4479
        %v4481 = vpop.f32.mrf.mxu0
        %v4482 = vadd.f32 0.0, %v4481
        %4483 = vmatmul.bf16.gmra.mxu0 %v4423
        %v4484 = vpop.f32.mrf.mxu0
        %v4485 = vadd.f32 0.0, %v4484
        %v4486 = vpop.f32.mrf.mxu0
        %v4487 = vadd.f32 0.0, %v4486
        %4488 = vmatmul.bf16.gmra.mxu0 %v4426
        %v4489 = vpop.f32.mrf.mxu0
        %v4490 = vadd.f32 0.0, %v4489
        %v4491 = vpop.f32.mrf.mxu0
        %v4492 = vadd.f32 0.0, %v4491
        %4493 = vmatmul.bf16.gmra.mxu0 %v4429
        %v4494 = vpop.f32.mrf.mxu0
        %v4495 = vadd.f32 0.0, %v4494
        %v4496 = vpop.f32.mrf.mxu0
        %v4497 = vadd.f32 0.0, %v4496
        %4498 = vmatmul.bf16.gmra.mxu0 %v4432
        %v4499 = vpop.f32.mrf.mxu0
        %v4500 = vadd.f32 0.0, %v4499
        %v4501 = vpop.f32.mrf.mxu0
        %v4502 = vadd.f32 0.0, %v4501
        %4503 = vmatmul.bf16.gmra.mxu0 %v4435
        %v4504 = vpop.f32.mrf.mxu0
        %v4505 = vadd.f32 0.0, %v4504
        %v4506 = vpop.f32.mrf.mxu0
        %v4507 = vadd.f32 0.0, %v4506
        %4508 = vmatmul.bf16.gmra.mxu0 %v4438
        %v4509 = vpop.f32.mrf.mxu0
        %v4510 = vadd.f32 0.0, %v4509
        %v4511 = vpop.f32.mrf.mxu0
        %v4512 = vadd.f32 0.0, %v4511
        %4513 = vmatmul.bf16.gmra.mxu0 %v4441
        %v4514 = vpop.f32.mrf.mxu0
        %v4515 = vadd.f32 0.0, %v4514
        %v4516 = vpop.f32.mrf.mxu0
        %v4517 = vadd.f32 0.0, %v4516
        %4518 = vmatmul.bf16.gmra.mxu0 %v4444
        %v4519 = vpop.f32.mrf.mxu0
        %v4520 = vadd.f32 0.0, %v4519
        %v4521 = vpop.f32.mrf.mxu0
        %v4522 = vadd.f32 0.0, %v4521
        %4523 = vmatmul.bf16.gmra.mxu0 %v4447
        %v4524 = vpop.f32.mrf.mxu0
        %v4525 = vadd.f32 0.0, %v4524
        %v4526 = vpop.f32.mrf.mxu0
        %v4527 = vadd.f32 0.0, %v4526
        %4528 = vmatmul.bf16.gmra.mxu0 %v4450
        %v4529 = vpop.f32.mrf.mxu0
        %v4530 = vadd.f32 0.0, %v4529
        %v4531 = vpop.f32.mrf.mxu0
        %v4532 = vadd.f32 0.0, %v4531
        %4533 = vmatmul.bf16.gmra.mxu0 %v4453
        %v4534 = vpop.f32.mrf.mxu0
        %v4535 = vadd.f32 0.0, %v4534
        %v4536 = vpop.f32.mrf.mxu0
        %v4537 = vadd.f32 0.0, %v4536
        %4538 = vmatmul.bf16.gmra.mxu0 %v4456
        %v4539 = vpop.f32.mrf.mxu0
        %v4540 = vadd.f32 0.0, %v4539
        %v4541 = vpop.f32.mrf.mxu0
        %v4542 = vadd.f32 0.0, %v4541
        %4543 = vmatmul.bf16.gmra.mxu0 %v4459
        %v4544 = vpop.f32.mrf.mxu0
        %v4545 = vadd.f32 0.0, %v4544
        %v4546 = vpop.f32.mrf.mxu0
        %v4547 = vadd.f32 0.0, %v4546
        %4548 = vmatmul.bf16.gmra.mxu0 %v4462
        %v4549 = vpop.f32.mrf.mxu0
        %v4550 = vadd.f32 0.0, %v4549
        %v4551 = vpop.f32.mrf.mxu0
        %v4552 = vadd.f32 0.0, %v4551
        %4553 = vmatmul.bf16.gmra.mxu0 %v4465
        %v4554 = vpop.f32.mrf.mxu0
        %v4555 = vadd.f32 0.0, %v4554
        %v4556 = vpop.f32.mrf.mxu0
        %v4557 = vadd.f32 0.0, %v4556
        %4558 = vdwg.mxu0
        %v4559 = vadd.f32 %v3905, %v4480
        %v4560 = vadd.f32 %v3906, %v4482
        %v4561 = vadd.f32 %v3907, %v4485
        %v4562 = vadd.f32 %v3908, %v4487
        %v4563 = vadd.f32 %v3909, %v4490
        %v4564 = vadd.f32 %v3910, %v4492
        %v4565 = vadd.f32 %v3911, %v4495
        %v4566 = vadd.f32 %v3912, %v4497
        %v4567 = vadd.f32 %v3913, %v4500
        %v4568 = vadd.f32 %v3914, %v4502
        %v4569 = vadd.f32 %v3915, %v4505
        %v4570 = vadd.f32 %v3916, %v4507
        %v4571 = vadd.f32 %v3917, %v4510
        %v4572 = vadd.f32 %v3918, %v4512
        %v4573 = vadd.f32 %v3919, %v4515
        %v4574 = vadd.f32 %v3920, %v4517
        %v4575 = vadd.f32 %v3921, %v4520
        %v4576 = vadd.f32 %v3922, %v4522
        %v4577 = vadd.f32 %v3923, %v4525
        %v4578 = vadd.f32 %v3924, %v4527
        %v4579 = vadd.f32 %v3925, %v4530
        %v4580 = vadd.f32 %v3926, %v4532
        %v4581 = vadd.f32 %v3927, %v4535
        %v4582 = vadd.f32 %v3928, %v4537
        %v4583 = vadd.f32 %v3929, %v4540
        %v4584 = vadd.f32 %v3930, %v4542
        %v4585 = vadd.f32 %v3931, %v4545
        %v4586 = vadd.f32 %v3932, %v4547
        %v4587 = vadd.f32 %v3933, %v4550
        %v4588 = vadd.f32 %v3934, %v4552
        %v4589 = vadd.f32 %v3935, %v4555
        %v4590 = vadd.f32 %v3936, %v4557
        %v4591 = vld [vmem:[%s3650] sm:$0xe]
        %v4592 = vld [vmem:[%s3650 + $0xc] sm:$0xe]
        %v4593 = vld [vmem:[%s3650 + $0x18] sm:$0xe]
        %v4594 = vld [vmem:[%s3650 + $0x24] sm:$0xe]
        %v4595 = vld [vmem:[%s3650 + $0x30] sm:$0xe]
        %v4596 = vld [vmem:[%s3650 + $0x3c] sm:$0xe]
        %v4597 = vld [vmem:[%s3650 + $0x48] sm:$0xe]
        %v4598 = vld [vmem:[%s3650 + $0x54] sm:$0xe]
        %v4599 = vld [vmem:[%s3650 + $0x60] sm:$0xe]
        %v4600 = vld [vmem:[%s3650 + $0x6c] sm:$0xe]
        %v4601 = vld [vmem:[%s3650 + $0x78] sm:$0xe]
        %v4602 = vld [vmem:[%s3650 + $0x84] sm:$0xe]
        %v4603 = vld [vmem:[%s3650 + $0x90] sm:$0xe]
        %v4604 = vld [vmem:[%s3650 + $0x9c] sm:$0xe]
        %v4605 = vld [vmem:[%s3650 + $0xa8] sm:$0xe]
        %v4606 = vld [vmem:[%s3650 + $0xb4] sm:$0xe]
        %v4655 = vrot.slane %v4591, 5
        %v4656 = vrot.slane %v4655, 4
        %v4657 = vrot.slane %v3938, 5
        %v4658 = vsel %vm1977, %v4656, %v4657
        %v4659 = vrot.slane %v4657, 4
        %v4660 = vrot.slane %v3939, 5
        %v4661 = vsel %vm1977, %v4659, %v4660
        %v4662 = vrot.slane %v4592, 5
        %v4663 = vrot.slane %v4662, 4
        %v4664 = vrot.slane %v3941, 5
        %v4665 = vsel %vm1977, %v4663, %v4664
        %v4666 = vrot.slane %v4664, 4
        %v4667 = vrot.slane %v3942, 5
        %v4668 = vsel %vm1977, %v4666, %v4667
        %v4669 = vrot.slane %v4593, 5
        %v4670 = vrot.slane %v4669, 4
        %v4671 = vrot.slane %v3944, 5
        %v4672 = vsel %vm1977, %v4670, %v4671
        %v4673 = vrot.slane %v4671, 4
        %v4674 = vrot.slane %v3945, 5
        %v4675 = vsel %vm1977, %v4673, %v4674
        %v4676 = vrot.slane %v4594, 5
        %v4677 = vrot.slane %v4676, 4
        %v4678 = vrot.slane %v3947, 5
        %v4679 = vsel %vm1977, %v4677, %v4678
        %v4680 = vrot.slane %v4678, 4
        %v4681 = vrot.slane %v3948, 5
        %v4682 = vsel %vm1977, %v4680, %v4681
        %v4683 = vrot.slane %v4595, 5
        %v4684 = vrot.slane %v4683, 4
        %v4685 = vrot.slane %v3950, 5
        %v4686 = vsel %vm1977, %v4684, %v4685
        %v4687 = vrot.slane %v4685, 4
        %v4688 = vrot.slane %v3951, 5
        %v4689 = vsel %vm1977, %v4687, %v4688
        %v4690 = vrot.slane %v4596, 5
        %v4691 = vrot.slane %v4690, 4
        %v4692 = vrot.slane %v3953, 5
        %v4693 = vsel %vm1977, %v4691, %v4692
        %v4694 = vrot.slane %v4692, 4
        %v4695 = vrot.slane %v3954, 5
        %v4696 = vsel %vm1977, %v4694, %v4695
        %v4697 = vrot.slane %v4597, 5
        %v4698 = vrot.slane %v4697, 4
        %v4699 = vrot.slane %v3956, 5
        %v4700 = vsel %vm1977, %v4698, %v4699
        %v4701 = vrot.slane %v4699, 4
        %v4702 = vrot.slane %v3957, 5
        %v4703 = vsel %vm1977, %v4701, %v4702
        %v4704 = vrot.slane %v4598, 5
        %v4705 = vrot.slane %v4704, 4
        %v4706 = vrot.slane %v3959, 5
        %v4707 = vsel %vm1977, %v4705, %v4706
        %v4708 = vrot.slane %v4706, 4
        %v4709 = vrot.slane %v3960, 5
        %v4710 = vsel %vm1977, %v4708, %v4709
        %v4711 = vrot.slane %v4599, 5
        %v4712 = vrot.slane %v4711, 4
        %v4713 = vrot.slane %v3962, 5
        %v4714 = vsel %vm1977, %v4712, %v4713
        %v4715 = vrot.slane %v4713, 4
        %v4716 = vrot.slane %v3963, 5
        %v4717 = vsel %vm1977, %v4715, %v4716
        %v4718 = vrot.slane %v4600, 5
        %v4719 = vrot.slane %v4718, 4
        %v4720 = vrot.slane %v3965, 5
        %v4721 = vsel %vm1977, %v4719, %v4720
        %v4722 = vrot.slane %v4720, 4
        %v4723 = vrot.slane %v3966, 5
        %v4724 = vsel %vm1977, %v4722, %v4723
        %v4725 = vrot.slane %v4601, 5
        %v4726 = vrot.slane %v4725, 4
        %v4727 = vrot.slane %v3968, 5
        %v4728 = vsel %vm1977, %v4726, %v4727
        %v4729 = vrot.slane %v4727, 4
        %v4730 = vrot.slane %v3969, 5
        %v4731 = vsel %vm1977, %v4729, %v4730
        %v4732 = vrot.slane %v4602, 5
        %v4733 = vrot.slane %v4732, 4
        %v4734 = vrot.slane %v3971, 5
        %v4735 = vsel %vm1977, %v4733, %v4734
        %v4736 = vrot.slane %v4734, 4
        %v4737 = vrot.slane %v3972, 5
        %v4738 = vsel %vm1977, %v4736, %v4737
        %v4739 = vrot.slane %v4603, 5
        %v4740 = vrot.slane %v4739, 4
        %v4741 = vrot.slane %v3974, 5
        %v4742 = vsel %vm1977, %v4740, %v4741
        %v4743 = vrot.slane %v4741, 4
        %v4744 = vrot.slane %v3975, 5
        %v4745 = vsel %vm1977, %v4743, %v4744
        %v4746 = vrot.slane %v4604, 5
        %v4747 = vrot.slane %v4746, 4
        %v4748 = vrot.slane %v3977, 5
        %v4749 = vsel %vm1977, %v4747, %v4748
        %v4750 = vrot.slane %v4748, 4
        %v4751 = vrot.slane %v3978, 5
        %v4752 = vsel %vm1977, %v4750, %v4751
        %v4753 = vrot.slane %v4605, 5
        %v4754 = vrot.slane %v4753, 4
        %v4755 = vrot.slane %v3980, 5
        %v4756 = vsel %vm1977, %v4754, %v4755
        %v4757 = vrot.slane %v4755, 4
        %v4758 = vrot.slane %v3981, 5
        %v4759 = vsel %vm1977, %v4757, %v4758
        %v4760 = vrot.slane %v4606, 5
        %v4761 = vrot.slane %v4760, 4
        %v4762 = vrot.slane %v3983, 5
        %v4763 = vsel %vm1977, %v4761, %v4762
        %v4764 = vrot.slane %v4762, 4
        %v4765 = vrot.slane %v3984, 5
        %v4766 = vsel %vm1977, %v4764, %v4765
        %s4767 = scalar_lea.vmem %s3, 32
        %v4768 = vld [vmem:[%s4767] sm:$0xf]
        %v4769 = vunpack.c.l.b16 %v4658
        %v4770 = vunpack.c.l.b16 %v4661
        %v4771 = vunpack.c.l.b16 %v4665
        %v4772 = vunpack.c.l.b16 %v4668
        %v4773 = vunpack.c.l.b16 %v4672
        %v4774 = vunpack.c.l.b16 %v4675
        %v4775 = vunpack.c.l.b16 %v4679
        %v4776 = vunpack.c.l.b16 %v4682
        %v4777 = vunpack.c.l.b16 %v4686
        %v4778 = vunpack.c.l.b16 %v4689
        %v4779 = vunpack.c.l.b16 %v4693
        %v4780 = vunpack.c.l.b16 %v4696
        %v4781 = vunpack.c.l.b16 %v4700
        %v4782 = vunpack.c.l.b16 %v4703
        %v4783 = vunpack.c.l.b16 %v4707
        %v4784 = vunpack.c.l.b16 %v4710
        %v4785 = vunpack.c.l.b16 %v4714
        %v4786 = vunpack.c.l.b16 %v4717
        %v4787 = vunpack.c.l.b16 %v4721
        %v4788 = vunpack.c.l.b16 %v4724
        %v4789 = vunpack.c.l.b16 %v4728
        %v4790 = vunpack.c.l.b16 %v4731
        %v4791 = vunpack.c.l.b16 %v4735
        %v4792 = vunpack.c.l.b16 %v4738
        %v4793 = vunpack.c.l.b16 %v4742
        %v4794 = vunpack.c.l.b16 %v4745
        %v4795 = vunpack.c.l.b16 %v4749
        %v4796 = vunpack.c.l.b16 %v4752
        %v4797 = vunpack.c.l.b16 %v4756
        %v4798 = vunpack.c.l.b16 %v4759
        %v4799 = vunpack.c.l.b16 %v4763
        %v4800 = vunpack.c.l.b16 %v4766
        %v4801 = vpack.c.b16 %v4770, %v4769
        %v4802 = vpack.c.b16 %v4772, %v4771
        %v4803 = vpack.c.b16 %v4774, %v4773
        %v4804 = vpack.c.b16 %v4776, %v4775
        %v4805 = vpack.c.b16 %v4778, %v4777
        %v4806 = vpack.c.b16 %v4780, %v4779
        %v4807 = vpack.c.b16 %v4782, %v4781
        %v4808 = vpack.c.b16 %v4784, %v4783
        %v4809 = vpack.c.b16 %v4786, %v4785
        %v4810 = vpack.c.b16 %v4788, %v4787
        %v4811 = vpack.c.b16 %v4790, %v4789
        %v4812 = vpack.c.b16 %v4792, %v4791
        %v4813 = vpack.c.b16 %v4794, %v4793
        %v4814 = vpack.c.b16 %v4796, %v4795
        %v4815 = vpack.c.b16 %v4798, %v4797
        %v4816 = vpack.c.b16 %v4800, %v4799
        %v4818 = vsel %vm1565, %v4801, 0
        %v4821 = vsel %vm1565, %v4802, 0
        %v4824 = vsel %vm1565, %v4803, 0
        %v4827 = vsel %vm1565, %v4804, 0
        %v4830 = vsel %vm1565, %v4805, 0
        %v4833 = vsel %vm1565, %v4806, 0
        %v4836 = vsel %vm1565, %v4807, 0
        %v4839 = vsel %vm1565, %v4808, 0
        %v4842 = vsel %vm1565, %v4809, 0
        %v4845 = vsel %vm1565, %v4810, 0
        %v4848 = vsel %vm1565, %v4811, 0
        %v4851 = vsel %vm1565, %v4812, 0
        %v4854 = vsel %vm1565, %v4813, 0
        %v4857 = vsel %vm1565, %v4814, 0
        %v4860 = vsel %vm1565, %v4815, 0
        %v4863 = vsel %vm1565, %v4816, 0
        %v4866 = vsel %vm1614, %v4768, 0
        %4868 = vmatpush.bf16.msra.mxu0 0
        %4869 = vmatpush.bf16.msra.mxu0 0
        %4870 = vmatpush.bf16.msra.mxu0 0
        %4871 = vmatpush.bf16.msra.mxu0 0
        %4872 = vmatpush.bf16.msra.mxu0 0
        %4873 = vmatpush.bf16.msra.mxu0 0
        %4874 = vmatpush.bf16.msra.mxu0 0
        %4875 = vmatpush.bf16.msra.mxu0 %v4866
        %4876 = vmatmul.bf16.gmra.mxu0 %v4818
        %v4877 = vpop.f32.mrf.mxu0
        %v4878 = vadd.f32 0.0, %v4877
        %v4879 = vpop.f32.mrf.mxu0
        %v4880 = vadd.f32 0.0, %v4879
        %4881 = vmatmul.bf16.gmra.mxu0 %v4821
        %v4882 = vpop.f32.mrf.mxu0
        %v4883 = vadd.f32 0.0, %v4882
        %v4884 = vpop.f32.mrf.mxu0
        %v4885 = vadd.f32 0.0, %v4884
        %4886 = vmatmul.bf16.gmra.mxu0 %v4824
        %v4887 = vpop.f32.mrf.mxu0
        %v4888 = vadd.f32 0.0, %v4887
        %v4889 = vpop.f32.mrf.mxu0
        %v4890 = vadd.f32 0.0, %v4889
        %4891 = vmatmul.bf16.gmra.mxu0 %v4827
        %v4892 = vpop.f32.mrf.mxu0
        %v4893 = vadd.f32 0.0, %v4892
        %v4894 = vpop.f32.mrf.mxu0
        %v4895 = vadd.f32 0.0, %v4894
        %4896 = vmatmul.bf16.gmra.mxu0 %v4830
        %v4897 = vpop.f32.mrf.mxu0
        %v4898 = vadd.f32 0.0, %v4897
        %v4899 = vpop.f32.mrf.mxu0
        %v4900 = vadd.f32 0.0, %v4899
        %4901 = vmatmul.bf16.gmra.mxu0 %v4833
        %v4902 = vpop.f32.mrf.mxu0
        %v4903 = vadd.f32 0.0, %v4902
        %v4904 = vpop.f32.mrf.mxu0
        %v4905 = vadd.f32 0.0, %v4904
        %4906 = vmatmul.bf16.gmra.mxu0 %v4836
        %v4907 = vpop.f32.mrf.mxu0
        %v4908 = vadd.f32 0.0, %v4907
        %v4909 = vpop.f32.mrf.mxu0
        %v4910 = vadd.f32 0.0, %v4909
        %4911 = vmatmul.bf16.gmra.mxu0 %v4839
        %v4912 = vpop.f32.mrf.mxu0
        %v4913 = vadd.f32 0.0, %v4912
        %v4914 = vpop.f32.mrf.mxu0
        %v4915 = vadd.f32 0.0, %v4914
        %4916 = vmatmul.bf16.gmra.mxu0 %v4842
        %v4917 = vpop.f32.mrf.mxu0
        %v4918 = vadd.f32 0.0, %v4917
        %v4919 = vpop.f32.mrf.mxu0
        %v4920 = vadd.f32 0.0, %v4919
        %4921 = vmatmul.bf16.gmra.mxu0 %v4845
        %v4922 = vpop.f32.mrf.mxu0
        %v4923 = vadd.f32 0.0, %v4922
        %v4924 = vpop.f32.mrf.mxu0
        %v4925 = vadd.f32 0.0, %v4924
        %4926 = vmatmul.bf16.gmra.mxu0 %v4848
        %v4927 = vpop.f32.mrf.mxu0
        %v4928 = vadd.f32 0.0, %v4927
        %v4929 = vpop.f32.mrf.mxu0
        %v4930 = vadd.f32 0.0, %v4929
        %4931 = vmatmul.bf16.gmra.mxu0 %v4851
        %v4932 = vpop.f32.mrf.mxu0
        %v4933 = vadd.f32 0.0, %v4932
        %v4934 = vpop.f32.mrf.mxu0
        %v4935 = vadd.f32 0.0, %v4934
        %4936 = vmatmul.bf16.gmra.mxu0 %v4854
        %v4937 = vpop.f32.mrf.mxu0
        %v4938 = vadd.f32 0.0, %v4937
        %v4939 = vpop.f32.mrf.mxu0
        %v4940 = vadd.f32 0.0, %v4939
        %4941 = vmatmul.bf16.gmra.mxu0 %v4857
        %v4942 = vpop.f32.mrf.mxu0
        %v4943 = vadd.f32 0.0, %v4942
        %v4944 = vpop.f32.mrf.mxu0
        %v4945 = vadd.f32 0.0, %v4944
        %4946 = vmatmul.bf16.gmra.mxu0 %v4860
        %v4947 = vpop.f32.mrf.mxu0
        %v4948 = vadd.f32 0.0, %v4947
        %v4949 = vpop.f32.mrf.mxu0
        %v4950 = vadd.f32 0.0, %v4949
        %4951 = vmatmul.bf16.gmra.mxu0 %v4863
        %v4952 = vpop.f32.mrf.mxu0
        %v4953 = vadd.f32 0.0, %v4952
        %v4954 = vpop.f32.mrf.mxu0
        %v4955 = vadd.f32 0.0, %v4954
        %4956 = vdwg.mxu0
        %v4957 = vadd.f32 %v4559, %v4878
        %v4958 = vadd.f32 %v4560, %v4880
        %v4959 = vadd.f32 %v4561, %v4883
        %v4960 = vadd.f32 %v4562, %v4885
        %v4961 = vadd.f32 %v4563, %v4888
        %v4962 = vadd.f32 %v4564, %v4890
        %v4963 = vadd.f32 %v4565, %v4893
        %v4964 = vadd.f32 %v4566, %v4895
        %v4965 = vadd.f32 %v4567, %v4898
        %v4966 = vadd.f32 %v4568, %v4900
        %v4967 = vadd.f32 %v4569, %v4903
        %v4968 = vadd.f32 %v4570, %v4905
        %v4969 = vadd.f32 %v4571, %v4908
        %v4970 = vadd.f32 %v4572, %v4910
        %v4971 = vadd.f32 %v4573, %v4913
        %v4972 = vadd.f32 %v4574, %v4915
        %v4973 = vadd.f32 %v4575, %v4918
        %v4974 = vadd.f32 %v4576, %v4920
        %v4975 = vadd.f32 %v4577, %v4923
        %v4976 = vadd.f32 %v4578, %v4925
        %v4977 = vadd.f32 %v4579, %v4928
        %v4978 = vadd.f32 %v4580, %v4930
        %v4979 = vadd.f32 %v4581, %v4933
        %v4980 = vadd.f32 %v4582, %v4935
        %v4981 = vadd.f32 %v4583, %v4938
        %v4982 = vadd.f32 %v4584, %v4940
        %v4983 = vadd.f32 %v4585, %v4943
        %v4984 = vadd.f32 %v4586, %v4945
        %v4985 = vadd.f32 %v4587, %v4948
        %v4986 = vadd.f32 %v4588, %v4950
        %v4987 = vadd.f32 %v4589, %v4953
        %v4988 = vadd.f32 %v4590, %v4955
        %v4989 = vld [vmem:[%s4] sm:$0x1]
        %v4991 = vperm.slane %v4989, 0
        %v4993 = vadd.f32 %v4957, %v4991
        %v4994 = vadd.f32 %v4958, %v4991
        %v4995 = vadd.f32 %v4959, %v4991
        %v4996 = vadd.f32 %v4960, %v4991
        %v4997 = vadd.f32 %v4961, %v4991
        %v4998 = vadd.f32 %v4962, %v4991
        %v4999 = vadd.f32 %v4963, %v4991
        %v5000 = vadd.f32 %v4964, %v4991
        %v5001 = vadd.f32 %v4965, %v4991
        %v5002 = vadd.f32 %v4966, %v4991
        %v5003 = vadd.f32 %v4967, %v4991
        %v5004 = vadd.f32 %v4968, %v4991
        %v5005 = vadd.f32 %v4969, %v4991
        %v5006 = vadd.f32 %v4970, %v4991
        %v5007 = vadd.f32 %v4971, %v4991
        %v5008 = vadd.f32 %v4972, %v4991
        %v5009 = vadd.f32 %v4973, %v4991
        %v5010 = vadd.f32 %v4974, %v4991
        %v5011 = vadd.f32 %v4975, %v4991
        %v5012 = vadd.f32 %v4976, %v4991
        %v5013 = vadd.f32 %v4977, %v4991
        %v5014 = vadd.f32 %v4978, %v4991
        %v5015 = vadd.f32 %v4979, %v4991
        %v5016 = vadd.f32 %v4980, %v4991
        %v5017 = vadd.f32 %v4981, %v4991
        %v5018 = vadd.f32 %v4982, %v4991
        %v5019 = vadd.f32 %v4983, %v4991
        %v5020 = vadd.f32 %v4984, %v4991
        %v5021 = vadd.f32 %v4985, %v4991
        %v5022 = vadd.f32 %v4986, %v4991
        %v5023 = vadd.f32 %v4987, %v4991
        %v5024 = vadd.f32 %v4988, %v4991
        %v5025 = vmax.f32 %v4993, 0.0
        %v5026 = vmax.f32 %v4994, 0.0
        %v5027 = vmax.f32 %v4995, 0.0
        %v5028 = vmax.f32 %v4996, 0.0
        %v5029 = vmax.f32 %v4997, 0.0
        %v5030 = vmax.f32 %v4998, 0.0
        %v5031 = vmax.f32 %v4999, 0.0
        %v5032 = vmax.f32 %v5000, 0.0
        %v5033 = vmax.f32 %v5001, 0.0
        %v5034 = vmax.f32 %v5002, 0.0
        %v5035 = vmax.f32 %v5003, 0.0
        %v5036 = vmax.f32 %v5004, 0.0
        %v5037 = vmax.f32 %v5005, 0.0
        %v5038 = vmax.f32 %v5006, 0.0
        %v5039 = vmax.f32 %v5007, 0.0
        %v5040 = vmax.f32 %v5008, 0.0
        %v5041 = vmax.f32 %v5009, 0.0
        %v5042 = vmax.f32 %v5010, 0.0
        %v5043 = vmax.f32 %v5011, 0.0
        %v5044 = vmax.f32 %v5012, 0.0
        %v5045 = vmax.f32 %v5013, 0.0
        %v5046 = vmax.f32 %v5014, 0.0
        %v5047 = vmax.f32 %v5015, 0.0
        %v5048 = vmax.f32 %v5016, 0.0
        %v5049 = vmax.f32 %v5017, 0.0
        %v5050 = vmax.f32 %v5018, 0.0
        %v5051 = vmax.f32 %v5019, 0.0
        %v5052 = vmax.f32 %v5020, 0.0
        %v5053 = vmax.f32 %v5021, 0.0
        %v5054 = vmax.f32 %v5022, 0.0
        %v5055 = vmax.f32 %v5023, 0.0
        %v5056 = vmax.f32 %v5024, 0.0
        %v5057 = vpack.c.bf16 %v5025, %v5025
        %v5058 = vpack.c.bf16 %v5026, %v5026
        %v5059 = vpack.c.bf16 %v5027, %v5027
        %v5060 = vpack.c.bf16 %v5028, %v5028
        %v5061 = vpack.c.bf16 %v5029, %v5029
        %v5062 = vpack.c.bf16 %v5030, %v5030
        %v5063 = vpack.c.bf16 %v5031, %v5031
        %v5064 = vpack.c.bf16 %v5032, %v5032
        %v5065 = vpack.c.bf16 %v5033, %v5033
        %v5066 = vpack.c.bf16 %v5034, %v5034
        %v5067 = vpack.c.bf16 %v5035, %v5035
        %v5068 = vpack.c.bf16 %v5036, %v5036
        %v5069 = vpack.c.bf16 %v5037, %v5037
        %v5070 = vpack.c.bf16 %v5038, %v5038
        %v5071 = vpack.c.bf16 %v5039, %v5039
        %v5072 = vpack.c.bf16 %v5040, %v5040
        %v5073 = vpack.c.bf16 %v5041, %v5041
        %v5074 = vpack.c.bf16 %v5042, %v5042
        %v5075 = vpack.c.bf16 %v5043, %v5043
        %v5076 = vpack.c.bf16 %v5044, %v5044
        %v5077 = vpack.c.bf16 %v5045, %v5045
        %v5078 = vpack.c.bf16 %v5046, %v5046
        %v5079 = vpack.c.bf16 %v5047, %v5047
        %v5080 = vpack.c.bf16 %v5048, %v5048
        %v5081 = vpack.c.bf16 %v5049, %v5049
        %v5082 = vpack.c.bf16 %v5050, %v5050
        %v5083 = vpack.c.bf16 %v5051, %v5051
        %v5084 = vpack.c.bf16 %v5052, %v5052
        %v5085 = vpack.c.bf16 %v5053, %v5053
        %v5086 = vpack.c.bf16 %v5054, %v5054
        %v5087 = vpack.c.bf16 %v5055, %v5055
        %v5088 = vpack.c.bf16 %v5056, %v5056
        %5089 = vst.msk [vmem:[%s246] sm:$0xf] %vm550, %v5057
        %5090 = vst.msk [vmem:[%s246 + $0x4] sm:$0xf] %vm550, %v5058
        %5091 = vst.msk [vmem:[%s246 + $0x8] sm:$0xf] %vm550, %v5059
        %5092 = vst.msk [vmem:[%s246 + $0xc] sm:$0xf] %vm550, %v5060
        %5093 = vst.msk [vmem:[%s246 + $0x10] sm:$0xf] %vm550, %v5061
        %5094 = vst.msk [vmem:[%s246 + $0x14] sm:$0xf] %vm550, %v5062
        %5095 = vst.msk [vmem:[%s246 + $0x18] sm:$0xf] %vm550, %v5063
        %5096 = vst.msk [vmem:[%s246 + $0x1c] sm:$0xf] %vm550, %v5064
        %5097 = vst.msk [vmem:[%s246 + $0x20] sm:$0xf] %vm550, %v5065
        %5098 = vst.msk [vmem:[%s246 + $0x24] sm:$0xf] %vm550, %v5066
        %5099 = vst.msk [vmem:[%s246 + $0x28] sm:$0xf] %vm550, %v5067
        %5100 = vst.msk [vmem:[%s246 + $0x2c] sm:$0xf] %vm550, %v5068
        %5101 = vst.msk [vmem:[%s246 + $0x30] sm:$0xf] %vm550, %v5069
        %5102 = vst.msk [vmem:[%s246 + $0x34] sm:$0xf] %vm550, %v5070
        %5103 = vst.msk [vmem:[%s246 + $0x38] sm:$0xf] %vm550, %v5071
        %5104 = vst.msk [vmem:[%s246 + $0x3c] sm:$0xf] %vm550, %v5072
        %5105 = vst.msk [vmem:[%s246 + $0x40] sm:$0xf] %vm550, %v5073
        %5106 = vst.msk [vmem:[%s246 + $0x44] sm:$0xf] %vm550, %v5074
        %5107 = vst.msk [vmem:[%s246 + $0x48] sm:$0xf] %vm550, %v5075
        %5108 = vst.msk [vmem:[%s246 + $0x4c] sm:$0xf] %vm550, %v5076
        %5109 = vst.msk [vmem:[%s246 + $0x50] sm:$0xf] %vm550, %v5077
        %5110 = vst.msk [vmem:[%s246 + $0x54] sm:$0xf] %vm550, %v5078
        %5111 = vst.msk [vmem:[%s246 + $0x58] sm:$0xf] %vm550, %v5079
        %5112 = vst.msk [vmem:[%s246 + $0x5c] sm:$0xf] %vm550, %v5080
        %5113 = vst.msk [vmem:[%s246 + $0x60] sm:$0xf] %vm550, %v5081
        %5114 = vst.msk [vmem:[%s246 + $0x64] sm:$0xf] %vm550, %v5082
        %5115 = vst.msk [vmem:[%s246 + $0x68] sm:$0xf] %vm550, %v5083
        %5116 = vst.msk [vmem:[%s246 + $0x6c] sm:$0xf] %vm550, %v5084
        %5117 = vst.msk [vmem:[%s246 + $0x70] sm:$0xf] %vm550, %v5085
        %5118 = vst.msk [vmem:[%s246 + $0x74] sm:$0xf] %vm550, %v5086
        %5119 = vst.msk [vmem:[%s246 + $0x78] sm:$0xf] %vm550, %v5087
        %5120 = vst.msk [vmem:[%s246 + $0x7c] sm:$0xf] %vm550, %v5088
        %p5121 = scmp.lt.s32.totalorder %s19, 1
        %s5122 = scalar_select %p5121, %s19, 1
        %s5123 = smul.addr %s5122, 32
        %s5124 = smul.addr %s5123, 4
        %s5125 = scalar_lea.vmem %s5, %s5124
        // Predicated region
        $region45: #{tpu_custom_call.1} parent=39 // pred_check
          %p5126 = pneg %p147
        $region46: #{tpu_custom_call.1} parent=39 // pred_check_branch
          %5128 = sbr.rel (%p5126) target = $region48
        $region47: #{tpu_custom_call.1} parent=39 // pred_region
          _
        $region48: #{tpu_custom_call.1} parent=39 // pred_fallthru
          _
      $region40: #{tpu_custom_call.1} parent=5 // pred_fallthru
        _
      %p5129 = scmp.le.s32.totalorder 2, %s14
      // Predicated region
      $region49: #{tpu_custom_call.1} parent=5 // pred_check
        %p5130 = pneg %p5129
      $region50: #{tpu_custom_call.1} parent=5 // pred_check_branch
        %5132 = sbr.rel (%p5130) target = $region52
      $region51: #{tpu_custom_call.1} parent=5 // pred_region
        %s5133 = ssub.s32 %s14, 2
        // Predicated region
        $region53: #{tpu_custom_call.1} parent=51 // pred_check
          %p5134 = pneg %p153
        $region54: #{tpu_custom_call.1} parent=51 // pred_check_branch
          %5136 = sbr.rel (%p5134) target = $region56
        $region55: #{tpu_custom_call.1} parent=51 // pred_region
          %p5137 = scmp.lt.s32.totalorder %s20, 1
          %s5138 = scalar_select %p5137, %s20, 1
          %s5139 = smul.addr %s5138, 32
          %s5140 = smul.addr %s5139, 4
          %s5141 = scalar_lea.vmem %s5, %s5140
        $region56: #{tpu_custom_call.1} parent=51 // pred_fallthru
          _
      $region52: #{tpu_custom_call.1} parent=5 // pred_fallthru
        _
    $region6: #{tpu_custom_call.1} parent=1 // loop_footer
      %s18 = sadd.s32 1, %s14
    $region7: #{tpu_custom_call.1} parent=1 // loop_footer_branch
      %13 = sbr.rel target = $region3
    $region8: #{tpu_custom_call.1} parent=1 // loop_exit
      _
    %5142 = vsyncpa [#allocation4], 1
    %s5143 = scalar_lea.sflag [#allocation4], 1
    %5144 = vsyncpa %s5143, 1

</llo_original>
